<compile_context>
chip_gen: v7x
topology: tpu7x:2x2x1
jax: 0.10.0
libtpu: 0.0.40
codegen_flags: <defaults>
</compile_context>

<pallas_src>
import functools

import jax
import jax.numpy as jnp
import numpy as np
from jax.experimental import pallas as pl
from jax.experimental.pallas import tpu as pltpu

# ---- model hyper-parameters (mirrors the torch __init__) --------------------
DOMAIN_NUM = 9
NUM_EXPERT = 5
FEATURE_KERNEL = {1: 64, 2: 64, 3: 64, 5: 64, 10: 64}
KERNEL_SIZES = tuple(FEATURE_KERNEL.keys())       # (1, 2, 3, 5, 10)
EXPERT_OUT = sum(FEATURE_KERNEL.values())         # 320
KMAX = max(KERNEL_SIZES)                          # 10
BN_EPS = 1e-5
OUT_LANES = 128                                   # lane-dense classifier head / output


def _round_up(n, m):
    return ((n + m - 1) // m) * m


# Fused-weight column layout (lane axis of the single wide matmul):
#   col ATT_COL (=0)            : MaskAttention score column (att_w)
#   cols CONV0 .. CONV0+1600-1  : conv columns, ordered (expert, kernel_size, channel)
#   remaining cols              : zero padding up to a multiple of 256 lanes
ATT_COL = 0
CONV0 = 128
N_CONV = NUM_EXPERT * EXPERT_OUT                  # 1600
N_PAD = _round_up(CONV0 + N_CONV, 256)            # 1792


# ------------------------------- Pallas kernel -------------------------------
def _mdfend_kernel(n_mlp, *refs):
    (x_ref, mask_ref, onehot_ref,
     wbig_ref, maskadd_ref, sel_ref, w0exp_ref,
     emb_ref, g1d_ref, g1f_ref, gb1_ref, gw2_ref, gb2_ref) = refs[:13]
    n_w = 5 + 6 * (n_mlp - 1)
    mlp_refs = refs[13:13 + n_w]
    out_w_ref, out_b_ref, out_ref = refs[13 + n_w:]

    x = x_ref[...]                                  # (TB, S, E) compute dtype
    TB, S, E = x.shape
    cdt = x.dtype
    n_pad = wbig_ref.shape[1]
    neg = jnp.float32(-1e30)                        # finite fill: no NaN on empty rows

    # ---- im2col over the sequence axis (one shifted copy of x per conv tap).
    # xbig[b, s, tau*E + e] = x[b, s + tau, e]; positions past the end are zero
    # and masked away (via the additive mask) before the max-pool anyway.
    zpad = jnp.zeros((TB, KMAX - 1, E), cdt)
    xpad = jnp.concatenate([x, zpad], axis=1)                       # (TB, S+KMAX-1, E)
    xbig = jnp.concatenate([xpad[:, t:t + S, :] for t in range(KMAX)],
                           axis=-1).reshape(TB * S, KMAX * E)

    # ---- ONE wide MXU matmul: all 25 conv filters (all experts, kernel sizes,
    # taps) plus the attention projection, lane-dense, f32 accumulation.
    wide = jnp.dot(xbig, wbig_ref[...],
                   preferred_element_type=jnp.float32).reshape(TB, S, n_pad)

    # ---- MaskAttention: scores ride in column ATT_COL of the fused matmul.
    # (The scalar attention bias is constant over S and cancels in the softmax.)
    scores = wide[:, :, ATT_COL:ATT_COL + 1]                        # (TB, S, 1)
    mask = mask_ref[...][:, :, None]
    scores = jnp.where(mask != 0.0, scores, neg)
    m = jnp.max(scores, axis=1, keepdims=True)
    p = jnp.exp(scores - m)
    p = p / jnp.sum(p, axis=1, keepdims=True)
    feature = jnp.sum(p * x.astype(jnp.float32), axis=1)            # (TB, E) f32

    # ---- domain embedding (one-hot matmul == nn.Embedding gather) -----------
    dom = jnp.dot(onehot_ref[...], emb_ref[...],
                  preferred_element_type=jnp.float32)               # (TB, E)

    # ---- gate: Linear(2E,H) + ReLU -> Linear(H,5) -> softmax ----------------
    h = (jnp.dot(dom.astype(cdt), g1d_ref[...], preferred_element_type=jnp.float32)
         + jnp.dot(feature.astype(cdt), g1f_ref[...], preferred_element_type=jnp.float32)
         + gb1_ref[...])
    h = jnp.maximum(h, 0.0)
    g = (jnp.dot(h.astype(cdt), gw2_ref[...], preferred_element_type=jnp.float32)
         + gb2_ref[...])
    gm = jnp.max(g, axis=-1, keepdims=True)
    ge = jnp.exp(g - gm)
    gate = ge / jnp.sum(ge, axis=-1, keepdims=True)                 # (TB, 5) f32

    # ---- "valid"-conv masking + bias (single precomputed additive mask) + max-pool
    pooled = jnp.max(wide + maskadd_ref[...][None, :, :], axis=1)   # (TB, n_pad) f32

    # ---- gated mixture of experts fused with classifier layer 0 -------------
    # shared = sum_i gate[:, i] * pooled_expert_i ; h0 = shared @ w0 + b0, realised
    # as (pooled * (gate @ sel)) @ w0_expanded -- no lane slicing at all.
    gate_full = jnp.dot(gate.astype(cdt), sel_ref[...],
                        preferred_element_type=jnp.float32)         # (TB, n_pad)
    weighted = pooled * gate_full

    it = iter(mlp_refs)
    b0 = next(it)[...]
    h = jnp.dot(weighted.astype(cdt), w0exp_ref[...],
                preferred_element_type=jnp.float32) + b0

    def bn_relu(v, gamma, beta, mean, var):
        v = (v - mean) * jax.lax.rsqrt(var + BN_EPS) * gamma + beta
        return jnp.maximum(v, 0.0)                  # Dropout -> identity (eval)

    h = bn_relu(h, next(it)[...], next(it)[...], next(it)[...], next(it)[...])
    for _ in range(1, n_mlp):
        w = next(it)[...]
        b = next(it)[...]
        h = jnp.dot(h.astype(cdt), w, preferred_element_type=jnp.float32) + b
        h = bn_relu(h, next(it)[...], next(it)[...], next(it)[...], next(it)[...])

    # Lane-dense head: real weight lives in output column 0, rest are zero pad.
    logit = (jnp.dot(h.astype(cdt), out_w_ref[...],
                     preferred_element_type=jnp.float32) + out_b_ref[...])
    out_ref[...] = jax.nn.sigmoid(logit)            # (TB, OUT_LANES) unmasked store


# ------------------------- weight packing (wrapper side) ----------------------
def pack_params(params, emb_dim, dtype):
    """Pack torch-layout params into the fused, lane-dense kernel layout."""
    E = emb_dim
    kbig = KMAX * E
    w0, b0, g0, be0, me0, va0 = params['mlp'][0]
    D0 = w0.shape[1]

    W = jnp.zeros((kbig, N_PAD), jnp.float32)
    W = W.at[:E, ATT_COL].set(params['att_w'][:, 0])          # attention column
    km1 = jnp.zeros((1, N_PAD), jnp.int32)
    cbias = jnp.zeros((1, N_PAD), jnp.float32)
    sel = jnp.zeros((NUM_EXPERT, N_PAD), jnp.float32)
    w0_exp = jnp.zeros((N_PAD, D0), jnp.float32)

    for i in range(NUM_EXPERT):
        e0 = CONV0 + i * EXPERT_OUT
        sel = sel.at[i, e0:e0 + EXPERT_OUT].set(1.0)
        w0_exp = w0_exp.at[e0:e0 + EXPERT_OUT, :].set(w0)
        off = 0
        for j, k in enumerate(KERNEL_SIZES):
            c = FEATURE_KERNEL[k]
            c0 = e0 + off
            W = W.at[:k * E, c0:c0 + c].set(params['conv_w'][j][i].reshape(k * E, c))
            cbias = cbias.at[0, c0:c0 + c].set(params['conv_b'][j][i])
            km1 = km1.at[0, c0:c0 + c].set(k - 1)
            off += c

    gw1 = params['gw1']
    H = gw1.shape[1]
    mlp_flat = [b0.reshape(1, D0), g0.reshape(1, D0), be0.reshape(1, D0),
                me0.reshape(1, D0), va0.reshape(1, D0)]
    for (w, b, ga, be, me, va) in params['mlp'][1:]:
        d = w.shape[1]
        mlp_flat += [w.astype(dtype), b.reshape(1, d), ga.reshape(1, d),
                     be.reshape(1, d), me.reshape(1, d), va.reshape(1, d)]

    # Lane-dense classifier head: pad the (H_last, 1) weight out to OUT_LANES cols.
    h_last = params['mlp'][-1][0].shape[1]
    out_w = jnp.zeros((h_last, OUT_LANES), jnp.float32)
    out_w = out_w.at[:, 0].set(params['out_w'][:, 0])
    out_b = jnp.zeros((1, OUT_LANES), jnp.float32)
    out_b = out_b.at[0, 0].set(params['out_b'][0])

    # NOTE: params['att_b'] is not needed: a constant bias cancels in the softmax.
    return dict(
        W_big=W.astype(dtype), km1=km1, cbias=cbias,
        sel=sel.astype(dtype), w0_exp=w0_exp.astype(dtype),
        emb=params['emb'].astype(dtype),
        gw1_dom=gw1[:E].astype(dtype), gw1_feat=gw1[E:].astype(dtype),
        gb1=params['gb1'].reshape(1, H),
        gw2=params['gw2'].astype(dtype), gb2=params['gb2'].reshape(1, NUM_EXPERT),
        mlp_flat=mlp_flat,
        out_w=out_w.astype(dtype), out_b=out_b,
    )


# ------------------------------ wrapper / glue --------------------------------
def mdfend_forward(x, mask, category, params, mlp_dims, *,
                   compute_dtype=jnp.bfloat16, block_b=8):
    B, S, E = x.shape
    assert S >= KMAX, "sequence length must cover the largest conv kernel (10)"
    n_mlp = len(mlp_dims)

    packed = pack_params(params, E, compute_dtype)

    # Precompute the additive "valid conv + bias" mask (S, N_PAD):
    #   maskadd[s, c] = conv_bias[c]  if s is a valid output position for column c
    #                 = -1e30         otherwise  (finite: no NaN when multiplied by 0)
    s_pos = jnp.arange(S, dtype=jnp.int32)[:, None]                 # (S, 1)
    valid = s_pos < (S - packed['km1'])                             # (S, N_PAD)
    maskadd = jnp.where(valid, packed['cbias'], jnp.float32(-1e30))  # (S, N_PAD) f32

    # Batch grid: one (TB, S, E) activation tile per step; weights use constant
    # index_maps so they stay VMEM-resident. "parallel" lets batch tiles be
    # sharded across TensorCores (v7x megacore) and pipelined.
    TB = min(B, block_b)
    Bp = _round_up(B, TB)

    xk = x.astype(compute_dtype)
    mk = mask.astype(jnp.float32)
    oh = jax.nn.one_hot(category, DOMAIN_NUM, dtype=compute_dtype)
    if Bp != B:
        pad = Bp - B
        xk = jnp.concatenate([xk, jnp.zeros((pad, S, E), xk.dtype)], axis=0)
        mk = jnp.concatenate([mk, jnp.ones((pad, S), mk.dtype)], axis=0)
        oh = jnp.concatenate([oh, jnp.zeros((pad, DOMAIN_NUM), oh.dtype)], axis=0)

    weights = [packed['W_big'], maskadd, packed['sel'], packed['w0_exp'],
               packed['emb'], packed['gw1_dom'], packed['gw1_feat'],
               packed['gb1'], packed['gw2'], packed['gb2']]
    weights += packed['mlp_flat']
    weights += [packed['out_w'], packed['out_b']]
    inputs = [xk, mk, oh] + weights

    def const_spec(a):
        return pl.BlockSpec(a.shape, lambda b, _nd=a.ndim: (0,) * _nd)

    in_specs = ([pl.BlockSpec((TB, S, E), lambda b: (b, 0, 0)),
                 pl.BlockSpec((TB, S), lambda b: (b, 0)),
                 pl.BlockSpec((TB, DOMAIN_NUM), lambda b: (b, 0))]
                + [const_spec(w) for w in weights])
    out_spec = pl.BlockSpec((TB, OUT_LANES), lambda b: (b, 0))

    # Advisory cost estimate (dominant term: the fused conv/attention matmul).
    H = mlp_dims[-1]
    flops = 2 * Bp * S * (KMAX * E) * N_PAD
    flops += 2 * Bp * N_PAD * (NUM_EXPERT + mlp_dims[0])
    flops += 2 * Bp * E * (DOMAIN_NUM + 2 * H) + 2 * Bp * H * NUM_EXPERT
    for da, db in zip(mlp_dims[:-1], mlp_dims[1:]):
        flops += 2 * Bp * da * db
    flops += 2 * Bp * mlp_dims[-1] * OUT_LANES
    bytes_accessed = (sum(int(np.prod(a.shape)) * np.dtype(a.dtype).itemsize
                          for a in inputs) + Bp * OUT_LANES * 4)
    cost = pl.CostEstimate(flops=int(flops),
                           transcendentals=int(Bp * (S + NUM_EXPERT + OUT_LANES)),
                           bytes_accessed=int(bytes_accessed))

    out = pl.pallas_call(
        functools.partial(_mdfend_kernel, n_mlp),
        out_shape=jax.ShapeDtypeStruct((Bp, OUT_LANES), jnp.float32),
        grid_spec=pltpu.PrefetchScalarGridSpec(
            num_scalar_prefetch=0,
            grid=(pl.cdiv(Bp, TB),),
            in_specs=in_specs,
            out_specs=out_spec),
        compiler_params=pltpu.CompilerParams(
            dimension_semantics=("parallel",),
            vmem_limit_bytes=48 * 1024 * 1024),
        cost_estimate=cost,
    )(*inputs)
    return out[:B, 0]


# ----------------------------- parameter init ---------------------------------
def init_params(key, emb_dim, mlp_dims):
    keys = iter(jax.random.split(key, 128))

    def nrm(shape, scale=0.05):
        return jax.random.normal(next(keys), shape, jnp.float32) * scale

    E = emb_dim
    H = mlp_dims[-1]
    params = dict(
        att_w=nrm((E, 1), 0.1), att_b=nrm((1,), 0.1),
        emb=nrm((DOMAIN_NUM, E), 0.1),
        gw1=nrm((2 * E, H)), gb1=nrm((H,)),
        gw2=nrm((H, NUM_EXPERT)), gb2=nrm((NUM_EXPERT,)),
        conv_w=[nrm((NUM_EXPERT, k, E, FEATURE_KERNEL[k])) for k in KERNEL_SIZES],
        conv_b=[nrm((NUM_EXPERT, FEATURE_KERNEL[k])) for k in KERNEL_SIZES],
        out_w=nrm((mlp_dims[-1], 1), 0.1), out_b=nrm((1,), 0.1),
    )
    mlp = []
    in_dim = EXPERT_OUT
    for d in mlp_dims:
        mlp.append((nrm((in_dim, d)), nrm((d,)),
                    1.0 + nrm((d,), 0.02), nrm((d,), 0.02),
                    nrm((d,), 0.02), 1.0 + jnp.abs(nrm((d,), 0.02))))
        in_dim = d
    params['mlp'] = mlp
    return params


# ----------------------- pure-JAX reference (for checking) --------------------
def reference_forward(x, mask, category, params, mlp_dims):
    B, S, E = x.shape
    scores = jnp.einsum('bse,eo->bs', x, params['att_w']) + params['att_b'][0]
    scores = jnp.where(mask == 0.0, -jnp.inf, scores)
    p = jax.nn.softmax(scores, axis=-1)
    feature = jnp.einsum('bs,bse->be', p, x)
    dom = params['emb'][category]
    gate_in = jnp.concatenate([dom, feature], axis=-1)
    h = jax.nn.relu(gate_in @ params['gw1'] + params['gb1'])
    gate = jax.nn.softmax(h @ params['gw2'] + params['gb2'], axis=1)
    shared = 0.0
    for i in range(NUM_EXPERT):
        feats = []
        for j, k in enumerate(KERNEL_SIZES):
            w = params['conv_w'][j][i]                       # (k, E, 64)
            b = params['conv_b'][j][i]
            L = S - k + 1
            acc = sum(jnp.einsum('ble,ec->blc', x[:, t:t + L, :], w[t])
                      for t in range(k)) + b
            feats.append(jnp.max(acc, axis=1))
        shared = shared + jnp.concatenate(feats, axis=-1) * gate[:, i:i + 1]
    h = shared
    for (w, b, gamma, beta, mean, var) in params['mlp']:
        h = h @ w + b
        h = (h - mean) * jax.lax.rsqrt(var + BN_EPS) * gamma + beta
        h = jax.nn.relu(h)
    logit = h @ params['out_w'] + params['out_b']
    return jax.nn.sigmoid(logit[:, 0])


if __name__ == "__main__":
    B, S, E = 4, 16, 32            # batch, seq (>= max conv kernel 10), emb_dim
    mlp_dims = (64,)

    key = jax.random.PRNGKey(0)
    kx, kc, kp = jax.random.split(key, 3)
    x = jax.random.normal(kx, (B, S, E), jnp.float32)
    lengths = jnp.array([16, 12, 9, 5], dtype=jnp.int32)
    mask = (jnp.arange(S)[None, :] < lengths[:, None]).astype(jnp.float32)
    category = jax.random.randint(kc, (B,), 0, DOMAIN_NUM, dtype=jnp.int32)

    params = init_params(kp, E, mlp_dims)
    ref = jax.block_until_ready(reference_forward(x, mask, category, params, mlp_dims))

    # f32 pass: exact-math check against the torch-equivalent reference.
    out_f32 = jax.block_until_ready(
        mdfend_forward(x, mask, category, params, mlp_dims,
                       compute_dtype=jnp.float32))
    assert out_f32.shape == (B,), out_f32.shape
    np.testing.assert_allclose(np.asarray(out_f32), np.asarray(ref),
                               rtol=1e-4, atol=1e-4)

    # bf16 pass (default, MXU-native): looser tolerance for reduced precision.
    out_bf16 = jax.block_until_ready(
        mdfend_forward(x, mask, category, params, mlp_dims,
                       compute_dtype=jnp.bfloat16))
    assert out_bf16.shape == (B,), out_bf16.shape
    np.testing.assert_allclose(np.asarray(out_bf16), np.asarray(ref),
                               rtol=2e-2, atol=2e-2)

    print("KERNEL_OK")
</pallas_src>

<mosaic_0001>
module attributes {stable_mosaic.version = 11 : i64} {
  func.func @_mdfend_kernel(%arg0: i32, %arg1: memref<4x16x32xf32, #tpu.memory_space<vmem>>, %arg2: memref<4x16xf32, #tpu.memory_space<vmem>>, %arg3: memref<4x9xf32, #tpu.memory_space<vmem>>, %arg4: memref<320x1792xf32, #tpu.memory_space<vmem>>, %arg5: memref<16x1792xf32, #tpu.memory_space<vmem>>, %arg6: memref<5x1792xf32, #tpu.memory_space<vmem>>, %arg7: memref<1792x64xf32, #tpu.memory_space<vmem>>, %arg8: memref<9x32xf32, #tpu.memory_space<vmem>>, %arg9: memref<32x64xf32, #tpu.memory_space<vmem>>, %arg10: memref<32x64xf32, #tpu.memory_space<vmem>>, %arg11: memref<1x64xf32, #tpu.memory_space<vmem>>, %arg12: memref<64x5xf32, #tpu.memory_space<vmem>>, %arg13: memref<1x5xf32, #tpu.memory_space<vmem>>, %arg14: memref<1x64xf32, #tpu.memory_space<vmem>>, %arg15: memref<1x64xf32, #tpu.memory_space<vmem>>, %arg16: memref<1x64xf32, #tpu.memory_space<vmem>>, %arg17: memref<1x64xf32, #tpu.memory_space<vmem>>, %arg18: memref<1x64xf32, #tpu.memory_space<vmem>>, %arg19: memref<64x128xf32, #tpu.memory_space<vmem>>, %arg20: memref<1x128xf32, #tpu.memory_space<vmem>>, %arg21: memref<4x128xf32, #tpu.memory_space<vmem>>) attributes {dimension_semantics = [#tpu.dimension_semantics<parallel>], iteration_bounds = array<i64: 1>, scalar_prefetch = 0 : i64, scratch_operands = 0 : i64, tpu.core_type = #tpu.core_type<tc>, window_params = [{transform_indices = @transform_0, window_bounds = array<i64: 4, 16, 32>}, {transform_indices = @transform_1, window_bounds = array<i64: 4, 16>}, {transform_indices = @transform_2, window_bounds = array<i64: 4, 9>}, {pipeline_mode = #tpu.pipeline_mode<synchronous>, transform_indices = @transform_3, window_bounds = array<i64: 320, 1792>}, {pipeline_mode = #tpu.pipeline_mode<synchronous>, transform_indices = @transform_4, window_bounds = array<i64: 16, 1792>}, {pipeline_mode = #tpu.pipeline_mode<synchronous>, transform_indices = @transform_5, window_bounds = array<i64: 5, 1792>}, {pipeline_mode = #tpu.pipeline_mode<synchronous>, transform_indices = @transform_6, window_bounds = array<i64: 1792, 64>}, {pipeline_mode = #tpu.pipeline_mode<synchronous>, transform_indices = @transform_7, window_bounds = array<i64: 9, 32>}, {pipeline_mode = #tpu.pipeline_mode<synchronous>, transform_indices = @transform_8, window_bounds = array<i64: 32, 64>}, {pipeline_mode = #tpu.pipeline_mode<synchronous>, transform_indices = @transform_9, window_bounds = array<i64: 32, 64>}, {pipeline_mode = #tpu.pipeline_mode<synchronous>, transform_indices = @transform_10, window_bounds = array<i64: 1, 64>}, {pipeline_mode = #tpu.pipeline_mode<synchronous>, transform_indices = @transform_11, window_bounds = array<i64: 64, 5>}, {pipeline_mode = #tpu.pipeline_mode<synchronous>, transform_indices = @transform_12, window_bounds = array<i64: 1, 5>}, {pipeline_mode = #tpu.pipeline_mode<synchronous>, transform_indices = @transform_13, window_bounds = array<i64: 1, 64>}, {pipeline_mode = #tpu.pipeline_mode<synchronous>, transform_indices = @transform_14, window_bounds = array<i64: 1, 64>}, {pipeline_mode = #tpu.pipeline_mode<synchronous>, transform_indices = @transform_15, window_bounds = array<i64: 1, 64>}, {pipeline_mode = #tpu.pipeline_mode<synchronous>, transform_indices = @transform_16, window_bounds = array<i64: 1, 64>}, {pipeline_mode = #tpu.pipeline_mode<synchronous>, transform_indices = @transform_17, window_bounds = array<i64: 1, 64>}, {pipeline_mode = #tpu.pipeline_mode<synchronous>, transform_indices = @transform_18, window_bounds = array<i64: 64, 128>}, {pipeline_mode = #tpu.pipeline_mode<synchronous>, transform_indices = @transform_19, window_bounds = array<i64: 1, 128>}, {transform_indices = @transform_20, window_bounds = array<i64: 4, 128>}]} {
    %c0 = arith.constant 0 : index
    %c0_0 = arith.constant 0 : index
    %c0_1 = arith.constant 0 : index
    %0 = vector.load %arg1[%c0, %c0_0, %c0_1] : memref<4x16x32xf32, #tpu.memory_space<vmem>>, vector<4x16x32xf32>
    %cst = arith.constant 0.000000e+00 : f32
    %1 = vector.broadcast %cst : f32 to vector<4x9x32xf32>
    %2 = tpu.concatenate %0, %1 in 1 : vector<4x16x32xf32>, vector<4x9x32xf32> -> vector<4x25x32xf32>
    %3 = vector.extract_strided_slice %2 {offsets = [0, 0, 0], sizes = [4, 16, 32], strides = [1, 1, 1]} : vector<4x25x32xf32> to vector<4x16x32xf32>
    %4 = vector.extract_strided_slice %2 {offsets = [0, 1, 0], sizes = [4, 16, 32], strides = [1, 1, 1]} : vector<4x25x32xf32> to vector<4x16x32xf32>
    %5 = vector.extract_strided_slice %2 {offsets = [0, 2, 0], sizes = [4, 16, 32], strides = [1, 1, 1]} : vector<4x25x32xf32> to vector<4x16x32xf32>
    %6 = vector.extract_strided_slice %2 {offsets = [0, 3, 0], sizes = [4, 16, 32], strides = [1, 1, 1]} : vector<4x25x32xf32> to vector<4x16x32xf32>
    %7 = vector.extract_strided_slice %2 {offsets = [0, 4, 0], sizes = [4, 16, 32], strides = [1, 1, 1]} : vector<4x25x32xf32> to vector<4x16x32xf32>
    %8 = vector.extract_strided_slice %2 {offsets = [0, 5, 0], sizes = [4, 16, 32], strides = [1, 1, 1]} : vector<4x25x32xf32> to vector<4x16x32xf32>
    %9 = vector.extract_strided_slice %2 {offsets = [0, 6, 0], sizes = [4, 16, 32], strides = [1, 1, 1]} : vector<4x25x32xf32> to vector<4x16x32xf32>
    %10 = vector.extract_strided_slice %2 {offsets = [0, 7, 0], sizes = [4, 16, 32], strides = [1, 1, 1]} : vector<4x25x32xf32> to vector<4x16x32xf32>
    %11 = vector.extract_strided_slice %2 {offsets = [0, 8, 0], sizes = [4, 16, 32], strides = [1, 1, 1]} : vector<4x25x32xf32> to vector<4x16x32xf32>
    %12 = vector.extract_strided_slice %2 {offsets = [0, 9, 0], sizes = [4, 16, 32], strides = [1, 1, 1]} : vector<4x25x32xf32> to vector<4x16x32xf32>
    %13 = tpu.concatenate %3, %4, %5, %6, %7, %8, %9, %10, %11, %12 in 2 : vector<4x16x32xf32>, vector<4x16x32xf32>, vector<4x16x32xf32>, vector<4x16x32xf32>, vector<4x16x32xf32>, vector<4x16x32xf32>, vector<4x16x32xf32>, vector<4x16x32xf32>, vector<4x16x32xf32>, vector<4x16x32xf32> -> vector<4x16x320xf32>
    %14 = vector.shape_cast %13 : vector<4x16x320xf32> to vector<64x320xf32>
    %c0_2 = arith.constant 0 : index
    %c0_3 = arith.constant 0 : index
    %15 = vector.load %arg4[%c0_2, %c0_3] : memref<320x1792xf32, #tpu.memory_space<vmem>>, vector<320x1792xf32>
    %cst_4 = arith.constant dense<0.000000e+00> : vector<64x1792xf32>
    %16 = tpu.matmul %14, %15, %cst_4 {dimension_numbers = #tpu.dot_dimension_numbers<[1], [0], [0], [1], [0, 0, 1, 1], [], []>} : vector<64x320xf32>, vector<320x1792xf32>, vector<64x1792xf32> -> vector<64x1792xf32>
    %17 = vector.shape_cast %16 : vector<64x1792xf32> to vector<4x16x1792xf32>
    %18 = vector.extract_strided_slice %17 {offsets = [0, 0, 0], sizes = [4, 16, 1], strides = [1, 1, 1]} : vector<4x16x1792xf32> to vector<4x16x1xf32>
    %c0_5 = arith.constant 0 : index
    %c0_6 = arith.constant 0 : index
    %19 = vector.load %arg2[%c0_5, %c0_6] : memref<4x16xf32, #tpu.memory_space<vmem>>, vector<4x16xf32>
    %20 = vector.shape_cast %19 : vector<4x16xf32> to vector<4x16x1xf32>
    %cst_7 = arith.constant 0.000000e+00 : f32
    %21 = vector.broadcast %cst_7 : f32 to vector<4x16x1xf32>
    %22 = arith.cmpf one, %20, %21 : vector<4x16x1xf32>
    %cst_8 = arith.constant -1.000000e+30 : f32
    %23 = vector.broadcast %cst_8 : f32 to vector<4x16x1xf32>
    %24 = arith.select %22, %18, %23 : vector<4x16x1xi1>, vector<4x16x1xf32>
    %cst_9 = arith.constant dense<0xFF800000> : vector<4x1xf32>
    %25 = vector.multi_reduction <maximumf>, %24, %cst_9 [1] : vector<4x16x1xf32> to vector<4x1xf32>
    %26 = vector.shape_cast %25 : vector<4x1xf32> to vector<4x1x1xf32>
    %27 = vector.broadcast %26 : vector<4x1x1xf32> to vector<4x16x1xf32>
    %28 = arith.subf %24, %27 : vector<4x16x1xf32>
    %29 = math.exp %28 : vector<4x16x1xf32>
    %cst_10 = arith.constant dense<0.000000e+00> : vector<4x1xf32>
    %30 = vector.multi_reduction <add>, %29, %cst_10 [1] : vector<4x16x1xf32> to vector<4x1xf32>
    %31 = vector.shape_cast %30 : vector<4x1xf32> to vector<4x1x1xf32>
    %32 = vector.broadcast %31 : vector<4x1x1xf32> to vector<4x16x1xf32>
    %33 = arith.divf %29, %32 : vector<4x16x1xf32>
    %34 = vector.broadcast %33 : vector<4x16x1xf32> to vector<4x16x32xf32>
    %35 = arith.mulf %34, %0 : vector<4x16x32xf32>
    %cst_11 = arith.constant dense<0.000000e+00> : vector<4x32xf32>
    %36 = vector.multi_reduction <add>, %35, %cst_11 [1] : vector<4x16x32xf32> to vector<4x32xf32>
    %c0_12 = arith.constant 0 : index
    %c0_13 = arith.constant 0 : index
    %37 = vector.load %arg3[%c0_12, %c0_13] : memref<4x9xf32, #tpu.memory_space<vmem>>, vector<4x9xf32>
    %c0_14 = arith.constant 0 : index
    %c0_15 = arith.constant 0 : index
    %38 = vector.load %arg8[%c0_14, %c0_15] : memref<9x32xf32, #tpu.memory_space<vmem>>, vector<9x32xf32>
    %cst_16 = arith.constant dense<0.000000e+00> : vector<4x32xf32>
    %39 = tpu.matmul %37, %38, %cst_16 {dimension_numbers = #tpu.dot_dimension_numbers<[1], [0], [0], [1], [0, 0, 1, 1], [], []>} : vector<4x9xf32>, vector<9x32xf32>, vector<4x32xf32> -> vector<4x32xf32>
    %c0_17 = arith.constant 0 : index
    %c0_18 = arith.constant 0 : index
    %40 = vector.load %arg9[%c0_17, %c0_18] : memref<32x64xf32, #tpu.memory_space<vmem>>, vector<32x64xf32>
    %cst_19 = arith.constant dense<0.000000e+00> : vector<4x64xf32>
    %41 = tpu.matmul %39, %40, %cst_19 {dimension_numbers = #tpu.dot_dimension_numbers<[1], [0], [0], [1], [0, 0, 1, 1], [], []>} : vector<4x32xf32>, vector<32x64xf32>, vector<4x64xf32> -> vector<4x64xf32>
    %c0_20 = arith.constant 0 : index
    %c0_21 = arith.constant 0 : index
    %42 = vector.load %arg10[%c0_20, %c0_21] : memref<32x64xf32, #tpu.memory_space<vmem>>, vector<32x64xf32>
    %cst_22 = arith.constant dense<0.000000e+00> : vector<4x64xf32>
    %43 = tpu.matmul %36, %42, %cst_22 {dimension_numbers = #tpu.dot_dimension_numbers<[1], [0], [0], [1], [0, 0, 1, 1], [], []>} : vector<4x32xf32>, vector<32x64xf32>, vector<4x64xf32> -> vector<4x64xf32>
    %44 = arith.addf %41, %43 : vector<4x64xf32>
    %c0_23 = arith.constant 0 : index
    %c0_24 = arith.constant 0 : index
    %45 = vector.load %arg11[%c0_23, %c0_24] : memref<1x64xf32, #tpu.memory_space<vmem>>, vector<1x64xf32>
    %46 = vector.broadcast %45 : vector<1x64xf32> to vector<4x64xf32>
    %47 = arith.addf %44, %46 : vector<4x64xf32>
    %cst_25 = arith.constant 0.000000e+00 : f32
    %48 = vector.broadcast %cst_25 : f32 to vector<4x64xf32>
    %49 = arith.maximumf %47, %48 : vector<4x64xf32>
    %c0_26 = arith.constant 0 : index
    %c0_27 = arith.constant 0 : index
    %50 = vector.load %arg12[%c0_26, %c0_27] : memref<64x5xf32, #tpu.memory_space<vmem>>, vector<64x5xf32>
    %cst_28 = arith.constant dense<0.000000e+00> : vector<4x5xf32>
    %51 = tpu.matmul %49, %50, %cst_28 {dimension_numbers = #tpu.dot_dimension_numbers<[1], [0], [0], [1], [0, 0, 1, 1], [], []>} : vector<4x64xf32>, vector<64x5xf32>, vector<4x5xf32> -> vector<4x5xf32>
    %c0_29 = arith.constant 0 : index
    %c0_30 = arith.constant 0 : index
    %52 = vector.load %arg13[%c0_29, %c0_30] : memref<1x5xf32, #tpu.memory_space<vmem>>, vector<1x5xf32>
    %53 = vector.broadcast %52 : vector<1x5xf32> to vector<4x5xf32>
    %54 = arith.addf %51, %53 : vector<4x5xf32>
    %cst_31 = arith.constant dense<0xFF800000> : vector<4xf32>
    %55 = vector.multi_reduction <maximumf>, %54, %cst_31 [1] : vector<4x5xf32> to vector<4xf32>
    %56 = vector.shape_cast %55 : vector<4xf32> to vector<4x1xf32>
    %57 = vector.broadcast %56 : vector<4x1xf32> to vector<4x5xf32>
    %58 = arith.subf %54, %57 : vector<4x5xf32>
    %59 = math.exp %58 : vector<4x5xf32>
    %cst_32 = arith.constant dense<0.000000e+00> : vector<4xf32>
    %60 = vector.multi_reduction <add>, %59, %cst_32 [1] : vector<4x5xf32> to vector<4xf32>
    %61 = vector.shape_cast %60 : vector<4xf32> to vector<4x1xf32>
    %62 = vector.broadcast %61 : vector<4x1xf32> to vector<4x5xf32>
    %63 = arith.divf %59, %62 : vector<4x5xf32>
    %c0_33 = arith.constant 0 : index
    %c0_34 = arith.constant 0 : index
    %64 = vector.load %arg5[%c0_33, %c0_34] : memref<16x1792xf32, #tpu.memory_space<vmem>>, vector<16x1792xf32>
    %65 = vector.shape_cast %64 : vector<16x1792xf32> to vector<1x16x1792xf32>
    %66 = vector.broadcast %65 : vector<1x16x1792xf32> to vector<4x16x1792xf32>
    %67 = arith.addf %17, %66 : vector<4x16x1792xf32>
    %cst_35 = arith.constant dense<0xFF800000> : vector<4x1792xf32>
    %68 = vector.multi_reduction <maximumf>, %67, %cst_35 [1] : vector<4x16x1792xf32> to vector<4x1792xf32>
    %c0_36 = arith.constant 0 : index
    %c0_37 = arith.constant 0 : index
    %69 = vector.load %arg6[%c0_36, %c0_37] : memref<5x1792xf32, #tpu.memory_space<vmem>>, vector<5x1792xf32>
    %cst_38 = arith.constant dense<0.000000e+00> : vector<4x1792xf32>
    %70 = tpu.matmul %63, %69, %cst_38 {dimension_numbers = #tpu.dot_dimension_numbers<[1], [0], [0], [1], [0, 0, 1, 1], [], []>} : vector<4x5xf32>, vector<5x1792xf32>, vector<4x1792xf32> -> vector<4x1792xf32>
    %71 = arith.mulf %68, %70 : vector<4x1792xf32>
    %c0_39 = arith.constant 0 : index
    %c0_40 = arith.constant 0 : index
    %72 = vector.load %arg14[%c0_39, %c0_40] : memref<1x64xf32, #tpu.memory_space<vmem>>, vector<1x64xf32>
    %c0_41 = arith.constant 0 : index
    %c0_42 = arith.constant 0 : index
    %73 = vector.load %arg7[%c0_41, %c0_42] : memref<1792x64xf32, #tpu.memory_space<vmem>>, vector<1792x64xf32>
    %cst_43 = arith.constant dense<0.000000e+00> : vector<4x64xf32>
    %74 = tpu.matmul %71, %73, %cst_43 {dimension_numbers = #tpu.dot_dimension_numbers<[1], [0], [0], [1], [0, 0, 1, 1], [], []>} : vector<4x1792xf32>, vector<1792x64xf32>, vector<4x64xf32> -> vector<4x64xf32>
    %75 = vector.broadcast %72 : vector<1x64xf32> to vector<4x64xf32>
    %76 = arith.addf %74, %75 : vector<4x64xf32>
    %c0_44 = arith.constant 0 : index
    %c0_45 = arith.constant 0 : index
    %77 = vector.load %arg15[%c0_44, %c0_45] : memref<1x64xf32, #tpu.memory_space<vmem>>, vector<1x64xf32>
    %c0_46 = arith.constant 0 : index
    %c0_47 = arith.constant 0 : index
    %78 = vector.load %arg16[%c0_46, %c0_47] : memref<1x64xf32, #tpu.memory_space<vmem>>, vector<1x64xf32>
    %c0_48 = arith.constant 0 : index
    %c0_49 = arith.constant 0 : index
    %79 = vector.load %arg17[%c0_48, %c0_49] : memref<1x64xf32, #tpu.memory_space<vmem>>, vector<1x64xf32>
    %c0_50 = arith.constant 0 : index
    %c0_51 = arith.constant 0 : index
    %80 = vector.load %arg18[%c0_50, %c0_51] : memref<1x64xf32, #tpu.memory_space<vmem>>, vector<1x64xf32>
    %81 = vector.broadcast %79 : vector<1x64xf32> to vector<4x64xf32>
    %82 = arith.subf %76, %81 : vector<4x64xf32>
    %cst_52 = arith.constant 9.99999974E-6 : f32
    %83 = vector.broadcast %cst_52 : f32 to vector<1x64xf32>
    %84 = arith.addf %80, %83 : vector<1x64xf32>
    %85 = math.rsqrt %84 : vector<1x64xf32>
    %86 = vector.broadcast %85 : vector<1x64xf32> to vector<4x64xf32>
    %87 = arith.mulf %82, %86 : vector<4x64xf32>
    %88 = vector.broadcast %77 : vector<1x64xf32> to vector<4x64xf32>
    %89 = arith.mulf %87, %88 : vector<4x64xf32>
    %90 = vector.broadcast %78 : vector<1x64xf32> to vector<4x64xf32>
    %91 = arith.addf %89, %90 : vector<4x64xf32>
    %cst_53 = arith.constant 0.000000e+00 : f32
    %92 = vector.broadcast %cst_53 : f32 to vector<4x64xf32>
    %93 = arith.maximumf %91, %92 : vector<4x64xf32>
    %c0_54 = arith.constant 0 : index
    %c0_55 = arith.constant 0 : index
    %94 = vector.load %arg19[%c0_54, %c0_55] : memref<64x128xf32, #tpu.memory_space<vmem>>, vector<64x128xf32>
    %cst_56 = arith.constant dense<0.000000e+00> : vector<4x128xf32>
    %95 = tpu.matmul %93, %94, %cst_56 {dimension_numbers = #tpu.dot_dimension_numbers<[1], [0], [0], [1], [0, 0, 1, 1], [], []>} : vector<4x64xf32>, vector<64x128xf32>, vector<4x128xf32> -> vector<4x128xf32>
    %c0_57 = arith.constant 0 : index
    %c0_58 = arith.constant 0 : index
    %96 = vector.load %arg20[%c0_57, %c0_58] : memref<1x128xf32, #tpu.memory_space<vmem>>, vector<1x128xf32>
    %97 = vector.broadcast %96 : vector<1x128xf32> to vector<4x128xf32>
    %98 = arith.addf %95, %97 : vector<4x128xf32>
    %99 = arith.negf %98 : vector<4x128xf32>
    %100 = math.exp %99 : vector<4x128xf32>
    %cst_59 = arith.constant 1.000000e+00 : f32
    %101 = vector.broadcast %cst_59 : f32 to vector<4x128xf32>
    %102 = arith.addf %101, %100 : vector<4x128xf32>
    %103 = arith.divf %101, %102 : vector<4x128xf32>
    %c0_60 = arith.constant 0 : index
    %c0_61 = arith.constant 0 : index
    %104 = vector.load %arg21[%c0_60, %c0_61] : memref<4x128xf32, #tpu.memory_space<vmem>>, vector<4x128xf32>
    tpu.vector_store %arg21[%c0_60, %c0_61], %103 {strides = array<i32>} : memref<4x128xf32, #tpu.memory_space<vmem>>, vector<4x128xf32>,
    return
  }
  func.func @transform_0(%arg0: i32) -> (i32, i32, i32) {
    %c0_i32 = arith.constant 0 : i32
    %c0_i32_0 = arith.constant 0 : i32
    %c0_i32_1 = arith.constant 0 : i32
    return %arg0, %c0_i32, %c0_i32_0 : i32, i32, i32
  }
  func.func @transform_1(%arg0: i32) -> (i32, i32) {
    %c0_i32 = arith.constant 0 : i32
    %c0_i32_0 = arith.constant 0 : i32
    return %arg0, %c0_i32 : i32, i32
  }
  func.func @transform_2(%arg0: i32) -> (i32, i32) {
    %c0_i32 = arith.constant 0 : i32
    %c0_i32_0 = arith.constant 0 : i32
    return %arg0, %c0_i32 : i32, i32
  }
  func.func @transform_3(%arg0: i32) -> (i32, i32) {
    %c0_i32 = arith.constant 0 : i32
    %c0_i32_0 = arith.constant 0 : i32
    %c0_i32_1 = arith.constant 0 : i32
    return %c0_i32, %c0_i32_0 : i32, i32
  }
  func.func @transform_4(%arg0: i32) -> (i32, i32) {
    %c0_i32 = arith.constant 0 : i32
    %c0_i32_0 = arith.constant 0 : i32
    %c0_i32_1 = arith.constant 0 : i32
    return %c0_i32, %c0_i32_0 : i32, i32
  }
  func.func @transform_5(%arg0: i32) -> (i32, i32) {
    %c0_i32 = arith.constant 0 : i32
    %c0_i32_0 = arith.constant 0 : i32
    %c0_i32_1 = arith.constant 0 : i32
    return %c0_i32, %c0_i32_0 : i32, i32
  }
  func.func @transform_6(%arg0: i32) -> (i32, i32) {
    %c0_i32 = arith.constant 0 : i32
    %c0_i32_0 = arith.constant 0 : i32
    %c0_i32_1 = arith.constant 0 : i32
    return %c0_i32, %c0_i32_0 : i32, i32
  }
  func.func @transform_7(%arg0: i32) -> (i32, i32) {
    %c0_i32 = arith.constant 0 : i32
    %c0_i32_0 = arith.constant 0 : i32
    %c0_i32_1 = arith.constant 0 : i32
    return %c0_i32, %c0_i32_0 : i32, i32
  }
  func.func @transform_8(%arg0: i32) -> (i32, i32) {
    %c0_i32 = arith.constant 0 : i32
    %c0_i32_0 = arith.constant 0 : i32
    %c0_i32_1 = arith.constant 0 : i32
    return %c0_i32, %c0_i32_0 : i32, i32
  }
  func.func @transform_9(%arg0: i32) -> (i32, i32) {
    %c0_i32 = arith.constant 0 : i32
    %c0_i32_0 = arith.constant 0 : i32
    %c0_i32_1 = arith.constant 0 : i32
    return %c0_i32, %c0_i32_0 : i32, i32
  }
  func.func @transform_10(%arg0: i32) -> (i32, i32) {
    %c0_i32 = arith.constant 0 : i32
    %c0_i32_0 = arith.constant 0 : i32
    %c0_i32_1 = arith.constant 0 : i32
    return %c0_i32, %c0_i32_0 : i32, i32
  }
  func.func @transform_11(%arg0: i32) -> (i32, i32) {
    %c0_i32 = arith.constant 0 : i32
    %c0_i32_0 = arith.constant 0 : i32
    %c0_i32_1 = arith.constant 0 : i32
    return %c0_i32, %c0_i32_0 : i32, i32
  }
  func.func @transform_12(%arg0: i32) -> (i32, i32) {
    %c0_i32 = arith.constant 0 : i32
    %c0_i32_0 = arith.constant 0 : i32
    %c0_i32_1 = arith.constant 0 : i32
    return %c0_i32, %c0_i32_0 : i32, i32
  }
  func.func @transform_13(%arg0: i32) -> (i32, i32) {
    %c0_i32 = arith.constant 0 : i32
    %c0_i32_0 = arith.constant 0 : i32
    %c0_i32_1 = arith.constant 0 : i32
    return %c0_i32, %c0_i32_0 : i32, i32
  }
  func.func @transform_14(%arg0: i32) -> (i32, i32) {
    %c0_i32 = arith.constant 0 : i32
    %c0_i32_0 = arith.constant 0 : i32
    %c0_i32_1 = arith.constant 0 : i32
    return %c0_i32, %c0_i32_0 : i32, i32
  }
  func.func @transform_15(%arg0: i32) -> (i32, i32) {
    %c0_i32 = arith.constant 0 : i32
    %c0_i32_0 = arith.constant 0 : i32
    %c0_i32_1 = arith.constant 0 : i32
    return %c0_i32, %c0_i32_0 : i32, i32
  }
  func.func @transform_16(%arg0: i32) -> (i32, i32) {
    %c0_i32 = arith.constant 0 : i32
    %c0_i32_0 = arith.constant 0 : i32
    %c0_i32_1 = arith.constant 0 : i32
    return %c0_i32, %c0_i32_0 : i32, i32
  }
  func.func @transform_17(%arg0: i32) -> (i32, i32) {
    %c0_i32 = arith.constant 0 : i32
    %c0_i32_0 = arith.constant 0 : i32
    %c0_i32_1 = arith.constant 0 : i32
    return %c0_i32, %c0_i32_0 : i32, i32
  }
  func.func @transform_18(%arg0: i32) -> (i32, i32) {
    %c0_i32 = arith.constant 0 : i32
    %c0_i32_0 = arith.constant 0 : i32
    %c0_i32_1 = arith.constant 0 : i32
    return %c0_i32, %c0_i32_0 : i32, i32
  }
  func.func @transform_19(%arg0: i32) -> (i32, i32) {
    %c0_i32 = arith.constant 0 : i32
    %c0_i32_0 = arith.constant 0 : i32
    %c0_i32_1 = arith.constant 0 : i32
    return %c0_i32, %c0_i32_0 : i32, i32
  }
  func.func @transform_20(%arg0: i32) -> (i32, i32) {
    %c0_i32 = arith.constant 0 : i32
    %c0_i32_0 = arith.constant 0 : i32
    return %arg0, %c0_i32 : i32, i32
  }
}

</mosaic_0001>

<llo_original>
// kernel: tpu_custom_call.1
$region0: #{tpu_custom_call.1}
  #allocation0 [shape = 'u32[]', space=smem, size = 0x4, offset = 0x4, fixed_abs, tag = 'smem constant byte address 0x4 - core index']
  #allocation1 [shape = 'u32[144,128]{1,0:T(1,128)}', space=vmem, size = 0x12000, scoped, tag = 'internal scratch']
  %s0 = inlined_call_operand.hbm [shape: f32[4,16,32], index: 0, kind: input, shape index: {}]
  %s1 = inlined_call_operand.hbm [shape: f32[4,16], index: 1, kind: input, shape index: {}]
  %s2 = inlined_call_operand.hbm [shape: f32[4,9], index: 2, kind: input, shape index: {}]
  %s3 = inlined_call_operand.hbm [shape: f32[320,1792], index: 3, kind: input, shape index: {}]
  %s4 = inlined_call_operand.hbm [shape: f32[16,1792], index: 4, kind: input, shape index: {}]
  %s5 = inlined_call_operand.hbm [shape: f32[5,1792], index: 5, kind: input, shape index: {}]
  %s6 = inlined_call_operand.vmem [shape: f32[1792,64], index: 6, kind: input, shape index: {}]
  %s7 = inlined_call_operand.hbm [shape: f32[9,32], index: 7, kind: input, shape index: {}]
  %s8 = inlined_call_operand.hbm [shape: f32[32,64], index: 8, kind: input, shape index: {}]
  %s9 = inlined_call_operand.hbm [shape: f32[32,64], index: 9, kind: input, shape index: {}]
  %s10 = inlined_call_operand.hbm [shape: f32[1,64], index: 10, kind: input, shape index: {}]
  %s11 = inlined_call_operand.vmem [shape: f32[64,5], index: 11, kind: input, shape index: {}]
  %s12 = inlined_call_operand.hbm [shape: f32[1,5], index: 12, kind: input, shape index: {}]
  %s13 = inlined_call_operand.hbm [shape: f32[1,64], index: 13, kind: input, shape index: {}]
  %s14 = inlined_call_operand.hbm [shape: f32[1,64], index: 14, kind: input, shape index: {}]
  %s15 = inlined_call_operand.hbm [shape: f32[1,64], index: 15, kind: input, shape index: {}]
  %s16 = inlined_call_operand.hbm [shape: f32[1,64], index: 16, kind: input, shape index: {}]
  %s17 = inlined_call_operand.hbm [shape: f32[1,64], index: 17, kind: input, shape index: {}]
  %s18 = inlined_call_operand.hbm [shape: f32[64,128], index: 18, kind: input, shape index: {}]
  %s19 = inlined_call_operand.hbm [shape: f32[1,128], index: 19, kind: input, shape index: {}]
  %s20 = inlined_call_operand.hbm [shape: f32[4,128], index: 20, kind: output, shape index: {}]
  %s21 = sld [smem:[#allocation0]]
  $region162: #{tpu_custom_call.1} parent=0
    _
  %s23 = ssub.s32 1, %s21
  %s24 = scalar_select 0, %s23, %s21
  $region1: #{tpu_custom_call.1} parent=0
    #allocation2 [shape = 'u8[32768]{0}', space=vmem, size = 0x8000, scoped, tag = 'input window, operand 0, single buffered']
    #allocation3 [shape = 's32[1]{0}', space=sflag, size = 0x4, scoped, tag = 'scoped memory for tpu_custom_call.1']
    #allocation4 [shape = 's32[1]{0}', space=sflag, size = 0x4, scoped, tag = 'scoped memory for tpu_custom_call.1']
    #allocation5 [shape = 'u8[2048]{0}', space=vmem, size = 0x800, scoped, tag = 'input window, operand 1, single buffered']
    #allocation6 [shape = 's32[1]{0}', space=sflag, size = 0x4, scoped, tag = 'scoped memory for tpu_custom_call.1']
    #allocation7 [shape = 'u8[2048]{0}', space=vmem, size = 0x800, scoped, tag = 'input window, operand 2, single buffered']
    #allocation8 [shape = 'u8[2293760]{0}', space=vmem, size = 0x230000, scoped, tag = 'input window, operand 3, single buffered']
    #allocation9 [shape = 's32[1]{0}', space=sflag, size = 0x4, scoped, tag = 'scoped memory for tpu_custom_call.1']
    #allocation10 [shape = 'u8[114688]{0}', space=vmem, size = 0x1c000, scoped, tag = 'input window, operand 4, single buffered']
    #allocation11 [shape = 'u8[57344]{0}', space=vmem, size = 0xe000, scoped, tag = 'input window, operand 5, single buffered']
    #allocation12 [shape = 's32[1]{0}', space=sflag, size = 0x4, scoped, tag = 'scoped memory for tpu_custom_call.1']
    #allocation13 [shape = 'u8[8192]{0}', space=vmem, size = 0x2000, scoped, tag = 'input window, operand 7, single buffered']
    #allocation14 [shape = 'u8[16384]{0}', space=vmem, size = 0x4000, scoped, tag = 'input window, operand 8, single buffered']
    #allocation15 [shape = 's32[1]{0}', space=sflag, size = 0x4, scoped, tag = 'scoped memory for tpu_custom_call.1']
    #allocation16 [shape = 'u8[16384]{0}', space=vmem, size = 0x4000, scoped, tag = 'input window, operand 9, single buffered']
    #allocation17 [shape = 'u8[512]{0}', space=vmem, size = 0x400, scoped, tag = 'input window, operand 10, single buffered']
    #allocation18 [shape = 's32[1]{0}', space=sflag, size = 0x4, scoped, tag = 'scoped memory for tpu_custom_call.1']
    #allocation19 [shape = 'u8[512]{0}', space=vmem, size = 0x400, scoped, tag = 'input window, operand 12, single buffered']
    #allocation20 [shape = 'u8[512]{0}', space=vmem, size = 0x400, scoped, tag = 'input window, operand 13, single buffered']
    #allocation21 [shape = 's32[1]{0}', space=sflag, size = 0x4, scoped, tag = 'scoped memory for tpu_custom_call.1']
    #allocation22 [shape = 'u8[512]{0}', space=vmem, size = 0x400, scoped, tag = 'input window, operand 14, single buffered']
    #allocation23 [shape = 'u8[512]{0}', space=vmem, size = 0x400, scoped, tag = 'input window, operand 15, single buffered']
    #allocation24 [shape = 's32[1]{0}', space=sflag, size = 0x4, scoped, tag = 'scoped memory for tpu_custom_call.1']
    #allocation25 [shape = 'u8[512]{0}', space=vmem, size = 0x400, scoped, tag = 'input window, operand 16, single buffered']
    #allocation26 [shape = 'u8[512]{0}', space=vmem, size = 0x400, scoped, tag = 'input window, operand 17, single buffered']
    #allocation27 [shape = 's32[1]{0}', space=sflag, size = 0x4, scoped, tag = 'scoped memory for tpu_custom_call.1']
    #allocation28 [shape = 'u8[32768]{0}', space=vmem, size = 0x8000, scoped, tag = 'input window, operand 18, single buffered']
    #allocation29 [shape = 'u8[512]{0}', space=vmem, size = 0x400, scoped, tag = 'input window, operand 19, single buffered']
    #allocation30 [shape = 's32[1]{0}', space=sflag, size = 0x4, scoped, tag = 'scoped memory for tpu_custom_call.1']
    #allocation31 [shape = 'u8[2048]{0}', space=vmem, size = 0x800, scoped, tag = 'output window, operand 0, single buffered']
    %25 = vsyncpa [#allocation3], 0
    %26 = vsyncpa [#allocation6], 0
    %27 = vsyncpa [#allocation9], 0
    %28 = vsyncpa [#allocation12], 0
    %29 = vsyncpa [#allocation15], 0
    %30 = vsyncpa [#allocation18], 0
    %31 = vsyncpa [#allocation21], 0
    %32 = vsyncpa [#allocation24], 0
    %33 = vsyncpa [#allocation27], 0
    %34 = vsyncpa [#allocation30], 0
    %35 = vsyncpa [#allocation4], 0
    // Predicated region
    $region2: #{tpu_custom_call.1} parent=1 // pred_check
      _
    $region3: #{tpu_custom_call.1} parent=1 // pred_check_branch
      %37 = sbr.rel (0) target = $region5
    $region4: #{tpu_custom_call.1} parent=1 // pred_region
      %s39 = ssub.s32 1024, 1024
      %40 = vsyncadd [#allocation3], %s39
      %s41 = sshll.u32 [#allocation2], 4
      %s42 = int_to_ptr.vmem [resolvable:$true] %s41
      %47 = dma.hbm_to_vmem [thread:$0]  %s0, 1024, %s42, [#allocation3], 128, 128, 8
    $region5: #{tpu_custom_call.1} parent=1 // pred_fallthru
      _
    // Predicated region
    $region6: #{tpu_custom_call.1} parent=1 // pred_check
      _
    $region7: #{tpu_custom_call.1} parent=1 // pred_check_branch
      %49 = sbr.rel (0) target = $region9
    $region8: #{tpu_custom_call.1} parent=1 // pred_region
      %s51 = ssub.s32 64, 64
      %52 = vsyncadd [#allocation6], %s51
      %s54 = sshll.u32 [#allocation5], 4
      %s55 = int_to_ptr.vmem [resolvable:$true] %s54
      %57 = dma.hbm_to_vmem [thread:$0]  %s1, 64, %s55, [#allocation6]
    $region9: #{tpu_custom_call.1} parent=1 // pred_fallthru
      _
    // Predicated region
    $region10: #{tpu_custom_call.1} parent=1 // pred_check
      _
    $region11: #{tpu_custom_call.1} parent=1 // pred_check_branch
      %59 = sbr.rel (0) target = $region13
    $region12: #{tpu_custom_call.1} parent=1 // pred_region
      %s61 = ssub.s32 64, 64
      %62 = vsyncadd [#allocation6], %s61
      %s64 = sshll.u32 [#allocation7], 4
      %s65 = int_to_ptr.vmem [resolvable:$true] %s64
      %67 = dma.hbm_to_vmem [thread:$0]  %s2, 64, %s65, [#allocation6]
    $region13: #{tpu_custom_call.1} parent=1 // pred_fallthru
      _
    // Predicated region
    $region14: #{tpu_custom_call.1} parent=1 // pred_check
      _
    $region15: #{tpu_custom_call.1} parent=1 // pred_check_branch
      %69 = sbr.rel (0) target = $region17
    $region16: #{tpu_custom_call.1} parent=1 // pred_region
      %s71 = ssub.s32 71680, 71680
      %72 = vsyncadd [#allocation9], %s71
      %s73 = sshll.u32 [#allocation8], 4
      %s74 = int_to_ptr.vmem [resolvable:$true] %s73
      %79 = dma.hbm_to_vmem [thread:$0]  %s3, 71680, %s74, [#allocation9], 1792, 1792, 112
    $region17: #{tpu_custom_call.1} parent=1 // pred_fallthru
      _
    // Predicated region
    $region18: #{tpu_custom_call.1} parent=1 // pred_check
      _
    $region19: #{tpu_custom_call.1} parent=1 // pred_check_branch
      %81 = sbr.rel (0) target = $region21
    $region20: #{tpu_custom_call.1} parent=1 // pred_region
      %s83 = ssub.s32 3584, 3584
      %84 = vsyncadd [#allocation9], %s83
      %s85 = sshll.u32 [#allocation10], 4
      %s86 = int_to_ptr.vmem [resolvable:$true] %s85
      %91 = dma.hbm_to_vmem [thread:$0]  %s4, 3584, %s86, [#allocation9], 1792, 1792, 112
    $region21: #{tpu_custom_call.1} parent=1 // pred_fallthru
      _
    // Predicated region
    $region22: #{tpu_custom_call.1} parent=1 // pred_check
      _
    $region23: #{tpu_custom_call.1} parent=1 // pred_check_branch
      %93 = sbr.rel (0) target = $region25
    $region24: #{tpu_custom_call.1} parent=1 // pred_region
      %s95 = ssub.s32 1792, 1792
      %96 = vsyncadd [#allocation12], %s95
      %s98 = sshll.u32 [#allocation11], 4
      %s99 = int_to_ptr.vmem [resolvable:$true] %s98
      %101 = dma.hbm_to_vmem [thread:$0]  %s5, 1792, %s99, [#allocation12]
    $region25: #{tpu_custom_call.1} parent=1 // pred_fallthru
      _
    // Predicated region
    $region26: #{tpu_custom_call.1} parent=1 // pred_check
      _
    $region27: #{tpu_custom_call.1} parent=1 // pred_check_branch
      %103 = sbr.rel (0) target = $region29
    $region28: #{tpu_custom_call.1} parent=1 // pred_region
      _
    $region29: #{tpu_custom_call.1} parent=1 // pred_fallthru
      _
    // Predicated region
    $region30: #{tpu_custom_call.1} parent=1 // pred_check
      _
    $region31: #{tpu_custom_call.1} parent=1 // pred_check_branch
      %105 = sbr.rel (0) target = $region33
    $region32: #{tpu_custom_call.1} parent=1 // pred_region
      %s107 = ssub.s32 256, 256
      %108 = vsyncadd [#allocation12], %s107
      %s109 = sshll.u32 [#allocation13], 4
      %s110 = int_to_ptr.vmem [resolvable:$true] %s109
      %115 = dma.hbm_to_vmem [thread:$0]  %s7, 256, %s110, [#allocation12], 128, 128, 8
    $region33: #{tpu_custom_call.1} parent=1 // pred_fallthru
      _
    // Predicated region
    $region34: #{tpu_custom_call.1} parent=1 // pred_check
      _
    $region35: #{tpu_custom_call.1} parent=1 // pred_check_branch
      %117 = sbr.rel (0) target = $region37
    $region36: #{tpu_custom_call.1} parent=1 // pred_region
      %s119 = ssub.s32 512, 512
      %120 = vsyncadd [#allocation15], %s119
      %s121 = sshll.u32 [#allocation14], 4
      %s122 = int_to_ptr.vmem [resolvable:$true] %s121
      %127 = dma.hbm_to_vmem [thread:$0]  %s8, 512, %s122, [#allocation15], 128, 128, 8
    $region37: #{tpu_custom_call.1} parent=1 // pred_fallthru
      _
    // Predicated region
    $region38: #{tpu_custom_call.1} parent=1 // pred_check
      _
    $region39: #{tpu_custom_call.1} parent=1 // pred_check_branch
      %129 = sbr.rel (0) target = $region41
    $region40: #{tpu_custom_call.1} parent=1 // pred_region
      %s131 = ssub.s32 512, 512
      %132 = vsyncadd [#allocation15], %s131
      %s133 = sshll.u32 [#allocation16], 4
      %s134 = int_to_ptr.vmem [resolvable:$true] %s133
      %139 = dma.hbm_to_vmem [thread:$0]  %s9, 512, %s134, [#allocation15], 128, 128, 8
    $region41: #{tpu_custom_call.1} parent=1 // pred_fallthru
      _
    // Predicated region
    $region42: #{tpu_custom_call.1} parent=1 // pred_check
      _
    $region43: #{tpu_custom_call.1} parent=1 // pred_check_branch
      %141 = sbr.rel (0) target = $region45
    $region44: #{tpu_custom_call.1} parent=1 // pred_region
      %s143 = ssub.s32 16, 16
      %144 = vsyncadd [#allocation18], %s143
      %s146 = sshll.u32 [#allocation17], 4
      %s147 = int_to_ptr.vmem [resolvable:$true] %s146
      %149 = dma.hbm_to_vmem [thread:$0]  %s10, 16, %s147, [#allocation18]
    $region45: #{tpu_custom_call.1} parent=1 // pred_fallthru
      _
    // Predicated region
    $region46: #{tpu_custom_call.1} parent=1 // pred_check
      _
    $region47: #{tpu_custom_call.1} parent=1 // pred_check_branch
      %151 = sbr.rel (0) target = $region49
    $region48: #{tpu_custom_call.1} parent=1 // pred_region
      _
    $region49: #{tpu_custom_call.1} parent=1 // pred_fallthru
      _
    // Predicated region
    $region50: #{tpu_custom_call.1} parent=1 // pred_check
      _
    $region51: #{tpu_custom_call.1} parent=1 // pred_check_branch
      %153 = sbr.rel (0) target = $region53
    $region52: #{tpu_custom_call.1} parent=1 // pred_region
      %s155 = ssub.s32 16, 16
      %156 = vsyncadd [#allocation18], %s155
      %s158 = sshll.u32 [#allocation19], 4
      %s159 = int_to_ptr.vmem [resolvable:$true] %s158
      %161 = dma.hbm_to_vmem [thread:$0]  %s12, 16, %s159, [#allocation18]
    $region53: #{tpu_custom_call.1} parent=1 // pred_fallthru
      _
    // Predicated region
    $region54: #{tpu_custom_call.1} parent=1 // pred_check
      _
    $region55: #{tpu_custom_call.1} parent=1 // pred_check_branch
      %163 = sbr.rel (0) target = $region57
    $region56: #{tpu_custom_call.1} parent=1 // pred_region
      %s165 = ssub.s32 16, 16
      %166 = vsyncadd [#allocation21], %s165
      %s168 = sshll.u32 [#allocation20], 4
      %s169 = int_to_ptr.vmem [resolvable:$true] %s168
      %171 = dma.hbm_to_vmem [thread:$0]  %s13, 16, %s169, [#allocation21]
    $region57: #{tpu_custom_call.1} parent=1 // pred_fallthru
      _
    // Predicated region
    $region58: #{tpu_custom_call.1} parent=1 // pred_check
      _
    $region59: #{tpu_custom_call.1} parent=1 // pred_check_branch
      %173 = sbr.rel (0) target = $region61
    $region60: #{tpu_custom_call.1} parent=1 // pred_region
      %s175 = ssub.s32 16, 16
      %176 = vsyncadd [#allocation21], %s175
      %s178 = sshll.u32 [#allocation22], 4
      %s179 = int_to_ptr.vmem [resolvable:$true] %s178
      %181 = dma.hbm_to_vmem [thread:$0]  %s14, 16, %s179, [#allocation21]
    $region61: #{tpu_custom_call.1} parent=1 // pred_fallthru
      _
    // Predicated region
    $region62: #{tpu_custom_call.1} parent=1 // pred_check
      _
    $region63: #{tpu_custom_call.1} parent=1 // pred_check_branch
      %183 = sbr.rel (0) target = $region65
    $region64: #{tpu_custom_call.1} parent=1 // pred_region
      %s185 = ssub.s32 16, 16
      %186 = vsyncadd [#allocation24], %s185
      %s188 = sshll.u32 [#allocation23], 4
      %s189 = int_to_ptr.vmem [resolvable:$true] %s188
      %191 = dma.hbm_to_vmem [thread:$0]  %s15, 16, %s189, [#allocation24]
    $region65: #{tpu_custom_call.1} parent=1 // pred_fallthru
      _
    // Predicated region
    $region66: #{tpu_custom_call.1} parent=1 // pred_check
      _
    $region67: #{tpu_custom_call.1} parent=1 // pred_check_branch
      %193 = sbr.rel (0) target = $region69
    $region68: #{tpu_custom_call.1} parent=1 // pred_region
      %s195 = ssub.s32 16, 16
      %196 = vsyncadd [#allocation24], %s195
      %s198 = sshll.u32 [#allocation25], 4
      %s199 = int_to_ptr.vmem [resolvable:$true] %s198
      %201 = dma.hbm_to_vmem [thread:$0]  %s16, 16, %s199, [#allocation24]
    $region69: #{tpu_custom_call.1} parent=1 // pred_fallthru
      _
    // Predicated region
    $region70: #{tpu_custom_call.1} parent=1 // pred_check
      _
    $region71: #{tpu_custom_call.1} parent=1 // pred_check_branch
      %203 = sbr.rel (0) target = $region73
    $region72: #{tpu_custom_call.1} parent=1 // pred_region
      %s205 = ssub.s32 16, 16
      %206 = vsyncadd [#allocation27], %s205
      %s208 = sshll.u32 [#allocation26], 4
      %s209 = int_to_ptr.vmem [resolvable:$true] %s208
      %211 = dma.hbm_to_vmem [thread:$0]  %s17, 16, %s209, [#allocation27]
    $region73: #{tpu_custom_call.1} parent=1 // pred_fallthru
      _
    // Predicated region
    $region74: #{tpu_custom_call.1} parent=1 // pred_check
      _
    $region75: #{tpu_custom_call.1} parent=1 // pred_check_branch
      %213 = sbr.rel (0) target = $region77
    $region76: #{tpu_custom_call.1} parent=1 // pred_region
      %s215 = ssub.s32 1024, 1024
      %216 = vsyncadd [#allocation27], %s215
      %s217 = sshll.u32 [#allocation28], 4
      %s218 = int_to_ptr.vmem [resolvable:$true] %s217
      %223 = dma.hbm_to_vmem [thread:$0]  %s18, 1024, %s218, [#allocation27], 128, 128, 8
    $region77: #{tpu_custom_call.1} parent=1 // pred_fallthru
      _
    // Predicated region
    $region78: #{tpu_custom_call.1} parent=1 // pred_check
      _
    $region79: #{tpu_custom_call.1} parent=1 // pred_check_branch
      %225 = sbr.rel (0) target = $region81
    $region80: #{tpu_custom_call.1} parent=1 // pred_region
      %s227 = ssub.s32 16, 16
      %228 = vsyncadd [#allocation30], %s227
      %s230 = sshll.u32 [#allocation29], 4
      %s231 = int_to_ptr.vmem [resolvable:$true] %s230
      %233 = dma.hbm_to_vmem [thread:$0]  %s19, 16, %s231, [#allocation30]
    $region81: #{tpu_custom_call.1} parent=1 // pred_fallthru
      _
    // Predicated region
    $region82: #{tpu_custom_call.1} parent=1 // pred_check
      _
    $region83: #{tpu_custom_call.1} parent=1 // pred_check_branch
      %235 = sbr.rel (0) target = $region85
    $region84: #{tpu_custom_call.1} parent=1 // pred_region
      %236 = dma.done [#allocation3], 1024
    $region85: #{tpu_custom_call.1} parent=1 // pred_fallthru
      _
    // Predicated region
    $region86: #{tpu_custom_call.1} parent=1 // pred_check
      _
    $region87: #{tpu_custom_call.1} parent=1 // pred_check_branch
      %238 = sbr.rel (0) target = $region89
    $region88: #{tpu_custom_call.1} parent=1 // pred_region
      %239 = dma.done [#allocation6], 64
    $region89: #{tpu_custom_call.1} parent=1 // pred_fallthru
      _
    // Predicated region
    $region90: #{tpu_custom_call.1} parent=1 // pred_check
      _
    $region91: #{tpu_custom_call.1} parent=1 // pred_check_branch
      %241 = sbr.rel (0) target = $region93
    $region92: #{tpu_custom_call.1} parent=1 // pred_region
      %242 = dma.done [#allocation6], 64
    $region93: #{tpu_custom_call.1} parent=1 // pred_fallthru
      _
    // Predicated region
    $region94: #{tpu_custom_call.1} parent=1 // pred_check
      _
    $region95: #{tpu_custom_call.1} parent=1 // pred_check_branch
      %244 = sbr.rel (0) target = $region97
    $region96: #{tpu_custom_call.1} parent=1 // pred_region
      %245 = dma.done [#allocation9], 71680
    $region97: #{tpu_custom_call.1} parent=1 // pred_fallthru
      _
    // Predicated region
    $region98: #{tpu_custom_call.1} parent=1 // pred_check
      _
    $region99: #{tpu_custom_call.1} parent=1 // pred_check_branch
      %247 = sbr.rel (0) target = $region101
    $region100: #{tpu_custom_call.1} parent=1 // pred_region
      %248 = dma.done [#allocation9], 3584
    $region101: #{tpu_custom_call.1} parent=1 // pred_fallthru
      _
    // Predicated region
    $region102: #{tpu_custom_call.1} parent=1 // pred_check
      _
    $region103: #{tpu_custom_call.1} parent=1 // pred_check_branch
      %250 = sbr.rel (0) target = $region105
    $region104: #{tpu_custom_call.1} parent=1 // pred_region
      %251 = dma.done [#allocation12], 1792
    $region105: #{tpu_custom_call.1} parent=1 // pred_fallthru
      _
    // Predicated region
    $region106: #{tpu_custom_call.1} parent=1 // pred_check
      _
    $region107: #{tpu_custom_call.1} parent=1 // pred_check_branch
      %253 = sbr.rel (0) target = $region109
    $region108: #{tpu_custom_call.1} parent=1 // pred_region
      %254 = dma.done [#allocation12], 256
    $region109: #{tpu_custom_call.1} parent=1 // pred_fallthru
      _
    // Predicated region
    $region110: #{tpu_custom_call.1} parent=1 // pred_check
      _
    $region111: #{tpu_custom_call.1} parent=1 // pred_check_branch
      %256 = sbr.rel (0) target = $region113
    $region112: #{tpu_custom_call.1} parent=1 // pred_region
      %257 = dma.done [#allocation15], 512
    $region113: #{tpu_custom_call.1} parent=1 // pred_fallthru
      _
    // Predicated region
    $region114: #{tpu_custom_call.1} parent=1 // pred_check
      _
    $region115: #{tpu_custom_call.1} parent=1 // pred_check_branch
      %259 = sbr.rel (0) target = $region117
    $region116: #{tpu_custom_call.1} parent=1 // pred_region
      %260 = dma.done [#allocation15], 512
    $region117: #{tpu_custom_call.1} parent=1 // pred_fallthru
      _
    // Predicated region
    $region118: #{tpu_custom_call.1} parent=1 // pred_check
      _
    $region119: #{tpu_custom_call.1} parent=1 // pred_check_branch
      %262 = sbr.rel (0) target = $region121
    $region120: #{tpu_custom_call.1} parent=1 // pred_region
      %263 = dma.done [#allocation18], 16
    $region121: #{tpu_custom_call.1} parent=1 // pred_fallthru
      _
    // Predicated region
    $region122: #{tpu_custom_call.1} parent=1 // pred_check
      _
    $region123: #{tpu_custom_call.1} parent=1 // pred_check_branch
      %265 = sbr.rel (0) target = $region125
    $region124: #{tpu_custom_call.1} parent=1 // pred_region
      %266 = dma.done [#allocation18], 16
    $region125: #{tpu_custom_call.1} parent=1 // pred_fallthru
      _
    // Predicated region
    $region126: #{tpu_custom_call.1} parent=1 // pred_check
      _
    $region127: #{tpu_custom_call.1} parent=1 // pred_check_branch
      %268 = sbr.rel (0) target = $region129
    $region128: #{tpu_custom_call.1} parent=1 // pred_region
      %269 = dma.done [#allocation21], 16
    $region129: #{tpu_custom_call.1} parent=1 // pred_fallthru
      _
    // Predicated region
    $region130: #{tpu_custom_call.1} parent=1 // pred_check
      _
    $region131: #{tpu_custom_call.1} parent=1 // pred_check_branch
      %271 = sbr.rel (0) target = $region133
    $region132: #{tpu_custom_call.1} parent=1 // pred_region
      %272 = dma.done [#allocation21], 16
    $region133: #{tpu_custom_call.1} parent=1 // pred_fallthru
      _
    // Predicated region
    $region134: #{tpu_custom_call.1} parent=1 // pred_check
      _
    $region135: #{tpu_custom_call.1} parent=1 // pred_check_branch
      %274 = sbr.rel (0) target = $region137
    $region136: #{tpu_custom_call.1} parent=1 // pred_region
      %275 = dma.done [#allocation24], 16
    $region137: #{tpu_custom_call.1} parent=1 // pred_fallthru
      _
    // Predicated region
    $region138: #{tpu_custom_call.1} parent=1 // pred_check
      _
    $region139: #{tpu_custom_call.1} parent=1 // pred_check_branch
      %277 = sbr.rel (0) target = $region141
    $region140: #{tpu_custom_call.1} parent=1 // pred_region
      %278 = dma.done [#allocation24], 16
    $region141: #{tpu_custom_call.1} parent=1 // pred_fallthru
      _
    // Predicated region
    $region142: #{tpu_custom_call.1} parent=1 // pred_check
      _
    $region143: #{tpu_custom_call.1} parent=1 // pred_check_branch
      %280 = sbr.rel (0) target = $region145
    $region144: #{tpu_custom_call.1} parent=1 // pred_region
      %281 = dma.done [#allocation27], 16
    $region145: #{tpu_custom_call.1} parent=1 // pred_fallthru
      _
    // Predicated region
    $region146: #{tpu_custom_call.1} parent=1 // pred_check
      _
    $region147: #{tpu_custom_call.1} parent=1 // pred_check_branch
      %283 = sbr.rel (0) target = $region149
    $region148: #{tpu_custom_call.1} parent=1 // pred_region
      %284 = dma.done [#allocation27], 1024
    $region149: #{tpu_custom_call.1} parent=1 // pred_fallthru
      _
    // Predicated region
    $region150: #{tpu_custom_call.1} parent=1 // pred_check
      _
    $region151: #{tpu_custom_call.1} parent=1 // pred_check_branch
      %286 = sbr.rel (0) target = $region153
    $region152: #{tpu_custom_call.1} parent=1 // pred_region
      %287 = dma.done [#allocation30], 16
    $region153: #{tpu_custom_call.1} parent=1 // pred_fallthru
      _
    %v288 = vld [vmem:[#allocation2] sm:$0xff]
    %v289 = vld [vmem:[#allocation2 + $0x8] sm:$0xff]
    %v290 = vld [vmem:[#allocation2 + $0x10] sm:$0xff]
    %v291 = vld [vmem:[#allocation2 + $0x18] sm:$0xff]
    %v292 = vld [vmem:[#allocation2 + $0x20] sm:$0xff]
    %v293 = vld [vmem:[#allocation2 + $0x28] sm:$0xff]
    %v294 = vld [vmem:[#allocation2 + $0x30] sm:$0xff]
    %v295 = vld [vmem:[#allocation2 + $0x38] sm:$0xff]
    %vm305 = vcmask 1046528
    %v306 = vrot.slane %v288, 1
    %v307 = vrot.slane %v289, 1
    %v308 = vsel %vm305, %v306, %v307
    %v309 = vrot.slane 0.0, 1
    %v310 = vsel %vm305, %v307, %v309
    %v311 = vrot.slane %v290, 1
    %v312 = vrot.slane %v291, 1
    %v313 = vsel %vm305, %v311, %v312
    %v314 = vsel %vm305, %v312, %v309
    %v315 = vrot.slane %v292, 1
    %v316 = vrot.slane %v293, 1
    %v317 = vsel %vm305, %v315, %v316
    %v318 = vsel %vm305, %v316, %v309
    %v319 = vrot.slane %v294, 1
    %v320 = vrot.slane %v295, 1
    %v321 = vsel %vm305, %v319, %v320
    %v322 = vsel %vm305, %v320, %v309
    %323 = vrot.lane.b32.xlu0 %v308, 32
    %v324 = vpop.permute.xlu0 %323
    %325 = vrot.lane.b32.xlu0 %v310, 32
    %v326 = vpop.permute.xlu0 %325
    %327 = vrot.lane.b32.xlu0 %v313, 32
    %v328 = vpop.permute.xlu0 %327
    %329 = vrot.lane.b32.xlu0 %v314, 32
    %v330 = vpop.permute.xlu0 %329
    %331 = vrot.lane.b32.xlu0 %v317, 32
    %v332 = vpop.permute.xlu0 %331
    %333 = vrot.lane.b32.xlu0 %v318, 32
    %v334 = vpop.permute.xlu0 %333
    %335 = vrot.lane.b32.xlu0 %v321, 32
    %v336 = vpop.permute.xlu0 %335
    %337 = vrot.lane.b32.xlu0 %v322, 32
    %v338 = vpop.permute.xlu0 %337
    %vm347 = vcmask 1045504
    %v348 = vrot.slane %v288, 2
    %v349 = vrot.slane %v289, 2
    %v350 = vsel %vm347, %v348, %v349
    %v351 = vrot.slane 0.0, 2
    %v352 = vsel %vm347, %v349, %v351
    %v353 = vrot.slane %v290, 2
    %v354 = vrot.slane %v291, 2
    %v355 = vsel %vm347, %v353, %v354
    %v356 = vsel %vm347, %v354, %v351
    %v357 = vrot.slane %v292, 2
    %v358 = vrot.slane %v293, 2
    %v359 = vsel %vm347, %v357, %v358
    %v360 = vsel %vm347, %v358, %v351
    %v361 = vrot.slane %v294, 2
    %v362 = vrot.slane %v295, 2
    %v363 = vsel %vm347, %v361, %v362
    %v364 = vsel %vm347, %v362, %v351
    %365 = vrot.lane.b32.xlu0 %v350, 64
    %v366 = vpop.permute.xlu0 %365
    %367 = vrot.lane.b32.xlu0 %v352, 64
    %v368 = vpop.permute.xlu0 %367
    %369 = vrot.lane.b32.xlu0 %v355, 64
    %v370 = vpop.permute.xlu0 %369
    %371 = vrot.lane.b32.xlu0 %v356, 64
    %v372 = vpop.permute.xlu0 %371
    %373 = vrot.lane.b32.xlu0 %v359, 64
    %v374 = vpop.permute.xlu0 %373
    %375 = vrot.lane.b32.xlu0 %v360, 64
    %v376 = vpop.permute.xlu0 %375
    %377 = vrot.lane.b32.xlu0 %v363, 64
    %v378 = vpop.permute.xlu0 %377
    %379 = vrot.lane.b32.xlu0 %v364, 64
    %v380 = vpop.permute.xlu0 %379
    %vm389 = vcmask 1044480
    %v390 = vrot.slane %v288, 3
    %v391 = vrot.slane %v289, 3
    %v392 = vsel %vm389, %v390, %v391
    %v393 = vrot.slane 0.0, 3
    %v394 = vsel %vm389, %v391, %v393
    %v395 = vrot.slane %v290, 3
    %v396 = vrot.slane %v291, 3
    %v397 = vsel %vm389, %v395, %v396
    %v398 = vsel %vm389, %v396, %v393
    %v399 = vrot.slane %v292, 3
    %v400 = vrot.slane %v293, 3
    %v401 = vsel %vm389, %v399, %v400
    %v402 = vsel %vm389, %v400, %v393
    %v403 = vrot.slane %v294, 3
    %v404 = vrot.slane %v295, 3
    %v405 = vsel %vm389, %v403, %v404
    %v406 = vsel %vm389, %v404, %v393
    %407 = vrot.lane.b32.xlu0 %v392, 96
    %v408 = vpop.permute.xlu0 %407
    %409 = vrot.lane.b32.xlu0 %v394, 96
    %v410 = vpop.permute.xlu0 %409
    %411 = vrot.lane.b32.xlu0 %v397, 96
    %v412 = vpop.permute.xlu0 %411
    %413 = vrot.lane.b32.xlu0 %v398, 96
    %v414 = vpop.permute.xlu0 %413
    %415 = vrot.lane.b32.xlu0 %v401, 96
    %v416 = vpop.permute.xlu0 %415
    %417 = vrot.lane.b32.xlu0 %v402, 96
    %v418 = vpop.permute.xlu0 %417
    %419 = vrot.lane.b32.xlu0 %v405, 96
    %v420 = vpop.permute.xlu0 %419
    %421 = vrot.lane.b32.xlu0 %v406, 96
    %v422 = vpop.permute.xlu0 %421
    %vm431 = vcmask 1043456
    %v432 = vrot.slane %v288, 4
    %v433 = vrot.slane %v289, 4
    %v434 = vsel %vm431, %v432, %v433
    %v435 = vrot.slane 0.0, 4
    %v436 = vsel %vm431, %v433, %v435
    %v437 = vrot.slane %v290, 4
    %v438 = vrot.slane %v291, 4
    %v439 = vsel %vm431, %v437, %v438
    %v440 = vsel %vm431, %v438, %v435
    %v441 = vrot.slane %v292, 4
    %v442 = vrot.slane %v293, 4
    %v443 = vsel %vm431, %v441, %v442
    %v444 = vsel %vm431, %v442, %v435
    %v445 = vrot.slane %v294, 4
    %v446 = vrot.slane %v295, 4
    %v447 = vsel %vm431, %v445, %v446
    %v448 = vsel %vm431, %v446, %v435
    %vm457 = vcmask 1042432
    %v458 = vrot.slane %v288, 5
    %v459 = vrot.slane %v289, 5
    %v460 = vsel %vm457, %v458, %v459
    %v461 = vrot.slane 0.0, 5
    %v462 = vsel %vm457, %v459, %v461
    %v463 = vrot.slane %v290, 5
    %v464 = vrot.slane %v291, 5
    %v465 = vsel %vm457, %v463, %v464
    %v466 = vsel %vm457, %v464, %v461
    %v467 = vrot.slane %v292, 5
    %v468 = vrot.slane %v293, 5
    %v469 = vsel %vm457, %v467, %v468
    %v470 = vsel %vm457, %v468, %v461
    %v471 = vrot.slane %v294, 5
    %v472 = vrot.slane %v295, 5
    %v473 = vsel %vm457, %v471, %v472
    %v474 = vsel %vm457, %v472, %v461
    %475 = vrot.lane.b32.xlu0 %v460, 32
    %v476 = vpop.permute.xlu0 %475
    %477 = vrot.lane.b32.xlu0 %v462, 32
    %v478 = vpop.permute.xlu0 %477
    %479 = vrot.lane.b32.xlu0 %v465, 32
    %v480 = vpop.permute.xlu0 %479
    %481 = vrot.lane.b32.xlu0 %v466, 32
    %v482 = vpop.permute.xlu0 %481
    %483 = vrot.lane.b32.xlu0 %v469, 32
    %v484 = vpop.permute.xlu0 %483
    %485 = vrot.lane.b32.xlu0 %v470, 32
    %v486 = vpop.permute.xlu0 %485
    %487 = vrot.lane.b32.xlu0 %v473, 32
    %v488 = vpop.permute.xlu0 %487
    %489 = vrot.lane.b32.xlu0 %v474, 32
    %v490 = vpop.permute.xlu0 %489
    %vm499 = vcmask 1041408
    %v500 = vrot.slane %v288, 6
    %v501 = vrot.slane %v289, 6
    %v502 = vsel %vm499, %v500, %v501
    %v503 = vrot.slane 0.0, 6
    %v504 = vsel %vm499, %v501, %v503
    %v505 = vrot.slane %v290, 6
    %v506 = vrot.slane %v291, 6
    %v507 = vsel %vm499, %v505, %v506
    %v508 = vsel %vm499, %v506, %v503
    %v509 = vrot.slane %v292, 6
    %v510 = vrot.slane %v293, 6
    %v511 = vsel %vm499, %v509, %v510
    %v512 = vsel %vm499, %v510, %v503
    %v513 = vrot.slane %v294, 6
    %v514 = vrot.slane %v295, 6
    %v515 = vsel %vm499, %v513, %v514
    %v516 = vsel %vm499, %v514, %v503
    %517 = vrot.lane.b32.xlu0 %v502, 64
    %v518 = vpop.permute.xlu0 %517
    %519 = vrot.lane.b32.xlu0 %v504, 64
    %v520 = vpop.permute.xlu0 %519
    %521 = vrot.lane.b32.xlu0 %v507, 64
    %v522 = vpop.permute.xlu0 %521
    %523 = vrot.lane.b32.xlu0 %v508, 64
    %v524 = vpop.permute.xlu0 %523
    %525 = vrot.lane.b32.xlu0 %v511, 64
    %v526 = vpop.permute.xlu0 %525
    %527 = vrot.lane.b32.xlu0 %v512, 64
    %v528 = vpop.permute.xlu0 %527
    %529 = vrot.lane.b32.xlu0 %v515, 64
    %v530 = vpop.permute.xlu0 %529
    %531 = vrot.lane.b32.xlu0 %v516, 64
    %v532 = vpop.permute.xlu0 %531
    %vm541 = vcmask 1040384
    %v542 = vrot.slane %v288, 7
    %v543 = vrot.slane %v289, 7
    %v544 = vsel %vm541, %v542, %v543
    %v545 = vrot.slane 0.0, 7
    %v546 = vsel %vm541, %v543, %v545
    %v547 = vrot.slane %v290, 7
    %v548 = vrot.slane %v291, 7
    %v549 = vsel %vm541, %v547, %v548
    %v550 = vsel %vm541, %v548, %v545
    %v551 = vrot.slane %v292, 7
    %v552 = vrot.slane %v293, 7
    %v553 = vsel %vm541, %v551, %v552
    %v554 = vsel %vm541, %v552, %v545
    %v555 = vrot.slane %v294, 7
    %v556 = vrot.slane %v295, 7
    %v557 = vsel %vm541, %v555, %v556
    %v558 = vsel %vm541, %v556, %v545
    %559 = vrot.lane.b32.xlu0 %v544, 96
    %v560 = vpop.permute.xlu0 %559
    %561 = vrot.lane.b32.xlu0 %v546, 96
    %v562 = vpop.permute.xlu0 %561
    %563 = vrot.lane.b32.xlu0 %v549, 96
    %v564 = vpop.permute.xlu0 %563
    %565 = vrot.lane.b32.xlu0 %v550, 96
    %v566 = vpop.permute.xlu0 %565
    %567 = vrot.lane.b32.xlu0 %v553, 96
    %v568 = vpop.permute.xlu0 %567
    %569 = vrot.lane.b32.xlu0 %v554, 96
    %v570 = vpop.permute.xlu0 %569
    %571 = vrot.lane.b32.xlu0 %v557, 96
    %v572 = vpop.permute.xlu0 %571
    %573 = vrot.lane.b32.xlu0 %v558, 96
    %v574 = vpop.permute.xlu0 %573
    %v583 = vsel %vm305, %v309, %v309
    %584 = vrot.lane.b32.xlu0 %v583, 32
    %v585 = vpop.permute.xlu0 %584
    %vm587 = vcmask 261120
    %v588 = vsel %vm587, %v288, %v324
    %v589 = vsel %vm587, %v289, %v326
    %v590 = vsel %vm587, %v290, %v328
    %v591 = vsel %vm587, %v291, %v330
    %v592 = vsel %vm587, %v292, %v332
    %v593 = vsel %vm587, %v293, %v334
    %v594 = vsel %vm587, %v294, %v336
    %v595 = vsel %vm587, %v295, %v338
    %vm596 = vcmask 523264
    %v597 = vsel %vm596, %v588, %v366
    %v598 = vsel %vm596, %v589, %v368
    %v599 = vsel %vm596, %v590, %v370
    %v600 = vsel %vm596, %v591, %v372
    %v601 = vsel %vm596, %v592, %v374
    %v602 = vsel %vm596, %v593, %v376
    %v603 = vsel %vm596, %v594, %v378
    %v604 = vsel %vm596, %v595, %v380
    %vm605 = vcmask 785408
    %v606 = vsel %vm605, %v597, %v408
    %v607 = vsel %vm605, %v598, %v410
    %v608 = vsel %vm605, %v599, %v412
    %v609 = vsel %vm605, %v600, %v414
    %v610 = vsel %vm605, %v601, %v416
    %v611 = vsel %vm605, %v602, %v418
    %v612 = vsel %vm605, %v603, %v420
    %v613 = vsel %vm605, %v604, %v422
    %v614 = vsel %vm587, %v434, %v476
    %v615 = vsel %vm587, %v436, %v478
    %v616 = vsel %vm587, %v439, %v480
    %v617 = vsel %vm587, %v440, %v482
    %v618 = vsel %vm587, %v443, %v484
    %v619 = vsel %vm587, %v444, %v486
    %v620 = vsel %vm587, %v447, %v488
    %v621 = vsel %vm587, %v448, %v490
    %v622 = vsel %vm596, %v614, %v518
    %v623 = vsel %vm596, %v615, %v520
    %v624 = vsel %vm596, %v616, %v522
    %v625 = vsel %vm596, %v617, %v524
    %v626 = vsel %vm596, %v618, %v526
    %v627 = vsel %vm596, %v619, %v528
    %v628 = vsel %vm596, %v620, %v530
    %v629 = vsel %vm596, %v621, %v532
    %v630 = vsel %vm605, %v622, %v560
    %v631 = vsel %vm605, %v623, %v562
    %v632 = vsel %vm605, %v624, %v564
    %v633 = vsel %vm605, %v625, %v566
    %v634 = vsel %vm605, %v626, %v568
    %v635 = vsel %vm605, %v627, %v570
    %v636 = vsel %vm605, %v628, %v572
    %v637 = vsel %vm605, %v629, %v574
    %v638 = vsel %vm587, 0.0, %v585
    %v639 = vld [vmem:[#allocation8] sm:$0xff]
    %v640 = vld [vmem:[#allocation8 + $0x8] sm:$0xff]
    %v641 = vld [vmem:[#allocation8 + $0x10] sm:$0xff]
    %v642 = vld [vmem:[#allocation8 + $0x18] sm:$0xff]
    %v643 = vld [vmem:[#allocation8 + $0x20] sm:$0xff]
    %v644 = vld [vmem:[#allocation8 + $0x28] sm:$0xff]
    %v645 = vld [vmem:[#allocation8 + $0x30] sm:$0xff]
    %v646 = vld [vmem:[#allocation8 + $0x38] sm:$0xff]
    %v647 = vld [vmem:[#allocation8 + $0x40] sm:$0xff]
    %v648 = vld [vmem:[#allocation8 + $0x48] sm:$0xff]
    %v649 = vld [vmem:[#allocation8 + $0x50] sm:$0xff]
    %v650 = vld [vmem:[#allocation8 + $0x58] sm:$0xff]
    %v651 = vld [vmem:[#allocation8 + $0x60] sm:$0xff]
    %v652 = vld [vmem:[#allocation8 + $0x68] sm:$0xff]
    %v653 = vld [vmem:[#allocation8 + $0x70] sm:$0xff]
    %v654 = vld [vmem:[#allocation8 + $0x78] sm:$0xff]
    %v655 = vld [vmem:[#allocation8 + $0x80] sm:$0xff]
    %v656 = vld [vmem:[#allocation8 + $0x88] sm:$0xff]
    %v657 = vld [vmem:[#allocation8 + $0x90] sm:$0xff]
    %v658 = vld [vmem:[#allocation8 + $0x98] sm:$0xff]
    %v659 = vld [vmem:[#allocation8 + $0xa0] sm:$0xff]
    %v660 = vld [vmem:[#allocation8 + $0xa8] sm:$0xff]
    %v661 = vld [vmem:[#allocation8 + $0xb0] sm:$0xff]
    %v662 = vld [vmem:[#allocation8 + $0xb8] sm:$0xff]
    %v663 = vld [vmem:[#allocation8 + $0xc0] sm:$0xff]
    %v664 = vld [vmem:[#allocation8 + $0xc8] sm:$0xff]
    %v665 = vld [vmem:[#allocation8 + $0xd0] sm:$0xff]
    %v666 = vld [vmem:[#allocation8 + $0xd8] sm:$0xff]
    %v667 = vld [vmem:[#allocation8 + $0xe0] sm:$0xff]
    %v668 = vld [vmem:[#allocation8 + $0xe8] sm:$0xff]
    %v669 = vld [vmem:[#allocation8 + $0xf0] sm:$0xff]
    %v670 = vld [vmem:[#allocation8 + $0xf8] sm:$0xff]
    %v671 = vld [vmem:[#allocation8 + $0x100] sm:$0xff]
    %v672 = vld [vmem:[#allocation8 + $0x108] sm:$0xff]
    %v673 = vld [vmem:[#allocation8 + $0x110] sm:$0xff]
    %v674 = vld [vmem:[#allocation8 + $0x118] sm:$0xff]
    %v675 = vld [vmem:[#allocation8 + $0x120] sm:$0xff]
    %v676 = vld [vmem:[#allocation8 + $0x128] sm:$0xff]
    %v677 = vld [vmem:[#allocation8 + $0x130] sm:$0xff]
    %v678 = vld [vmem:[#allocation8 + $0x138] sm:$0xff]
    %v679 = vld [vmem:[#allocation8 + $0x140] sm:$0xff]
    %v680 = vld [vmem:[#allocation8 + $0x148] sm:$0xff]
    %v681 = vld [vmem:[#allocation8 + $0x150] sm:$0xff]
    %v682 = vld [vmem:[#allocation8 + $0x158] sm:$0xff]
    %v683 = vld [vmem:[#allocation8 + $0x160] sm:$0xff]
    %v684 = vld [vmem:[#allocation8 + $0x168] sm:$0xff]
    %v685 = vld [vmem:[#allocation8 + $0x170] sm:$0xff]
    %v686 = vld [vmem:[#allocation8 + $0x178] sm:$0xff]
    %v687 = vld [vmem:[#allocation8 + $0x180] sm:$0xff]
    %v688 = vld [vmem:[#allocation8 + $0x188] sm:$0xff]
    %v689 = vld [vmem:[#allocation8 + $0x190] sm:$0xff]
    %v690 = vld [vmem:[#allocation8 + $0x198] sm:$0xff]
    %v691 = vld [vmem:[#allocation8 + $0x1a0] sm:$0xff]
    %v692 = vld [vmem:[#allocation8 + $0x1a8] sm:$0xff]
    %v693 = vld [vmem:[#allocation8 + $0x1b0] sm:$0xff]
    %v694 = vld [vmem:[#allocation8 + $0x1b8] sm:$0xff]
    %v695 = vld [vmem:[#allocation8 + $0x1c0] sm:$0xff]
    %v696 = vld [vmem:[#allocation8 + $0x1c8] sm:$0xff]
    %v697 = vld [vmem:[#allocation8 + $0x1d0] sm:$0xff]
    %v698 = vld [vmem:[#allocation8 + $0x1d8] sm:$0xff]
    %v699 = vld [vmem:[#allocation8 + $0x1e0] sm:$0xff]
    %v700 = vld [vmem:[#allocation8 + $0x1e8] sm:$0xff]
    %v701 = vld [vmem:[#allocation8 + $0x1f0] sm:$0xff]
    %v702 = vld [vmem:[#allocation8 + $0x1f8] sm:$0xff]
    %v703 = vld [vmem:[#allocation8 + $0x200] sm:$0xff]
    %v704 = vld [vmem:[#allocation8 + $0x208] sm:$0xff]
    %v705 = vld [vmem:[#allocation8 + $0x210] sm:$0xff]
    %v706 = vld [vmem:[#allocation8 + $0x218] sm:$0xff]
    %v707 = vld [vmem:[#allocation8 + $0x220] sm:$0xff]
    %v708 = vld [vmem:[#allocation8 + $0x228] sm:$0xff]
    %v709 = vld [vmem:[#allocation8 + $0x230] sm:$0xff]
    %v710 = vld [vmem:[#allocation8 + $0x238] sm:$0xff]
    %v711 = vld [vmem:[#allocation8 + $0x240] sm:$0xff]
    %v712 = vld [vmem:[#allocation8 + $0x248] sm:$0xff]
    %v713 = vld [vmem:[#allocation8 + $0x250] sm:$0xff]
    %v714 = vld [vmem:[#allocation8 + $0x258] sm:$0xff]
    %v715 = vld [vmem:[#allocation8 + $0x260] sm:$0xff]
    %v716 = vld [vmem:[#allocation8 + $0x268] sm:$0xff]
    %v717 = vld [vmem:[#allocation8 + $0x270] sm:$0xff]
    %v718 = vld [vmem:[#allocation8 + $0x278] sm:$0xff]
    %v719 = vld [vmem:[#allocation8 + $0x280] sm:$0xff]
    %v720 = vld [vmem:[#allocation8 + $0x288] sm:$0xff]
    %v721 = vld [vmem:[#allocation8 + $0x290] sm:$0xff]
    %v722 = vld [vmem:[#allocation8 + $0x298] sm:$0xff]
    %v723 = vld [vmem:[#allocation8 + $0x2a0] sm:$0xff]
    %v724 = vld [vmem:[#allocation8 + $0x2a8] sm:$0xff]
    %v725 = vld [vmem:[#allocation8 + $0x2b0] sm:$0xff]
    %v726 = vld [vmem:[#allocation8 + $0x2b8] sm:$0xff]
    %v727 = vld [vmem:[#allocation8 + $0x2c0] sm:$0xff]
    %v728 = vld [vmem:[#allocation8 + $0x2c8] sm:$0xff]
    %v729 = vld [vmem:[#allocation8 + $0x2d0] sm:$0xff]
    %v730 = vld [vmem:[#allocation8 + $0x2d8] sm:$0xff]
    %v731 = vld [vmem:[#allocation8 + $0x2e0] sm:$0xff]
    %v732 = vld [vmem:[#allocation8 + $0x2e8] sm:$0xff]
    %v733 = vld [vmem:[#allocation8 + $0x2f0] sm:$0xff]
    %v734 = vld [vmem:[#allocation8 + $0x2f8] sm:$0xff]
    %v735 = vld [vmem:[#allocation8 + $0x300] sm:$0xff]
    %v736 = vld [vmem:[#allocation8 + $0x308] sm:$0xff]
    %v737 = vld [vmem:[#allocation8 + $0x310] sm:$0xff]
    %v738 = vld [vmem:[#allocation8 + $0x318] sm:$0xff]
    %v739 = vld [vmem:[#allocation8 + $0x320] sm:$0xff]
    %v740 = vld [vmem:[#allocation8 + $0x328] sm:$0xff]
    %v741 = vld [vmem:[#allocation8 + $0x330] sm:$0xff]
    %v742 = vld [vmem:[#allocation8 + $0x338] sm:$0xff]
    %v743 = vld [vmem:[#allocation8 + $0x340] sm:$0xff]
    %v744 = vld [vmem:[#allocation8 + $0x348] sm:$0xff]
    %v745 = vld [vmem:[#allocation8 + $0x350] sm:$0xff]
    %v746 = vld [vmem:[#allocation8 + $0x358] sm:$0xff]
    %v747 = vld [vmem:[#allocation8 + $0x360] sm:$0xff]
    %v748 = vld [vmem:[#allocation8 + $0x368] sm:$0xff]
    %v749 = vld [vmem:[#allocation8 + $0x370] sm:$0xff]
    %v750 = vld [vmem:[#allocation8 + $0x378] sm:$0xff]
    %v751 = vld [vmem:[#allocation8 + $0x380] sm:$0xff]
    %v752 = vld [vmem:[#allocation8 + $0x388] sm:$0xff]
    %v753 = vld [vmem:[#allocation8 + $0x390] sm:$0xff]
    %v754 = vld [vmem:[#allocation8 + $0x398] sm:$0xff]
    %v755 = vld [vmem:[#allocation8 + $0x3a0] sm:$0xff]
    %v756 = vld [vmem:[#allocation8 + $0x3a8] sm:$0xff]
    %v757 = vld [vmem:[#allocation8 + $0x3b0] sm:$0xff]
    %v758 = vld [vmem:[#allocation8 + $0x3b8] sm:$0xff]
    %v759 = vld [vmem:[#allocation8 + $0x3c0] sm:$0xff]
    %v760 = vld [vmem:[#allocation8 + $0x3c8] sm:$0xff]
    %v761 = vld [vmem:[#allocation8 + $0x3d0] sm:$0xff]
    %v762 = vld [vmem:[#allocation8 + $0x3d8] sm:$0xff]
    %v763 = vld [vmem:[#allocation8 + $0x3e0] sm:$0xff]
    %v764 = vld [vmem:[#allocation8 + $0x3e8] sm:$0xff]
    %v765 = vld [vmem:[#allocation8 + $0x3f0] sm:$0xff]
    %v766 = vld [vmem:[#allocation8 + $0x3f8] sm:$0xff]
    %v767 = vld [vmem:[#allocation8 + $0x400] sm:$0xff]
    %v768 = vld [vmem:[#allocation8 + $0x408] sm:$0xff]
    %v769 = vld [vmem:[#allocation8 + $0x410] sm:$0xff]
    %v770 = vld [vmem:[#allocation8 + $0x418] sm:$0xff]
    %v771 = vld [vmem:[#allocation8 + $0x420] sm:$0xff]
    %v772 = vld [vmem:[#allocation8 + $0x428] sm:$0xff]
    %v773 = vld [vmem:[#allocation8 + $0x430] sm:$0xff]
    %v774 = vld [vmem:[#allocation8 + $0x438] sm:$0xff]
    %v775 = vld [vmem:[#allocation8 + $0x440] sm:$0xff]
    %v776 = vld [vmem:[#allocation8 + $0x448] sm:$0xff]
    %v777 = vld [vmem:[#allocation8 + $0x450] sm:$0xff]
    %v778 = vld [vmem:[#allocation8 + $0x458] sm:$0xff]
    %v779 = vld [vmem:[#allocation8 + $0x460] sm:$0xff]
    %v780 = vld [vmem:[#allocation8 + $0x468] sm:$0xff]
    %v781 = vld [vmem:[#allocation8 + $0x470] sm:$0xff]
    %v782 = vld [vmem:[#allocation8 + $0x478] sm:$0xff]
    %v783 = vld [vmem:[#allocation8 + $0x480] sm:$0xff]
    %v784 = vld [vmem:[#allocation8 + $0x488] sm:$0xff]
    %v785 = vld [vmem:[#allocation8 + $0x490] sm:$0xff]
    %v786 = vld [vmem:[#allocation8 + $0x498] sm:$0xff]
    %v787 = vld [vmem:[#allocation8 + $0x4a0] sm:$0xff]
    %v788 = vld [vmem:[#allocation8 + $0x4a8] sm:$0xff]
    %v789 = vld [vmem:[#allocation8 + $0x4b0] sm:$0xff]
    %v790 = vld [vmem:[#allocation8 + $0x4b8] sm:$0xff]
    %v791 = vld [vmem:[#allocation8 + $0x4c0] sm:$0xff]
    %v792 = vld [vmem:[#allocation8 + $0x4c8] sm:$0xff]
    %v793 = vld [vmem:[#allocation8 + $0x4d0] sm:$0xff]
    %v794 = vld [vmem:[#allocation8 + $0x4d8] sm:$0xff]
    %v795 = vld [vmem:[#allocation8 + $0x4e0] sm:$0xff]
    %v796 = vld [vmem:[#allocation8 + $0x4e8] sm:$0xff]
    %v797 = vld [vmem:[#allocation8 + $0x4f0] sm:$0xff]
    %v798 = vld [vmem:[#allocation8 + $0x4f8] sm:$0xff]
    %v799 = vld [vmem:[#allocation8 + $0x500] sm:$0xff]
    %v800 = vld [vmem:[#allocation8 + $0x508] sm:$0xff]
    %v801 = vld [vmem:[#allocation8 + $0x510] sm:$0xff]
    %v802 = vld [vmem:[#allocation8 + $0x518] sm:$0xff]
    %v803 = vld [vmem:[#allocation8 + $0x520] sm:$0xff]
    %v804 = vld [vmem:[#allocation8 + $0x528] sm:$0xff]
    %v805 = vld [vmem:[#allocation8 + $0x530] sm:$0xff]
    %v806 = vld [vmem:[#allocation8 + $0x538] sm:$0xff]
    %v807 = vld [vmem:[#allocation8 + $0x540] sm:$0xff]
    %v808 = vld [vmem:[#allocation8 + $0x548] sm:$0xff]
    %v809 = vld [vmem:[#allocation8 + $0x550] sm:$0xff]
    %v810 = vld [vmem:[#allocation8 + $0x558] sm:$0xff]
    %v811 = vld [vmem:[#allocation8 + $0x560] sm:$0xff]
    %v812 = vld [vmem:[#allocation8 + $0x568] sm:$0xff]
    %v813 = vld [vmem:[#allocation8 + $0x570] sm:$0xff]
    %v814 = vld [vmem:[#allocation8 + $0x578] sm:$0xff]
    %v815 = vld [vmem:[#allocation8 + $0x580] sm:$0xff]
    %v816 = vld [vmem:[#allocation8 + $0x588] sm:$0xff]
    %v817 = vld [vmem:[#allocation8 + $0x590] sm:$0xff]
    %v818 = vld [vmem:[#allocation8 + $0x598] sm:$0xff]
    %v819 = vld [vmem:[#allocation8 + $0x5a0] sm:$0xff]
    %v820 = vld [vmem:[#allocation8 + $0x5a8] sm:$0xff]
    %v821 = vld [vmem:[#allocation8 + $0x5b0] sm:$0xff]
    %v822 = vld [vmem:[#allocation8 + $0x5b8] sm:$0xff]
    %v823 = vld [vmem:[#allocation8 + $0x5c0] sm:$0xff]
    %v824 = vld [vmem:[#allocation8 + $0x5c8] sm:$0xff]
    %v825 = vld [vmem:[#allocation8 + $0x5d0] sm:$0xff]
    %v826 = vld [vmem:[#allocation8 + $0x5d8] sm:$0xff]
    %v827 = vld [vmem:[#allocation8 + $0x5e0] sm:$0xff]
    %v828 = vld [vmem:[#allocation8 + $0x5e8] sm:$0xff]
    %v829 = vld [vmem:[#allocation8 + $0x5f0] sm:$0xff]
    %v830 = vld [vmem:[#allocation8 + $0x5f8] sm:$0xff]
    %v831 = vld [vmem:[#allocation8 + $0x600] sm:$0xff]
    %v832 = vld [vmem:[#allocation8 + $0x608] sm:$0xff]
    %v833 = vld [vmem:[#allocation8 + $0x610] sm:$0xff]
    %v834 = vld [vmem:[#allocation8 + $0x618] sm:$0xff]
    %v835 = vld [vmem:[#allocation8 + $0x620] sm:$0xff]
    %v836 = vld [vmem:[#allocation8 + $0x628] sm:$0xff]
    %v837 = vld [vmem:[#allocation8 + $0x630] sm:$0xff]
    %v838 = vld [vmem:[#allocation8 + $0x638] sm:$0xff]
    %v839 = vld [vmem:[#allocation8 + $0x640] sm:$0xff]
    %v840 = vld [vmem:[#allocation8 + $0x648] sm:$0xff]
    %v841 = vld [vmem:[#allocation8 + $0x650] sm:$0xff]
    %v842 = vld [vmem:[#allocation8 + $0x658] sm:$0xff]
    %v843 = vld [vmem:[#allocation8 + $0x660] sm:$0xff]
    %v844 = vld [vmem:[#allocation8 + $0x668] sm:$0xff]
    %v845 = vld [vmem:[#allocation8 + $0x670] sm:$0xff]
    %v846 = vld [vmem:[#allocation8 + $0x678] sm:$0xff]
    %v847 = vld [vmem:[#allocation8 + $0x680] sm:$0xff]
    %v848 = vld [vmem:[#allocation8 + $0x688] sm:$0xff]
    %v849 = vld [vmem:[#allocation8 + $0x690] sm:$0xff]
    %v850 = vld [vmem:[#allocation8 + $0x698] sm:$0xff]
    %v851 = vld [vmem:[#allocation8 + $0x6a0] sm:$0xff]
    %v852 = vld [vmem:[#allocation8 + $0x6a8] sm:$0xff]
    %v853 = vld [vmem:[#allocation8 + $0x6b0] sm:$0xff]
    %v854 = vld [vmem:[#allocation8 + $0x6b8] sm:$0xff]
    %v855 = vld [vmem:[#allocation8 + $0x6c0] sm:$0xff]
    %v856 = vld [vmem:[#allocation8 + $0x6c8] sm:$0xff]
    %v857 = vld [vmem:[#allocation8 + $0x6d0] sm:$0xff]
    %v858 = vld [vmem:[#allocation8 + $0x6d8] sm:$0xff]
    %v859 = vld [vmem:[#allocation8 + $0x6e0] sm:$0xff]
    %v860 = vld [vmem:[#allocation8 + $0x6e8] sm:$0xff]
    %v861 = vld [vmem:[#allocation8 + $0x6f0] sm:$0xff]
    %v862 = vld [vmem:[#allocation8 + $0x6f8] sm:$0xff]
    %v863 = vld [vmem:[#allocation8 + $0x700] sm:$0xff]
    %v864 = vld [vmem:[#allocation8 + $0x708] sm:$0xff]
    %v865 = vld [vmem:[#allocation8 + $0x710] sm:$0xff]
    %v866 = vld [vmem:[#allocation8 + $0x718] sm:$0xff]
    %v867 = vld [vmem:[#allocation8 + $0x720] sm:$0xff]
    %v868 = vld [vmem:[#allocation8 + $0x728] sm:$0xff]
    %v869 = vld [vmem:[#allocation8 + $0x730] sm:$0xff]
    %v870 = vld [vmem:[#allocation8 + $0x738] sm:$0xff]
    %v871 = vld [vmem:[#allocation8 + $0x740] sm:$0xff]
    %v872 = vld [vmem:[#allocation8 + $0x748] sm:$0xff]
    %v873 = vld [vmem:[#allocation8 + $0x750] sm:$0xff]
    %v874 = vld [vmem:[#allocation8 + $0x758] sm:$0xff]
    %v875 = vld [vmem:[#allocation8 + $0x760] sm:$0xff]
    %v876 = vld [vmem:[#allocation8 + $0x768] sm:$0xff]
    %v877 = vld [vmem:[#allocation8 + $0x770] sm:$0xff]
    %v878 = vld [vmem:[#allocation8 + $0x778] sm:$0xff]
    %v879 = vld [vmem:[#allocation8 + $0x780] sm:$0xff]
    %v880 = vld [vmem:[#allocation8 + $0x788] sm:$0xff]
    %v881 = vld [vmem:[#allocation8 + $0x790] sm:$0xff]
    %v882 = vld [vmem:[#allocation8 + $0x798] sm:$0xff]
    %v883 = vld [vmem:[#allocation8 + $0x7a0] sm:$0xff]
    %v884 = vld [vmem:[#allocation8 + $0x7a8] sm:$0xff]
    %v885 = vld [vmem:[#allocation8 + $0x7b0] sm:$0xff]
    %v886 = vld [vmem:[#allocation8 + $0x7b8] sm:$0xff]
    %v887 = vld [vmem:[#allocation8 + $0x7c0] sm:$0xff]
    %v888 = vld [vmem:[#allocation8 + $0x7c8] sm:$0xff]
    %v889 = vld [vmem:[#allocation8 + $0x7d0] sm:$0xff]
    %v890 = vld [vmem:[#allocation8 + $0x7d8] sm:$0xff]
    %v891 = vld [vmem:[#allocation8 + $0x7e0] sm:$0xff]
    %v892 = vld [vmem:[#allocation8 + $0x7e8] sm:$0xff]
    %v893 = vld [vmem:[#allocation8 + $0x7f0] sm:$0xff]
    %v894 = vld [vmem:[#allocation8 + $0x7f8] sm:$0xff]
    %v895 = vld [vmem:[#allocation8 + $0x800] sm:$0xff]
    %v896 = vld [vmem:[#allocation8 + $0x808] sm:$0xff]
    %v897 = vld [vmem:[#allocation8 + $0x810] sm:$0xff]
    %v898 = vld [vmem:[#allocation8 + $0x818] sm:$0xff]
    %v899 = vld [vmem:[#allocation8 + $0x820] sm:$0xff]
    %v900 = vld [vmem:[#allocation8 + $0x828] sm:$0xff]
    %v901 = vld [vmem:[#allocation8 + $0x830] sm:$0xff]
    %v902 = vld [vmem:[#allocation8 + $0x838] sm:$0xff]
    %v903 = vld [vmem:[#allocation8 + $0x840] sm:$0xff]
    %v904 = vld [vmem:[#allocation8 + $0x848] sm:$0xff]
    %v905 = vld [vmem:[#allocation8 + $0x850] sm:$0xff]
    %v906 = vld [vmem:[#allocation8 + $0x858] sm:$0xff]
    %v907 = vld [vmem:[#allocation8 + $0x860] sm:$0xff]
    %v908 = vld [vmem:[#allocation8 + $0x868] sm:$0xff]
    %v909 = vld [vmem:[#allocation8 + $0x870] sm:$0xff]
    %v910 = vld [vmem:[#allocation8 + $0x878] sm:$0xff]
    %v911 = vld [vmem:[#allocation8 + $0x880] sm:$0xff]
    %v912 = vld [vmem:[#allocation8 + $0x888] sm:$0xff]
    %v913 = vld [vmem:[#allocation8 + $0x890] sm:$0xff]
    %v914 = vld [vmem:[#allocation8 + $0x898] sm:$0xff]
    %v915 = vld [vmem:[#allocation8 + $0x8a0] sm:$0xff]
    %v916 = vld [vmem:[#allocation8 + $0x8a8] sm:$0xff]
    %v917 = vld [vmem:[#allocation8 + $0x8b0] sm:$0xff]
    %v918 = vld [vmem:[#allocation8 + $0x8b8] sm:$0xff]
    %v919 = vld [vmem:[#allocation8 + $0x8c0] sm:$0xff]
    %v920 = vld [vmem:[#allocation8 + $0x8c8] sm:$0xff]
    %v921 = vld [vmem:[#allocation8 + $0x8d0] sm:$0xff]
    %v922 = vld [vmem:[#allocation8 + $0x8d8] sm:$0xff]
    %v923 = vld [vmem:[#allocation8 + $0x8e0] sm:$0xff]
    %v924 = vld [vmem:[#allocation8 + $0x8e8] sm:$0xff]
    %v925 = vld [vmem:[#allocation8 + $0x8f0] sm:$0xff]
    %v926 = vld [vmem:[#allocation8 + $0x8f8] sm:$0xff]
    %v927 = vld [vmem:[#allocation8 + $0x900] sm:$0xff]
    %v928 = vld [vmem:[#allocation8 + $0x908] sm:$0xff]
    %v929 = vld [vmem:[#allocation8 + $0x910] sm:$0xff]
    %v930 = vld [vmem:[#allocation8 + $0x918] sm:$0xff]
    %v931 = vld [vmem:[#allocation8 + $0x920] sm:$0xff]
    %v932 = vld [vmem:[#allocation8 + $0x928] sm:$0xff]
    %v933 = vld [vmem:[#allocation8 + $0x930] sm:$0xff]
    %v934 = vld [vmem:[#allocation8 + $0x938] sm:$0xff]
    %v935 = vld [vmem:[#allocation8 + $0x940] sm:$0xff]
    %v936 = vld [vmem:[#allocation8 + $0x948] sm:$0xff]
    %v937 = vld [vmem:[#allocation8 + $0x950] sm:$0xff]
    %v938 = vld [vmem:[#allocation8 + $0x958] sm:$0xff]
    %v939 = vld [vmem:[#allocation8 + $0x960] sm:$0xff]
    %v940 = vld [vmem:[#allocation8 + $0x968] sm:$0xff]
    %v941 = vld [vmem:[#allocation8 + $0x970] sm:$0xff]
    %v942 = vld [vmem:[#allocation8 + $0x978] sm:$0xff]
    %v943 = vld [vmem:[#allocation8 + $0x980] sm:$0xff]
    %v944 = vld [vmem:[#allocation8 + $0x988] sm:$0xff]
    %v945 = vld [vmem:[#allocation8 + $0x990] sm:$0xff]
    %v946 = vld [vmem:[#allocation8 + $0x998] sm:$0xff]
    %v947 = vld [vmem:[#allocation8 + $0x9a0] sm:$0xff]
    %v948 = vld [vmem:[#allocation8 + $0x9a8] sm:$0xff]
    %v949 = vld [vmem:[#allocation8 + $0x9b0] sm:$0xff]
    %v950 = vld [vmem:[#allocation8 + $0x9b8] sm:$0xff]
    %v951 = vld [vmem:[#allocation8 + $0x9c0] sm:$0xff]
    %v952 = vld [vmem:[#allocation8 + $0x9c8] sm:$0xff]
    %v953 = vld [vmem:[#allocation8 + $0x9d0] sm:$0xff]
    %v954 = vld [vmem:[#allocation8 + $0x9d8] sm:$0xff]
    %v955 = vld [vmem:[#allocation8 + $0x9e0] sm:$0xff]
    %v956 = vld [vmem:[#allocation8 + $0x9e8] sm:$0xff]
    %v957 = vld [vmem:[#allocation8 + $0x9f0] sm:$0xff]
    %v958 = vld [vmem:[#allocation8 + $0x9f8] sm:$0xff]
    %v959 = vld [vmem:[#allocation8 + $0xa00] sm:$0xff]
    %v960 = vld [vmem:[#allocation8 + $0xa08] sm:$0xff]
    %v961 = vld [vmem:[#allocation8 + $0xa10] sm:$0xff]
    %v962 = vld [vmem:[#allocation8 + $0xa18] sm:$0xff]
    %v963 = vld [vmem:[#allocation8 + $0xa20] sm:$0xff]
    %v964 = vld [vmem:[#allocation8 + $0xa28] sm:$0xff]
    %v965 = vld [vmem:[#allocation8 + $0xa30] sm:$0xff]
    %v966 = vld [vmem:[#allocation8 + $0xa38] sm:$0xff]
    %v967 = vld [vmem:[#allocation8 + $0xa40] sm:$0xff]
    %v968 = vld [vmem:[#allocation8 + $0xa48] sm:$0xff]
    %v969 = vld [vmem:[#allocation8 + $0xa50] sm:$0xff]
    %v970 = vld [vmem:[#allocation8 + $0xa58] sm:$0xff]
    %v971 = vld [vmem:[#allocation8 + $0xa60] sm:$0xff]
    %v972 = vld [vmem:[#allocation8 + $0xa68] sm:$0xff]
    %v973 = vld [vmem:[#allocation8 + $0xa70] sm:$0xff]
    %v974 = vld [vmem:[#allocation8 + $0xa78] sm:$0xff]
    %v975 = vld [vmem:[#allocation8 + $0xa80] sm:$0xff]
    %v976 = vld [vmem:[#allocation8 + $0xa88] sm:$0xff]
    %v977 = vld [vmem:[#allocation8 + $0xa90] sm:$0xff]
    %v978 = vld [vmem:[#allocation8 + $0xa98] sm:$0xff]
    %v979 = vld [vmem:[#allocation8 + $0xaa0] sm:$0xff]
    %v980 = vld [vmem:[#allocation8 + $0xaa8] sm:$0xff]
    %v981 = vld [vmem:[#allocation8 + $0xab0] sm:$0xff]
    %v982 = vld [vmem:[#allocation8 + $0xab8] sm:$0xff]
    %v983 = vld [vmem:[#allocation8 + $0xac0] sm:$0xff]
    %v984 = vld [vmem:[#allocation8 + $0xac8] sm:$0xff]
    %v985 = vld [vmem:[#allocation8 + $0xad0] sm:$0xff]
    %v986 = vld [vmem:[#allocation8 + $0xad8] sm:$0xff]
    %v987 = vld [vmem:[#allocation8 + $0xae0] sm:$0xff]
    %v988 = vld [vmem:[#allocation8 + $0xae8] sm:$0xff]
    %v989 = vld [vmem:[#allocation8 + $0xaf0] sm:$0xff]
    %v990 = vld [vmem:[#allocation8 + $0xaf8] sm:$0xff]
    %v991 = vld [vmem:[#allocation8 + $0xb00] sm:$0xff]
    %v992 = vld [vmem:[#allocation8 + $0xb08] sm:$0xff]
    %v993 = vld [vmem:[#allocation8 + $0xb10] sm:$0xff]
    %v994 = vld [vmem:[#allocation8 + $0xb18] sm:$0xff]
    %v995 = vld [vmem:[#allocation8 + $0xb20] sm:$0xff]
    %v996 = vld [vmem:[#allocation8 + $0xb28] sm:$0xff]
    %v997 = vld [vmem:[#allocation8 + $0xb30] sm:$0xff]
    %v998 = vld [vmem:[#allocation8 + $0xb38] sm:$0xff]
    %v999 = vld [vmem:[#allocation8 + $0xb40] sm:$0xff]
    %v1000 = vld [vmem:[#allocation8 + $0xb48] sm:$0xff]
    %v1001 = vld [vmem:[#allocation8 + $0xb50] sm:$0xff]
    %v1002 = vld [vmem:[#allocation8 + $0xb58] sm:$0xff]
    %v1003 = vld [vmem:[#allocation8 + $0xb60] sm:$0xff]
    %v1004 = vld [vmem:[#allocation8 + $0xb68] sm:$0xff]
    %v1005 = vld [vmem:[#allocation8 + $0xb70] sm:$0xff]
    %v1006 = vld [vmem:[#allocation8 + $0xb78] sm:$0xff]
    %v1007 = vld [vmem:[#allocation8 + $0xb80] sm:$0xff]
    %v1008 = vld [vmem:[#allocation8 + $0xb88] sm:$0xff]
    %v1009 = vld [vmem:[#allocation8 + $0xb90] sm:$0xff]
    %v1010 = vld [vmem:[#allocation8 + $0xb98] sm:$0xff]
    %v1011 = vld [vmem:[#allocation8 + $0xba0] sm:$0xff]
    %v1012 = vld [vmem:[#allocation8 + $0xba8] sm:$0xff]
    %v1013 = vld [vmem:[#allocation8 + $0xbb0] sm:$0xff]
    %v1014 = vld [vmem:[#allocation8 + $0xbb8] sm:$0xff]
    %v1015 = vld [vmem:[#allocation8 + $0xbc0] sm:$0xff]
    %v1016 = vld [vmem:[#allocation8 + $0xbc8] sm:$0xff]
    %v1017 = vld [vmem:[#allocation8 + $0xbd0] sm:$0xff]
    %v1018 = vld [vmem:[#allocation8 + $0xbd8] sm:$0xff]
    %v1019 = vld [vmem:[#allocation8 + $0xbe0] sm:$0xff]
    %v1020 = vld [vmem:[#allocation8 + $0xbe8] sm:$0xff]
    %v1021 = vld [vmem:[#allocation8 + $0xbf0] sm:$0xff]
    %v1022 = vld [vmem:[#allocation8 + $0xbf8] sm:$0xff]
    %v1023 = vld [vmem:[#allocation8 + $0xc00] sm:$0xff]
    %v1024 = vld [vmem:[#allocation8 + $0xc08] sm:$0xff]
    %v1025 = vld [vmem:[#allocation8 + $0xc10] sm:$0xff]
    %v1026 = vld [vmem:[#allocation8 + $0xc18] sm:$0xff]
    %v1027 = vld [vmem:[#allocation8 + $0xc20] sm:$0xff]
    %v1028 = vld [vmem:[#allocation8 + $0xc28] sm:$0xff]
    %v1029 = vld [vmem:[#allocation8 + $0xc30] sm:$0xff]
    %v1030 = vld [vmem:[#allocation8 + $0xc38] sm:$0xff]
    %v1031 = vld [vmem:[#allocation8 + $0xc40] sm:$0xff]
    %v1032 = vld [vmem:[#allocation8 + $0xc48] sm:$0xff]
    %v1033 = vld [vmem:[#allocation8 + $0xc50] sm:$0xff]
    %v1034 = vld [vmem:[#allocation8 + $0xc58] sm:$0xff]
    %v1035 = vld [vmem:[#allocation8 + $0xc60] sm:$0xff]
    %v1036 = vld [vmem:[#allocation8 + $0xc68] sm:$0xff]
    %v1037 = vld [vmem:[#allocation8 + $0xc70] sm:$0xff]
    %v1038 = vld [vmem:[#allocation8 + $0xc78] sm:$0xff]
    %v1039 = vld [vmem:[#allocation8 + $0xc80] sm:$0xff]
    %v1040 = vld [vmem:[#allocation8 + $0xc88] sm:$0xff]
    %v1041 = vld [vmem:[#allocation8 + $0xc90] sm:$0xff]
    %v1042 = vld [vmem:[#allocation8 + $0xc98] sm:$0xff]
    %v1043 = vld [vmem:[#allocation8 + $0xca0] sm:$0xff]
    %v1044 = vld [vmem:[#allocation8 + $0xca8] sm:$0xff]
    %v1045 = vld [vmem:[#allocation8 + $0xcb0] sm:$0xff]
    %v1046 = vld [vmem:[#allocation8 + $0xcb8] sm:$0xff]
    %v1047 = vld [vmem:[#allocation8 + $0xcc0] sm:$0xff]
    %v1048 = vld [vmem:[#allocation8 + $0xcc8] sm:$0xff]
    %v1049 = vld [vmem:[#allocation8 + $0xcd0] sm:$0xff]
    %v1050 = vld [vmem:[#allocation8 + $0xcd8] sm:$0xff]
    %v1051 = vld [vmem:[#allocation8 + $0xce0] sm:$0xff]
    %v1052 = vld [vmem:[#allocation8 + $0xce8] sm:$0xff]
    %v1053 = vld [vmem:[#allocation8 + $0xcf0] sm:$0xff]
    %v1054 = vld [vmem:[#allocation8 + $0xcf8] sm:$0xff]
    %v1055 = vld [vmem:[#allocation8 + $0xd00] sm:$0xff]
    %v1056 = vld [vmem:[#allocation8 + $0xd08] sm:$0xff]
    %v1057 = vld [vmem:[#allocation8 + $0xd10] sm:$0xff]
    %v1058 = vld [vmem:[#allocation8 + $0xd18] sm:$0xff]
    %v1059 = vld [vmem:[#allocation8 + $0xd20] sm:$0xff]
    %v1060 = vld [vmem:[#allocation8 + $0xd28] sm:$0xff]
    %v1061 = vld [vmem:[#allocation8 + $0xd30] sm:$0xff]
    %v1062 = vld [vmem:[#allocation8 + $0xd38] sm:$0xff]
    %v1063 = vld [vmem:[#allocation8 + $0xd40] sm:$0xff]
    %v1064 = vld [vmem:[#allocation8 + $0xd48] sm:$0xff]
    %v1065 = vld [vmem:[#allocation8 + $0xd50] sm:$0xff]
    %v1066 = vld [vmem:[#allocation8 + $0xd58] sm:$0xff]
    %v1067 = vld [vmem:[#allocation8 + $0xd60] sm:$0xff]
    %v1068 = vld [vmem:[#allocation8 + $0xd68] sm:$0xff]
    %v1069 = vld [vmem:[#allocation8 + $0xd70] sm:$0xff]
    %v1070 = vld [vmem:[#allocation8 + $0xd78] sm:$0xff]
    %v1071 = vld [vmem:[#allocation8 + $0xd80] sm:$0xff]
    %v1072 = vld [vmem:[#allocation8 + $0xd88] sm:$0xff]
    %v1073 = vld [vmem:[#allocation8 + $0xd90] sm:$0xff]
    %v1074 = vld [vmem:[#allocation8 + $0xd98] sm:$0xff]
    %v1075 = vld [vmem:[#allocation8 + $0xda0] sm:$0xff]
    %v1076 = vld [vmem:[#allocation8 + $0xda8] sm:$0xff]
    %v1077 = vld [vmem:[#allocation8 + $0xdb0] sm:$0xff]
    %v1078 = vld [vmem:[#allocation8 + $0xdb8] sm:$0xff]
    %v1079 = vld [vmem:[#allocation8 + $0xdc0] sm:$0xff]
    %v1080 = vld [vmem:[#allocation8 + $0xdc8] sm:$0xff]
    %v1081 = vld [vmem:[#allocation8 + $0xdd0] sm:$0xff]
    %v1082 = vld [vmem:[#allocation8 + $0xdd8] sm:$0xff]
    %v1083 = vld [vmem:[#allocation8 + $0xde0] sm:$0xff]
    %v1084 = vld [vmem:[#allocation8 + $0xde8] sm:$0xff]
    %v1085 = vld [vmem:[#allocation8 + $0xdf0] sm:$0xff]
    %v1086 = vld [vmem:[#allocation8 + $0xdf8] sm:$0xff]
    %v1087 = vld [vmem:[#allocation8 + $0xe00] sm:$0xff]
    %v1088 = vld [vmem:[#allocation8 + $0xe08] sm:$0xff]
    %v1089 = vld [vmem:[#allocation8 + $0xe10] sm:$0xff]
    %v1090 = vld [vmem:[#allocation8 + $0xe18] sm:$0xff]
    %v1091 = vld [vmem:[#allocation8 + $0xe20] sm:$0xff]
    %v1092 = vld [vmem:[#allocation8 + $0xe28] sm:$0xff]
    %v1093 = vld [vmem:[#allocation8 + $0xe30] sm:$0xff]
    %v1094 = vld [vmem:[#allocation8 + $0xe38] sm:$0xff]
    %v1095 = vld [vmem:[#allocation8 + $0xe40] sm:$0xff]
    %v1096 = vld [vmem:[#allocation8 + $0xe48] sm:$0xff]
    %v1097 = vld [vmem:[#allocation8 + $0xe50] sm:$0xff]
    %v1098 = vld [vmem:[#allocation8 + $0xe58] sm:$0xff]
    %v1099 = vld [vmem:[#allocation8 + $0xe60] sm:$0xff]
    %v1100 = vld [vmem:[#allocation8 + $0xe68] sm:$0xff]
    %v1101 = vld [vmem:[#allocation8 + $0xe70] sm:$0xff]
    %v1102 = vld [vmem:[#allocation8 + $0xe78] sm:$0xff]
    %v1103 = vld [vmem:[#allocation8 + $0xe80] sm:$0xff]
    %v1104 = vld [vmem:[#allocation8 + $0xe88] sm:$0xff]
    %v1105 = vld [vmem:[#allocation8 + $0xe90] sm:$0xff]
    %v1106 = vld [vmem:[#allocation8 + $0xe98] sm:$0xff]
    %v1107 = vld [vmem:[#allocation8 + $0xea0] sm:$0xff]
    %v1108 = vld [vmem:[#allocation8 + $0xea8] sm:$0xff]
    %v1109 = vld [vmem:[#allocation8 + $0xeb0] sm:$0xff]
    %v1110 = vld [vmem:[#allocation8 + $0xeb8] sm:$0xff]
    %v1111 = vld [vmem:[#allocation8 + $0xec0] sm:$0xff]
    %v1112 = vld [vmem:[#allocation8 + $0xec8] sm:$0xff]
    %v1113 = vld [vmem:[#allocation8 + $0xed0] sm:$0xff]
    %v1114 = vld [vmem:[#allocation8 + $0xed8] sm:$0xff]
    %v1115 = vld [vmem:[#allocation8 + $0xee0] sm:$0xff]
    %v1116 = vld [vmem:[#allocation8 + $0xee8] sm:$0xff]
    %v1117 = vld [vmem:[#allocation8 + $0xef0] sm:$0xff]
    %v1118 = vld [vmem:[#allocation8 + $0xef8] sm:$0xff]
    %v1119 = vld [vmem:[#allocation8 + $0xf00] sm:$0xff]
    %v1120 = vld [vmem:[#allocation8 + $0xf08] sm:$0xff]
    %v1121 = vld [vmem:[#allocation8 + $0xf10] sm:$0xff]
    %v1122 = vld [vmem:[#allocation8 + $0xf18] sm:$0xff]
    %v1123 = vld [vmem:[#allocation8 + $0xf20] sm:$0xff]
    %v1124 = vld [vmem:[#allocation8 + $0xf28] sm:$0xff]
    %v1125 = vld [vmem:[#allocation8 + $0xf30] sm:$0xff]
    %v1126 = vld [vmem:[#allocation8 + $0xf38] sm:$0xff]
    %v1127 = vld [vmem:[#allocation8 + $0xf40] sm:$0xff]
    %v1128 = vld [vmem:[#allocation8 + $0xf48] sm:$0xff]
    %v1129 = vld [vmem:[#allocation8 + $0xf50] sm:$0xff]
    %v1130 = vld [vmem:[#allocation8 + $0xf58] sm:$0xff]
    %v1131 = vld [vmem:[#allocation8 + $0xf60] sm:$0xff]
    %v1132 = vld [vmem:[#allocation8 + $0xf68] sm:$0xff]
    %v1133 = vld [vmem:[#allocation8 + $0xf70] sm:$0xff]
    %v1134 = vld [vmem:[#allocation8 + $0xf78] sm:$0xff]
    %v1135 = vld [vmem:[#allocation8 + $0xf80] sm:$0xff]
    %v1136 = vld [vmem:[#allocation8 + $0xf88] sm:$0xff]
    %v1137 = vld [vmem:[#allocation8 + $0xf90] sm:$0xff]
    %v1138 = vld [vmem:[#allocation8 + $0xf98] sm:$0xff]
    %v1139 = vld [vmem:[#allocation8 + $0xfa0] sm:$0xff]
    %v1140 = vld [vmem:[#allocation8 + $0xfa8] sm:$0xff]
    %v1141 = vld [vmem:[#allocation8 + $0xfb0] sm:$0xff]
    %v1142 = vld [vmem:[#allocation8 + $0xfb8] sm:$0xff]
    %v1143 = vld [vmem:[#allocation8 + $0xfc0] sm:$0xff]
    %v1144 = vld [vmem:[#allocation8 + $0xfc8] sm:$0xff]
    %v1145 = vld [vmem:[#allocation8 + $0xfd0] sm:$0xff]
    %v1146 = vld [vmem:[#allocation8 + $0xfd8] sm:$0xff]
    %v1147 = vld [vmem:[#allocation8 + $0xfe0] sm:$0xff]
    %v1148 = vld [vmem:[#allocation8 + $0xfe8] sm:$0xff]
    %v1149 = vld [vmem:[#allocation8 + $0xff0] sm:$0xff]
    %v1150 = vld [vmem:[#allocation8 + $0xff8] sm:$0xff]
    %v1151 = vld [vmem:[#allocation8 + $0x1000] sm:$0xff]
    %v1152 = vld [vmem:[#allocation8 + $0x1008] sm:$0xff]
    %v1153 = vld [vmem:[#allocation8 + $0x1010] sm:$0xff]
    %v1154 = vld [vmem:[#allocation8 + $0x1018] sm:$0xff]
    %v1155 = vld [vmem:[#allocation8 + $0x1020] sm:$0xff]
    %v1156 = vld [vmem:[#allocation8 + $0x1028] sm:$0xff]
    %v1157 = vld [vmem:[#allocation8 + $0x1030] sm:$0xff]
    %v1158 = vld [vmem:[#allocation8 + $0x1038] sm:$0xff]
    %v1159 = vld [vmem:[#allocation8 + $0x1040] sm:$0xff]
    %v1160 = vld [vmem:[#allocation8 + $0x1048] sm:$0xff]
    %v1161 = vld [vmem:[#allocation8 + $0x1050] sm:$0xff]
    %v1162 = vld [vmem:[#allocation8 + $0x1058] sm:$0xff]
    %v1163 = vld [vmem:[#allocation8 + $0x1060] sm:$0xff]
    %v1164 = vld [vmem:[#allocation8 + $0x1068] sm:$0xff]
    %v1165 = vld [vmem:[#allocation8 + $0x1070] sm:$0xff]
    %v1166 = vld [vmem:[#allocation8 + $0x1078] sm:$0xff]
    %v1167 = vld [vmem:[#allocation8 + $0x1080] sm:$0xff]
    %v1168 = vld [vmem:[#allocation8 + $0x1088] sm:$0xff]
    %v1169 = vld [vmem:[#allocation8 + $0x1090] sm:$0xff]
    %v1170 = vld [vmem:[#allocation8 + $0x1098] sm:$0xff]
    %v1171 = vld [vmem:[#allocation8 + $0x10a0] sm:$0xff]
    %v1172 = vld [vmem:[#allocation8 + $0x10a8] sm:$0xff]
    %v1173 = vld [vmem:[#allocation8 + $0x10b0] sm:$0xff]
    %v1174 = vld [vmem:[#allocation8 + $0x10b8] sm:$0xff]
    %v1175 = vld [vmem:[#allocation8 + $0x10c0] sm:$0xff]
    %v1176 = vld [vmem:[#allocation8 + $0x10c8] sm:$0xff]
    %v1177 = vld [vmem:[#allocation8 + $0x10d0] sm:$0xff]
    %v1178 = vld [vmem:[#allocation8 + $0x10d8] sm:$0xff]
    %v1179 = vld [vmem:[#allocation8 + $0x10e0] sm:$0xff]
    %v1180 = vld [vmem:[#allocation8 + $0x10e8] sm:$0xff]
    %v1181 = vld [vmem:[#allocation8 + $0x10f0] sm:$0xff]
    %v1182 = vld [vmem:[#allocation8 + $0x10f8] sm:$0xff]
    %v1183 = vld [vmem:[#allocation8 + $0x1100] sm:$0xff]
    %v1184 = vld [vmem:[#allocation8 + $0x1108] sm:$0xff]
    %v1185 = vld [vmem:[#allocation8 + $0x1110] sm:$0xff]
    %v1186 = vld [vmem:[#allocation8 + $0x1118] sm:$0xff]
    %v1187 = vld [vmem:[#allocation8 + $0x1120] sm:$0xff]
    %v1188 = vld [vmem:[#allocation8 + $0x1128] sm:$0xff]
    %v1189 = vld [vmem:[#allocation8 + $0x1130] sm:$0xff]
    %v1190 = vld [vmem:[#allocation8 + $0x1138] sm:$0xff]
    %v1191 = vld [vmem:[#allocation8 + $0x1140] sm:$0xff]
    %v1192 = vld [vmem:[#allocation8 + $0x1148] sm:$0xff]
    %v1193 = vld [vmem:[#allocation8 + $0x1150] sm:$0xff]
    %v1194 = vld [vmem:[#allocation8 + $0x1158] sm:$0xff]
    %v1195 = vld [vmem:[#allocation8 + $0x1160] sm:$0xff]
    %v1196 = vld [vmem:[#allocation8 + $0x1168] sm:$0xff]
    %v1197 = vld [vmem:[#allocation8 + $0x1170] sm:$0xff]
    %v1198 = vld [vmem:[#allocation8 + $0x1178] sm:$0xff]
    %v1200 = vsel %vm596, %v589, 0
    %v1203 = vsel %vm596, %v638, 0
    %v1206 = vsel %vm596, %v591, 0
    %v1209 = vsel %vm596, %v593, 0
    %v1212 = vsel %vm596, %v595, 0
    %1214 = vmatprep.subr.mxu0 %v640
    %1215 = vmatpush1.msra.mxu0 %v639
    %1216 = vmatprep.subr.mxu0 %v654
    %1217 = vmatpush1.msra.mxu0 %v653
    %1218 = vmatprep.subr.mxu0 %v668
    %1219 = vmatpush1.msra.mxu0 %v667
    %1220 = vmatprep.subr.mxu0 %v682
    %1221 = vmatpush1.msra.mxu0 %v681
    %1222 = vmatprep.subr.mxu0 %v696
    %1223 = vmatpush1.msra.mxu0 %v695
    %1224 = vmatprep.subr.mxu0 %v710
    %1225 = vmatpush1.msra.mxu0 %v709
    %1226 = vmatprep.subr.mxu0 %v724
    %1227 = vmatpush1.msra.mxu0 %v723
    %1228 = vmatprep.subr.mxu0 %v738
    %1229 = vmatpush1.msra.mxu0 %v737
    %1230 = vmatprep.subr.mxu0 %v752
    %1231 = vmatpush1.msra.mxu0 %v751
    %1232 = vmatprep.subr.mxu0 %v766
    %1233 = vmatpush1.msra.mxu0 %v765
    %1234 = vmatprep.subr.mxu0 %v780
    %1235 = vmatpush1.msra.mxu0 %v779
    %1236 = vmatprep.subr.mxu0 %v794
    %1237 = vmatpush1.msra.mxu0 %v793
    %1238 = vmatprep.subr.mxu0 %v808
    %1239 = vmatpush1.msra.mxu0 %v807
    %1240 = vmatprep.subr.mxu0 %v822
    %1241 = vmatpush1.msra.mxu0 %v821
    %1242 = vmatprep.subr.mxu0 %v836
    %1243 = vmatpush1.msra.mxu0 %v835
    %1244 = vmatprep.subr.mxu0 %v850
    %1245 = vmatpush1.msra.mxu0 %v849
    %1246 = vmatprep.subr.mxu0 %v864
    %1247 = vmatpush1.msra.mxu0 %v863
    %1248 = vmatprep.subr.mxu0 %v878
    %1249 = vmatpush1.msra.mxu0 %v877
    %1250 = vmatprep.subr.mxu0 %v892
    %1251 = vmatpush1.msra.mxu0 %v891
    %1252 = vmatprep.subr.mxu0 %v906
    %1253 = vmatpush1.msra.mxu0 %v905
    %1254 = vmatprep.subr.mxu0 %v920
    %1255 = vmatpush1.msra.mxu0 %v919
    %1256 = vmatprep.subr.mxu0 %v934
    %1257 = vmatpush1.msra.mxu0 %v933
    %1258 = vmatprep.subr.mxu0 %v948
    %1259 = vmatpush1.msra.mxu0 %v947
    %1260 = vmatprep.subr.mxu0 %v962
    %1261 = vmatpush1.msra.mxu0 %v961
    %1262 = vmatprep.subr.mxu0 %v976
    %1263 = vmatpush1.msra.mxu0 %v975
    %1264 = vmatprep.subr.mxu0 %v990
    %1265 = vmatpush1.msra.mxu0 %v989
    %1266 = vmatprep.subr.mxu0 %v1004
    %1267 = vmatpush1.msra.mxu0 %v1003
    %1268 = vmatprep.subr.mxu0 %v1018
    %1269 = vmatpush1.msra.mxu0 %v1017
    %1270 = vmatprep.subr.mxu0 %v1032
    %1271 = vmatpush1.msra.mxu0 %v1031
    %1272 = vmatprep.subr.mxu0 %v1046
    %1273 = vmatpush1.msra.mxu0 %v1045
    %1274 = vmatprep.subr.mxu0 %v1060
    %1275 = vmatpush1.msra.mxu0 %v1059
    %1276 = vmatprep.subr.mxu0 %v1074
    %1277 = vmatpush1.msra.mxu0 %v1073
    %1278 = vmatprep.mubr.f32.mxu0 %v630
    %1279 = vmatmul.mubr.f32.gmra.mrb[0].mxu0 %v606
    %v1280 = vpop.f32.mrb[0].mxu0
    %v1281 = vadd.f32 0.0, %v1280
    %v1282 = vpop.f32.mrb[0].mxu0
    %v1283 = vadd.f32 0.0, %v1282
    %1284 = vmatprep.mubr.f32.mxu0 %v631
    %1285 = vmatmul.mubr.f32.gmra.mrb[0].mxu0 %v607
    %v1286 = vpop.f32.mrb[0].mxu0
    %v1287 = vadd.f32 0.0, %v1286
    %v1288 = vpop.f32.mrb[0].mxu0
    %v1289 = vadd.f32 0.0, %v1288
    %1290 = vmatprep.mubr.f32.mxu0 %v632
    %1291 = vmatmul.mubr.f32.gmra.mrb[0].mxu0 %v608
    %v1292 = vpop.f32.mrb[0].mxu0
    %v1293 = vadd.f32 0.0, %v1292
    %v1294 = vpop.f32.mrb[0].mxu0
    %v1295 = vadd.f32 0.0, %v1294
    %1296 = vmatprep.mubr.f32.mxu0 %v633
    %1297 = vmatmul.mubr.f32.gmra.mrb[0].mxu0 %v609
    %v1298 = vpop.f32.mrb[0].mxu0
    %v1299 = vadd.f32 0.0, %v1298
    %v1300 = vpop.f32.mrb[0].mxu0
    %v1301 = vadd.f32 0.0, %v1300
    %1302 = vmatprep.mubr.f32.mxu0 %v634
    %1303 = vmatmul.mubr.f32.gmra.mrb[0].mxu0 %v610
    %v1304 = vpop.f32.mrb[0].mxu0
    %v1305 = vadd.f32 0.0, %v1304
    %v1306 = vpop.f32.mrb[0].mxu0
    %v1307 = vadd.f32 0.0, %v1306
    %1308 = vmatprep.mubr.f32.mxu0 %v635
    %1309 = vmatmul.mubr.f32.gmra.mrb[0].mxu0 %v611
    %v1310 = vpop.f32.mrb[0].mxu0
    %v1311 = vadd.f32 0.0, %v1310
    %v1312 = vpop.f32.mrb[0].mxu0
    %v1313 = vadd.f32 0.0, %v1312
    %1314 = vmatprep.mubr.f32.mxu0 %v636
    %1315 = vmatmul.mubr.f32.gmra.mrb[0].mxu0 %v612
    %v1316 = vpop.f32.mrb[0].mxu0
    %v1317 = vadd.f32 0.0, %v1316
    %v1318 = vpop.f32.mrb[0].mxu0
    %v1319 = vadd.f32 0.0, %v1318
    %1320 = vmatprep.mubr.f32.mxu0 %v637
    %1321 = vmatmul.mubr.f32.gmra.mrb[0].mxu0 %v613
    %v1322 = vpop.f32.mrb[0].mxu0
    %v1323 = vadd.f32 0.0, %v1322
    %v1324 = vpop.f32.mrb[0].mxu0
    %v1325 = vadd.f32 0.0, %v1324
    %1326 = vdwg.mxu0
    %1327 = vmatprep.subr.mxu0 %v1088
    %1328 = vmatpush1.msra.mxu0 %v1087
    %1329 = vmatprep.subr.mxu0 %v1102
    %1330 = vmatpush1.msra.mxu0 %v1101
    %1331 = vmatprep.subr.mxu0 %v1116
    %1332 = vmatpush1.msra.mxu0 %v1115
    %1333 = vmatprep.subr.mxu0 %v1130
    %1334 = vmatpush1.msra.mxu0 %v1129
    %1335 = vmatprep.subr.mxu0 %v1144
    %1336 = vmatpush1.msra.mxu0 %v1143
    %1337 = vmatprep.subr.mxu0 %v1158
    %1338 = vmatpush1.msra.mxu0 %v1157
    %1339 = vmatprep.subr.mxu0 %v1172
    %1340 = vmatpush1.msra.mxu0 %v1171
    %1341 = vmatprep.subr.mxu0 %v1186
    %1342 = vmatpush1.msra.mxu0 %v1185
    %1343 = vmatprep.subr.mxu0 0.0
    %1344 = vmatpush1.msra.mxu0 0.0
    %1345 = vmatprep.subr.mxu0 0.0
    %1346 = vmatpush1.msra.mxu0 0.0
    %1347 = vmatprep.subr.mxu0 0.0
    %1348 = vmatpush1.msra.mxu0 0.0
    %1349 = vmatprep.subr.mxu0 0.0
    %1350 = vmatpush1.msra.mxu0 0.0
    %1351 = vmatprep.subr.mxu0 0.0
    %1352 = vmatpush1.msra.mxu0 0.0
    %1353 = vmatprep.subr.mxu0 0.0
    %1354 = vmatpush1.msra.mxu0 0.0
    %1355 = vmatprep.subr.mxu0 0.0
    %1356 = vmatpush1.msra.mxu0 0.0
    %1357 = vmatprep.subr.mxu0 0.0
    %1358 = vmatpush1.msra.mxu0 0.0
    %1359 = vmatprep.subr.mxu0 0.0
    %1360 = vmatpush1.msra.mxu0 0.0
    %1361 = vmatprep.subr.mxu0 0.0
    %1362 = vmatpush1.msra.mxu0 0.0
    %1363 = vmatprep.subr.mxu0 0.0
    %1364 = vmatpush1.msra.mxu0 0.0
    %1365 = vmatprep.subr.mxu0 0.0
    %1366 = vmatpush1.msra.mxu0 0.0
    %1367 = vmatprep.subr.mxu0 0.0
    %1368 = vmatpush1.msra.mxu0 0.0
    %1369 = vmatprep.subr.mxu0 0.0
    %1370 = vmatpush1.msra.mxu0 0.0
    %1371 = vmatprep.subr.mxu0 0.0
    %1372 = vmatpush1.msra.mxu0 0.0
    %1373 = vmatprep.subr.mxu0 0.0
    %1374 = vmatpush1.msra.mxu0 0.0
    %1375 = vmatprep.subr.mxu0 0.0
    %1376 = vmatpush1.msra.mxu0 0.0
    %1377 = vmatprep.subr.mxu0 0.0
    %1378 = vmatpush1.msra.mxu0 0.0
    %1379 = vmatprep.subr.mxu0 0.0
    %1380 = vmatpush1.msra.mxu0 0.0
    %1381 = vmatprep.subr.mxu0 0.0
    %1382 = vmatpush1.msra.mxu0 0.0
    %1383 = vmatprep.subr.mxu0 0.0
    %1384 = vmatpush1.msra.mxu0 0.0
    %1385 = vmatprep.subr.mxu0 0.0
    %1386 = vmatpush1.msra.mxu0 0.0
    %1387 = vmatprep.subr.mxu0 0.0
    %1388 = vmatpush1.msra.mxu0 0.0
    %1389 = vmatprep.subr.mxu0 0.0
    %1390 = vmatpush1.msra.mxu0 0.0
    %1391 = vmatprep.mubr.f32.mxu0 0.0
    %1392 = vmatmul.mubr.f32.gmra.mrb[0].mxu0 %v1200
    %v1393 = vpop.f32.mrb[0].mxu0
    %v1394 = vadd.f32 %v1281, %v1393
    %v1395 = vpop.f32.mrb[0].mxu0
    %v1396 = vadd.f32 %v1283, %v1395
    %1397 = vmatprep.mubr.f32.mxu0 0.0
    %1398 = vmatmul.mubr.f32.gmra.mrb[0].mxu0 %v1203
    %v1399 = vpop.f32.mrb[0].mxu0
    %v1400 = vadd.f32 %v1287, %v1399
    %v1401 = vpop.f32.mrb[0].mxu0
    %v1402 = vadd.f32 %v1289, %v1401
    %1403 = vmatprep.mubr.f32.mxu0 0.0
    %1404 = vmatmul.mubr.f32.gmra.mrb[0].mxu0 %v1206
    %v1405 = vpop.f32.mrb[0].mxu0
    %v1406 = vadd.f32 %v1293, %v1405
    %v1407 = vpop.f32.mrb[0].mxu0
    %v1408 = vadd.f32 %v1295, %v1407
    %1409 = vmatprep.mubr.f32.mxu0 0.0
    %1410 = vmatmul.mubr.f32.gmra.mrb[0].mxu0 %v1203
    %v1411 = vpop.f32.mrb[0].mxu0
    %v1412 = vadd.f32 %v1299, %v1411
    %v1413 = vpop.f32.mrb[0].mxu0
    %v1414 = vadd.f32 %v1301, %v1413
    %1415 = vmatprep.mubr.f32.mxu0 0.0
    %1416 = vmatmul.mubr.f32.gmra.mrb[0].mxu0 %v1209
    %v1417 = vpop.f32.mrb[0].mxu0
    %v1418 = vadd.f32 %v1305, %v1417
    %v1419 = vpop.f32.mrb[0].mxu0
    %v1420 = vadd.f32 %v1307, %v1419
    %1421 = vmatprep.mubr.f32.mxu0 0.0
    %1422 = vmatmul.mubr.f32.gmra.mrb[0].mxu0 %v1203
    %v1423 = vpop.f32.mrb[0].mxu0
    %v1424 = vadd.f32 %v1311, %v1423
    %v1425 = vpop.f32.mrb[0].mxu0
    %v1426 = vadd.f32 %v1313, %v1425
    %1427 = vmatprep.mubr.f32.mxu0 0.0
    %1428 = vmatmul.mubr.f32.gmra.mrb[0].mxu0 %v1212
    %v1429 = vpop.f32.mrb[0].mxu0
    %v1430 = vadd.f32 %v1317, %v1429
    %v1431 = vpop.f32.mrb[0].mxu0
    %v1432 = vadd.f32 %v1319, %v1431
    %1433 = vmatprep.mubr.f32.mxu0 0.0
    %1434 = vmatmul.mubr.f32.gmra.mrb[0].mxu0 %v1203
    %v1435 = vpop.f32.mrb[0].mxu0
    %v1436 = vadd.f32 %v1323, %v1435
    %v1437 = vpop.f32.mrb[0].mxu0
    %v1438 = vadd.f32 %v1325, %v1437
    %1439 = vdwg.mxu0
    %1440 = vmatprep.subr.mxu0 %v642
    %1441 = vmatpush1.msra.mxu0 %v641
    %1442 = vmatprep.subr.mxu0 %v656
    %1443 = vmatpush1.msra.mxu0 %v655
    %1444 = vmatprep.subr.mxu0 %v670
    %1445 = vmatpush1.msra.mxu0 %v669
    %1446 = vmatprep.subr.mxu0 %v684
    %1447 = vmatpush1.msra.mxu0 %v683
    %1448 = vmatprep.subr.mxu0 %v698
    %1449 = vmatpush1.msra.mxu0 %v697
    %1450 = vmatprep.subr.mxu0 %v712
    %1451 = vmatpush1.msra.mxu0 %v711
    %1452 = vmatprep.subr.mxu0 %v726
    %1453 = vmatpush1.msra.mxu0 %v725
    %1454 = vmatprep.subr.mxu0 %v740
    %1455 = vmatpush1.msra.mxu0 %v739
    %1456 = vmatprep.subr.mxu0 %v754
    %1457 = vmatpush1.msra.mxu0 %v753
    %1458 = vmatprep.subr.mxu0 %v768
    %1459 = vmatpush1.msra.mxu0 %v767
    %1460 = vmatprep.subr.mxu0 %v782
    %1461 = vmatpush1.msra.mxu0 %v781
    %1462 = vmatprep.subr.mxu0 %v796
    %1463 = vmatpush1.msra.mxu0 %v795
    %1464 = vmatprep.subr.mxu0 %v810
    %1465 = vmatpush1.msra.mxu0 %v809
    %1466 = vmatprep.subr.mxu0 %v824
    %1467 = vmatpush1.msra.mxu0 %v823
    %1468 = vmatprep.subr.mxu0 %v838
    %1469 = vmatpush1.msra.mxu0 %v837
    %1470 = vmatprep.subr.mxu0 %v852
    %1471 = vmatpush1.msra.mxu0 %v851
    %1472 = vmatprep.subr.mxu0 %v866
    %1473 = vmatpush1.msra.mxu0 %v865
    %1474 = vmatprep.subr.mxu0 %v880
    %1475 = vmatpush1.msra.mxu0 %v879
    %1476 = vmatprep.subr.mxu0 %v894
    %1477 = vmatpush1.msra.mxu0 %v893
    %1478 = vmatprep.subr.mxu0 %v908
    %1479 = vmatpush1.msra.mxu0 %v907
    %1480 = vmatprep.subr.mxu0 %v922
    %1481 = vmatpush1.msra.mxu0 %v921
    %1482 = vmatprep.subr.mxu0 %v936
    %1483 = vmatpush1.msra.mxu0 %v935
    %1484 = vmatprep.subr.mxu0 %v950
    %1485 = vmatpush1.msra.mxu0 %v949
    %1486 = vmatprep.subr.mxu0 %v964
    %1487 = vmatpush1.msra.mxu0 %v963
    %1488 = vmatprep.subr.mxu0 %v978
    %1489 = vmatpush1.msra.mxu0 %v977
    %1490 = vmatprep.subr.mxu0 %v992
    %1491 = vmatpush1.msra.mxu0 %v991
    %1492 = vmatprep.subr.mxu0 %v1006
    %1493 = vmatpush1.msra.mxu0 %v1005
    %1494 = vmatprep.subr.mxu0 %v1020
    %1495 = vmatpush1.msra.mxu0 %v1019
    %1496 = vmatprep.subr.mxu0 %v1034
    %1497 = vmatpush1.msra.mxu0 %v1033
    %1498 = vmatprep.subr.mxu0 %v1048
    %1499 = vmatpush1.msra.mxu0 %v1047
    %1500 = vmatprep.subr.mxu0 %v1062
    %1501 = vmatpush1.msra.mxu0 %v1061
    %1502 = vmatprep.subr.mxu0 %v1076
    %1503 = vmatpush1.msra.mxu0 %v1075
    %1504 = vmatprep.mubr.f32.mxu0 %v630
    %1505 = vmatmul.mubr.f32.gmra.mrb[0].mxu0 %v606
    %v1506 = vpop.f32.mrb[0].mxu0
    %v1507 = vadd.f32 0.0, %v1506
    %v1508 = vpop.f32.mrb[0].mxu0
    %v1509 = vadd.f32 0.0, %v1508
    %1510 = vmatprep.mubr.f32.mxu0 %v631
    %1511 = vmatmul.mubr.f32.gmra.mrb[0].mxu0 %v607
    %v1512 = vpop.f32.mrb[0].mxu0
    %v1513 = vadd.f32 0.0, %v1512
    %v1514 = vpop.f32.mrb[0].mxu0
    %v1515 = vadd.f32 0.0, %v1514
    %1516 = vmatprep.mubr.f32.mxu0 %v632
    %1517 = vmatmul.mubr.f32.gmra.mrb[0].mxu0 %v608
    %v1518 = vpop.f32.mrb[0].mxu0
    %v1519 = vadd.f32 0.0, %v1518
    %v1520 = vpop.f32.mrb[0].mxu0
    %v1521 = vadd.f32 0.0, %v1520
    %1522 = vmatprep.mubr.f32.mxu0 %v633
    %1523 = vmatmul.mubr.f32.gmra.mrb[0].mxu0 %v609
    %v1524 = vpop.f32.mrb[0].mxu0
    %v1525 = vadd.f32 0.0, %v1524
    %v1526 = vpop.f32.mrb[0].mxu0
    %v1527 = vadd.f32 0.0, %v1526
    %1528 = vmatprep.mubr.f32.mxu0 %v634
    %1529 = vmatmul.mubr.f32.gmra.mrb[0].mxu0 %v610
    %v1530 = vpop.f32.mrb[0].mxu0
    %v1531 = vadd.f32 0.0, %v1530
    %v1532 = vpop.f32.mrb[0].mxu0
    %v1533 = vadd.f32 0.0, %v1532
    %1534 = vmatprep.mubr.f32.mxu0 %v635
    %1535 = vmatmul.mubr.f32.gmra.mrb[0].mxu0 %v611
    %v1536 = vpop.f32.mrb[0].mxu0
    %v1537 = vadd.f32 0.0, %v1536
    %v1538 = vpop.f32.mrb[0].mxu0
    %v1539 = vadd.f32 0.0, %v1538
    %1540 = vmatprep.mubr.f32.mxu0 %v636
    %1541 = vmatmul.mubr.f32.gmra.mrb[0].mxu0 %v612
    %v1542 = vpop.f32.mrb[0].mxu0
    %v1543 = vadd.f32 0.0, %v1542
    %v1544 = vpop.f32.mrb[0].mxu0
    %v1545 = vadd.f32 0.0, %v1544
    %1546 = vmatprep.mubr.f32.mxu0 %v637
    %1547 = vmatmul.mubr.f32.gmra.mrb[0].mxu0 %v613
    %v1548 = vpop.f32.mrb[0].mxu0
    %v1549 = vadd.f32 0.0, %v1548
    %v1550 = vpop.f32.mrb[0].mxu0
    %v1551 = vadd.f32 0.0, %v1550
    %1552 = vdwg.mxu0
    %1553 = vmatprep.subr.mxu0 %v1090
    %1554 = vmatpush1.msra.mxu0 %v1089
    %1555 = vmatprep.subr.mxu0 %v1104
    %1556 = vmatpush1.msra.mxu0 %v1103
    %1557 = vmatprep.subr.mxu0 %v1118
    %1558 = vmatpush1.msra.mxu0 %v1117
    %1559 = vmatprep.subr.mxu0 %v1132
    %1560 = vmatpush1.msra.mxu0 %v1131
    %1561 = vmatprep.subr.mxu0 %v1146
    %1562 = vmatpush1.msra.mxu0 %v1145
    %1563 = vmatprep.subr.mxu0 %v1160
    %1564 = vmatpush1.msra.mxu0 %v1159
    %1565 = vmatprep.subr.mxu0 %v1174
    %1566 = vmatpush1.msra.mxu0 %v1173
    %1567 = vmatprep.subr.mxu0 %v1188
    %1568 = vmatpush1.msra.mxu0 %v1187
    %1569 = vmatprep.subr.mxu0 0.0
    %1570 = vmatpush1.msra.mxu0 0.0
    %1571 = vmatprep.subr.mxu0 0.0
    %1572 = vmatpush1.msra.mxu0 0.0
    %1573 = vmatprep.subr.mxu0 0.0
    %1574 = vmatpush1.msra.mxu0 0.0
    %1575 = vmatprep.subr.mxu0 0.0
    %1576 = vmatpush1.msra.mxu0 0.0
    %1577 = vmatprep.subr.mxu0 0.0
    %1578 = vmatpush1.msra.mxu0 0.0
    %1579 = vmatprep.subr.mxu0 0.0
    %1580 = vmatpush1.msra.mxu0 0.0
    %1581 = vmatprep.subr.mxu0 0.0
    %1582 = vmatpush1.msra.mxu0 0.0
    %1583 = vmatprep.subr.mxu0 0.0
    %1584 = vmatpush1.msra.mxu0 0.0
    %1585 = vmatprep.subr.mxu0 0.0
    %1586 = vmatpush1.msra.mxu0 0.0
    %1587 = vmatprep.subr.mxu0 0.0
    %1588 = vmatpush1.msra.mxu0 0.0
    %1589 = vmatprep.subr.mxu0 0.0
    %1590 = vmatpush1.msra.mxu0 0.0
    %1591 = vmatprep.subr.mxu0 0.0
    %1592 = vmatpush1.msra.mxu0 0.0
    %1593 = vmatprep.subr.mxu0 0.0
    %1594 = vmatpush1.msra.mxu0 0.0
    %1595 = vmatprep.subr.mxu0 0.0
    %1596 = vmatpush1.msra.mxu0 0.0
    %1597 = vmatprep.subr.mxu0 0.0
    %1598 = vmatpush1.msra.mxu0 0.0
    %1599 = vmatprep.subr.mxu0 0.0
    %1600 = vmatpush1.msra.mxu0 0.0
    %1601 = vmatprep.subr.mxu0 0.0
    %1602 = vmatpush1.msra.mxu0 0.0
    %1603 = vmatprep.subr.mxu0 0.0
    %1604 = vmatpush1.msra.mxu0 0.0
    %1605 = vmatprep.subr.mxu0 0.0
    %1606 = vmatpush1.msra.mxu0 0.0
    %1607 = vmatprep.subr.mxu0 0.0
    %1608 = vmatpush1.msra.mxu0 0.0
    %1609 = vmatprep.subr.mxu0 0.0
    %1610 = vmatpush1.msra.mxu0 0.0
    %1611 = vmatprep.subr.mxu0 0.0
    %1612 = vmatpush1.msra.mxu0 0.0
    %1613 = vmatprep.subr.mxu0 0.0
    %1614 = vmatpush1.msra.mxu0 0.0
    %1615 = vmatprep.subr.mxu0 0.0
    %1616 = vmatpush1.msra.mxu0 0.0
    %1617 = vmatprep.mubr.f32.mxu0 0.0
    %1618 = vmatmul.mubr.f32.gmra.mrb[0].mxu0 %v1200
    %v1619 = vpop.f32.mrb[0].mxu0
    %v1620 = vadd.f32 %v1507, %v1619
    %v1621 = vpop.f32.mrb[0].mxu0
    %v1622 = vadd.f32 %v1509, %v1621
    %1623 = vmatprep.mubr.f32.mxu0 0.0
    %1624 = vmatmul.mubr.f32.gmra.mrb[0].mxu0 %v1203
    %v1625 = vpop.f32.mrb[0].mxu0
    %v1626 = vadd.f32 %v1513, %v1625
    %v1627 = vpop.f32.mrb[0].mxu0
    %v1628 = vadd.f32 %v1515, %v1627
    %1629 = vmatprep.mubr.f32.mxu0 0.0
    %1630 = vmatmul.mubr.f32.gmra.mrb[0].mxu0 %v1206
    %v1631 = vpop.f32.mrb[0].mxu0
    %v1632 = vadd.f32 %v1519, %v1631
    %v1633 = vpop.f32.mrb[0].mxu0
    %v1634 = vadd.f32 %v1521, %v1633
    %1635 = vmatprep.mubr.f32.mxu0 0.0
    %1636 = vmatmul.mubr.f32.gmra.mrb[0].mxu0 %v1203
    %v1637 = vpop.f32.mrb[0].mxu0
    %v1638 = vadd.f32 %v1525, %v1637
    %v1639 = vpop.f32.mrb[0].mxu0
    %v1640 = vadd.f32 %v1527, %v1639
    %1641 = vmatprep.mubr.f32.mxu0 0.0
    %1642 = vmatmul.mubr.f32.gmra.mrb[0].mxu0 %v1209
    %v1643 = vpop.f32.mrb[0].mxu0
    %v1644 = vadd.f32 %v1531, %v1643
    %v1645 = vpop.f32.mrb[0].mxu0
    %v1646 = vadd.f32 %v1533, %v1645
    %1647 = vmatprep.mubr.f32.mxu0 0.0
    %1648 = vmatmul.mubr.f32.gmra.mrb[0].mxu0 %v1203
    %v1649 = vpop.f32.mrb[0].mxu0
    %v1650 = vadd.f32 %v1537, %v1649
    %v1651 = vpop.f32.mrb[0].mxu0
    %v1652 = vadd.f32 %v1539, %v1651
    %1653 = vmatprep.mubr.f32.mxu0 0.0
    %1654 = vmatmul.mubr.f32.gmra.mrb[0].mxu0 %v1212
    %v1655 = vpop.f32.mrb[0].mxu0
    %v1656 = vadd.f32 %v1543, %v1655
    %v1657 = vpop.f32.mrb[0].mxu0
    %v1658 = vadd.f32 %v1545, %v1657
    %1659 = vmatprep.mubr.f32.mxu0 0.0
    %1660 = vmatmul.mubr.f32.gmra.mrb[0].mxu0 %v1203
    %v1661 = vpop.f32.mrb[0].mxu0
    %v1662 = vadd.f32 %v1549, %v1661
    %v1663 = vpop.f32.mrb[0].mxu0
    %v1664 = vadd.f32 %v1551, %v1663
    %1665 = vdwg.mxu0
    %1666 = vmatprep.subr.mxu0 %v644
    %1667 = vmatpush1.msra.mxu0 %v643
    %1668 = vmatprep.subr.mxu0 %v658
    %1669 = vmatpush1.msra.mxu0 %v657
    %1670 = vmatprep.subr.mxu0 %v672
    %1671 = vmatpush1.msra.mxu0 %v671
    %1672 = vmatprep.subr.mxu0 %v686
    %1673 = vmatpush1.msra.mxu0 %v685
    %1674 = vmatprep.subr.mxu0 %v700
    %1675 = vmatpush1.msra.mxu0 %v699
    %1676 = vmatprep.subr.mxu0 %v714
    %1677 = vmatpush1.msra.mxu0 %v713
    %1678 = vmatprep.subr.mxu0 %v728
    %1679 = vmatpush1.msra.mxu0 %v727
    %1680 = vmatprep.subr.mxu0 %v742
    %1681 = vmatpush1.msra.mxu0 %v741
    %1682 = vmatprep.subr.mxu0 %v756
    %1683 = vmatpush1.msra.mxu0 %v755
    %1684 = vmatprep.subr.mxu0 %v770
    %1685 = vmatpush1.msra.mxu0 %v769
    %1686 = vmatprep.subr.mxu0 %v784
    %1687 = vmatpush1.msra.mxu0 %v783
    %1688 = vmatprep.subr.mxu0 %v798
    %1689 = vmatpush1.msra.mxu0 %v797
    %1690 = vmatprep.subr.mxu0 %v812
    %1691 = vmatpush1.msra.mxu0 %v811
    %1692 = vmatprep.subr.mxu0 %v826
    %1693 = vmatpush1.msra.mxu0 %v825
    %1694 = vmatprep.subr.mxu0 %v840
    %1695 = vmatpush1.msra.mxu0 %v839
    %1696 = vmatprep.subr.mxu0 %v854
    %1697 = vmatpush1.msra.mxu0 %v853
    %1698 = vmatprep.subr.mxu0 %v868
    %1699 = vmatpush1.msra.mxu0 %v867
    %1700 = vmatprep.subr.mxu0 %v882
    %1701 = vmatpush1.msra.mxu0 %v881
    %1702 = vmatprep.subr.mxu0 %v896
    %1703 = vmatpush1.msra.mxu0 %v895
    %1704 = vmatprep.subr.mxu0 %v910
    %1705 = vmatpush1.msra.mxu0 %v909
    %1706 = vmatprep.subr.mxu0 %v924
    %1707 = vmatpush1.msra.mxu0 %v923
    %1708 = vmatprep.subr.mxu0 %v938
    %1709 = vmatpush1.msra.mxu0 %v937
    %1710 = vmatprep.subr.mxu0 %v952
    %1711 = vmatpush1.msra.mxu0 %v951
    %1712 = vmatprep.subr.mxu0 %v966
    %1713 = vmatpush1.msra.mxu0 %v965
    %1714 = vmatprep.subr.mxu0 %v980
    %1715 = vmatpush1.msra.mxu0 %v979
    %1716 = vmatprep.subr.mxu0 %v994
    %1717 = vmatpush1.msra.mxu0 %v993
    %1718 = vmatprep.subr.mxu0 %v1008
    %1719 = vmatpush1.msra.mxu0 %v1007
    %1720 = vmatprep.subr.mxu0 %v1022
    %1721 = vmatpush1.msra.mxu0 %v1021
    %1722 = vmatprep.subr.mxu0 %v1036
    %1723 = vmatpush1.msra.mxu0 %v1035
    %1724 = vmatprep.subr.mxu0 %v1050
    %1725 = vmatpush1.msra.mxu0 %v1049
    %1726 = vmatprep.subr.mxu0 %v1064
    %1727 = vmatpush1.msra.mxu0 %v1063
    %1728 = vmatprep.subr.mxu0 %v1078
    %1729 = vmatpush1.msra.mxu0 %v1077
    %1730 = vmatprep.mubr.f32.mxu0 %v630
    %1731 = vmatmul.mubr.f32.gmra.mrb[0].mxu0 %v606
    %v1732 = vpop.f32.mrb[0].mxu0
    %v1733 = vadd.f32 0.0, %v1732
    %v1734 = vpop.f32.mrb[0].mxu0
    %v1735 = vadd.f32 0.0, %v1734
    %1736 = vmatprep.mubr.f32.mxu0 %v631
    %1737 = vmatmul.mubr.f32.gmra.mrb[0].mxu0 %v607
    %v1738 = vpop.f32.mrb[0].mxu0
    %v1739 = vadd.f32 0.0, %v1738
    %v1740 = vpop.f32.mrb[0].mxu0
    %v1741 = vadd.f32 0.0, %v1740
    %1742 = vmatprep.mubr.f32.mxu0 %v632
    %1743 = vmatmul.mubr.f32.gmra.mrb[0].mxu0 %v608
    %v1744 = vpop.f32.mrb[0].mxu0
    %v1745 = vadd.f32 0.0, %v1744
    %v1746 = vpop.f32.mrb[0].mxu0
    %v1747 = vadd.f32 0.0, %v1746
    %1748 = vmatprep.mubr.f32.mxu0 %v633
    %1749 = vmatmul.mubr.f32.gmra.mrb[0].mxu0 %v609
    %v1750 = vpop.f32.mrb[0].mxu0
    %v1751 = vadd.f32 0.0, %v1750
    %v1752 = vpop.f32.mrb[0].mxu0
    %v1753 = vadd.f32 0.0, %v1752
    %1754 = vmatprep.mubr.f32.mxu0 %v634
    %1755 = vmatmul.mubr.f32.gmra.mrb[0].mxu0 %v610
    %v1756 = vpop.f32.mrb[0].mxu0
    %v1757 = vadd.f32 0.0, %v1756
    %v1758 = vpop.f32.mrb[0].mxu0
    %v1759 = vadd.f32 0.0, %v1758
    %1760 = vmatprep.mubr.f32.mxu0 %v635
    %1761 = vmatmul.mubr.f32.gmra.mrb[0].mxu0 %v611
    %v1762 = vpop.f32.mrb[0].mxu0
    %v1763 = vadd.f32 0.0, %v1762
    %v1764 = vpop.f32.mrb[0].mxu0
    %v1765 = vadd.f32 0.0, %v1764
    %1766 = vmatprep.mubr.f32.mxu0 %v636
    %1767 = vmatmul.mubr.f32.gmra.mrb[0].mxu0 %v612
    %v1768 = vpop.f32.mrb[0].mxu0
    %v1769 = vadd.f32 0.0, %v1768
    %v1770 = vpop.f32.mrb[0].mxu0
    %v1771 = vadd.f32 0.0, %v1770
    %1772 = vmatprep.mubr.f32.mxu0 %v637
    %1773 = vmatmul.mubr.f32.gmra.mrb[0].mxu0 %v613
    %v1774 = vpop.f32.mrb[0].mxu0
    %v1775 = vadd.f32 0.0, %v1774
    %v1776 = vpop.f32.mrb[0].mxu0
    %v1777 = vadd.f32 0.0, %v1776
    %1778 = vdwg.mxu0
    %1779 = vmatprep.subr.mxu0 %v1092
    %1780 = vmatpush1.msra.mxu0 %v1091
    %1781 = vmatprep.subr.mxu0 %v1106
    %1782 = vmatpush1.msra.mxu0 %v1105
    %1783 = vmatprep.subr.mxu0 %v1120
    %1784 = vmatpush1.msra.mxu0 %v1119
    %1785 = vmatprep.subr.mxu0 %v1134
    %1786 = vmatpush1.msra.mxu0 %v1133
    %1787 = vmatprep.subr.mxu0 %v1148
    %1788 = vmatpush1.msra.mxu0 %v1147
    %1789 = vmatprep.subr.mxu0 %v1162
    %1790 = vmatpush1.msra.mxu0 %v1161
    %1791 = vmatprep.subr.mxu0 %v1176
    %1792 = vmatpush1.msra.mxu0 %v1175
    %1793 = vmatprep.subr.mxu0 %v1190
    %1794 = vmatpush1.msra.mxu0 %v1189
    %1795 = vmatprep.subr.mxu0 0.0
    %1796 = vmatpush1.msra.mxu0 0.0
    %1797 = vmatprep.subr.mxu0 0.0
    %1798 = vmatpush1.msra.mxu0 0.0
    %1799 = vmatprep.subr.mxu0 0.0
    %1800 = vmatpush1.msra.mxu0 0.0
    %1801 = vmatprep.subr.mxu0 0.0
    %1802 = vmatpush1.msra.mxu0 0.0
    %1803 = vmatprep.subr.mxu0 0.0
    %1804 = vmatpush1.msra.mxu0 0.0
    %1805 = vmatprep.subr.mxu0 0.0
    %1806 = vmatpush1.msra.mxu0 0.0
    %1807 = vmatprep.subr.mxu0 0.0
    %1808 = vmatpush1.msra.mxu0 0.0
    %1809 = vmatprep.subr.mxu0 0.0
    %1810 = vmatpush1.msra.mxu0 0.0
    %1811 = vmatprep.subr.mxu0 0.0
    %1812 = vmatpush1.msra.mxu0 0.0
    %1813 = vmatprep.subr.mxu0 0.0
    %1814 = vmatpush1.msra.mxu0 0.0
    %1815 = vmatprep.subr.mxu0 0.0
    %1816 = vmatpush1.msra.mxu0 0.0
    %1817 = vmatprep.subr.mxu0 0.0
    %1818 = vmatpush1.msra.mxu0 0.0
    %1819 = vmatprep.subr.mxu0 0.0
    %1820 = vmatpush1.msra.mxu0 0.0
    %1821 = vmatprep.subr.mxu0 0.0
    %1822 = vmatpush1.msra.mxu0 0.0
    %1823 = vmatprep.subr.mxu0 0.0
    %1824 = vmatpush1.msra.mxu0 0.0
    %1825 = vmatprep.subr.mxu0 0.0
    %1826 = vmatpush1.msra.mxu0 0.0
    %1827 = vmatprep.subr.mxu0 0.0
    %1828 = vmatpush1.msra.mxu0 0.0
    %1829 = vmatprep.subr.mxu0 0.0
    %1830 = vmatpush1.msra.mxu0 0.0
    %1831 = vmatprep.subr.mxu0 0.0
    %1832 = vmatpush1.msra.mxu0 0.0
    %1833 = vmatprep.subr.mxu0 0.0
    %1834 = vmatpush1.msra.mxu0 0.0
    %1835 = vmatprep.subr.mxu0 0.0
    %1836 = vmatpush1.msra.mxu0 0.0
    %1837 = vmatprep.subr.mxu0 0.0
    %1838 = vmatpush1.msra.mxu0 0.0
    %1839 = vmatprep.subr.mxu0 0.0
    %1840 = vmatpush1.msra.mxu0 0.0
    %1841 = vmatprep.subr.mxu0 0.0
    %1842 = vmatpush1.msra.mxu0 0.0
    %1843 = vmatprep.mubr.f32.mxu0 0.0
    %1844 = vmatmul.mubr.f32.gmra.mrb[0].mxu0 %v1200
    %v1845 = vpop.f32.mrb[0].mxu0
    %v1846 = vadd.f32 %v1733, %v1845
    %v1847 = vpop.f32.mrb[0].mxu0
    %v1848 = vadd.f32 %v1735, %v1847
    %1849 = vmatprep.mubr.f32.mxu0 0.0
    %1850 = vmatmul.mubr.f32.gmra.mrb[0].mxu0 %v1203
    %v1851 = vpop.f32.mrb[0].mxu0
    %v1852 = vadd.f32 %v1739, %v1851
    %v1853 = vpop.f32.mrb[0].mxu0
    %v1854 = vadd.f32 %v1741, %v1853
    %1855 = vmatprep.mubr.f32.mxu0 0.0
    %1856 = vmatmul.mubr.f32.gmra.mrb[0].mxu0 %v1206
    %v1857 = vpop.f32.mrb[0].mxu0
    %v1858 = vadd.f32 %v1745, %v1857
    %v1859 = vpop.f32.mrb[0].mxu0
    %v1860 = vadd.f32 %v1747, %v1859
    %1861 = vmatprep.mubr.f32.mxu0 0.0
    %1862 = vmatmul.mubr.f32.gmra.mrb[0].mxu0 %v1203
    %v1863 = vpop.f32.mrb[0].mxu0
    %v1864 = vadd.f32 %v1751, %v1863
    %v1865 = vpop.f32.mrb[0].mxu0
    %v1866 = vadd.f32 %v1753, %v1865
    %1867 = vmatprep.mubr.f32.mxu0 0.0
    %1868 = vmatmul.mubr.f32.gmra.mrb[0].mxu0 %v1209
    %v1869 = vpop.f32.mrb[0].mxu0
    %v1870 = vadd.f32 %v1757, %v1869
    %v1871 = vpop.f32.mrb[0].mxu0
    %v1872 = vadd.f32 %v1759, %v1871
    %1873 = vmatprep.mubr.f32.mxu0 0.0
    %1874 = vmatmul.mubr.f32.gmra.mrb[0].mxu0 %v1203
    %v1875 = vpop.f32.mrb[0].mxu0
    %v1876 = vadd.f32 %v1763, %v1875
    %v1877 = vpop.f32.mrb[0].mxu0
    %v1878 = vadd.f32 %v1765, %v1877
    %1879 = vmatprep.mubr.f32.mxu0 0.0
    %1880 = vmatmul.mubr.f32.gmra.mrb[0].mxu0 %v1212
    %v1881 = vpop.f32.mrb[0].mxu0
    %v1882 = vadd.f32 %v1769, %v1881
    %v1883 = vpop.f32.mrb[0].mxu0
    %v1884 = vadd.f32 %v1771, %v1883
    %1885 = vmatprep.mubr.f32.mxu0 0.0
    %1886 = vmatmul.mubr.f32.gmra.mrb[0].mxu0 %v1203
    %v1887 = vpop.f32.mrb[0].mxu0
    %v1888 = vadd.f32 %v1775, %v1887
    %v1889 = vpop.f32.mrb[0].mxu0
    %v1890 = vadd.f32 %v1777, %v1889
    %1891 = vdwg.mxu0
    %1892 = vmatprep.subr.mxu0 %v646
    %1893 = vmatpush1.msra.mxu0 %v645
    %1894 = vmatprep.subr.mxu0 %v660
    %1895 = vmatpush1.msra.mxu0 %v659
    %1896 = vmatprep.subr.mxu0 %v674
    %1897 = vmatpush1.msra.mxu0 %v673
    %1898 = vmatprep.subr.mxu0 %v688
    %1899 = vmatpush1.msra.mxu0 %v687
    %1900 = vmatprep.subr.mxu0 %v702
    %1901 = vmatpush1.msra.mxu0 %v701
    %1902 = vmatprep.subr.mxu0 %v716
    %1903 = vmatpush1.msra.mxu0 %v715
    %1904 = vmatprep.subr.mxu0 %v730
    %1905 = vmatpush1.msra.mxu0 %v729
    %1906 = vmatprep.subr.mxu0 %v744
    %1907 = vmatpush1.msra.mxu0 %v743
    %1908 = vmatprep.subr.mxu0 %v758
    %1909 = vmatpush1.msra.mxu0 %v757
    %1910 = vmatprep.subr.mxu0 %v772
    %1911 = vmatpush1.msra.mxu0 %v771
    %1912 = vmatprep.subr.mxu0 %v786
    %1913 = vmatpush1.msra.mxu0 %v785
    %1914 = vmatprep.subr.mxu0 %v800
    %1915 = vmatpush1.msra.mxu0 %v799
    %1916 = vmatprep.subr.mxu0 %v814
    %1917 = vmatpush1.msra.mxu0 %v813
    %1918 = vmatprep.subr.mxu0 %v828
    %1919 = vmatpush1.msra.mxu0 %v827
    %1920 = vmatprep.subr.mxu0 %v842
    %1921 = vmatpush1.msra.mxu0 %v841
    %1922 = vmatprep.subr.mxu0 %v856
    %1923 = vmatpush1.msra.mxu0 %v855
    %1924 = vmatprep.subr.mxu0 %v870
    %1925 = vmatpush1.msra.mxu0 %v869
    %1926 = vmatprep.subr.mxu0 %v884
    %1927 = vmatpush1.msra.mxu0 %v883
    %1928 = vmatprep.subr.mxu0 %v898
    %1929 = vmatpush1.msra.mxu0 %v897
    %1930 = vmatprep.subr.mxu0 %v912
    %1931 = vmatpush1.msra.mxu0 %v911
    %1932 = vmatprep.subr.mxu0 %v926
    %1933 = vmatpush1.msra.mxu0 %v925
    %1934 = vmatprep.subr.mxu0 %v940
    %1935 = vmatpush1.msra.mxu0 %v939
    %1936 = vmatprep.subr.mxu0 %v954
    %1937 = vmatpush1.msra.mxu0 %v953
    %1938 = vmatprep.subr.mxu0 %v968
    %1939 = vmatpush1.msra.mxu0 %v967
    %1940 = vmatprep.subr.mxu0 %v982
    %1941 = vmatpush1.msra.mxu0 %v981
    %1942 = vmatprep.subr.mxu0 %v996
    %1943 = vmatpush1.msra.mxu0 %v995
    %1944 = vmatprep.subr.mxu0 %v1010
    %1945 = vmatpush1.msra.mxu0 %v1009
    %1946 = vmatprep.subr.mxu0 %v1024
    %1947 = vmatpush1.msra.mxu0 %v1023
    %1948 = vmatprep.subr.mxu0 %v1038
    %1949 = vmatpush1.msra.mxu0 %v1037
    %1950 = vmatprep.subr.mxu0 %v1052
    %1951 = vmatpush1.msra.mxu0 %v1051
    %1952 = vmatprep.subr.mxu0 %v1066
    %1953 = vmatpush1.msra.mxu0 %v1065
    %1954 = vmatprep.subr.mxu0 %v1080
    %1955 = vmatpush1.msra.mxu0 %v1079
    %1956 = vmatprep.mubr.f32.mxu0 %v630
    %1957 = vmatmul.mubr.f32.gmra.mrb[0].mxu0 %v606
    %v1958 = vpop.f32.mrb[0].mxu0
    %v1959 = vadd.f32 0.0, %v1958
    %v1960 = vpop.f32.mrb[0].mxu0
    %v1961 = vadd.f32 0.0, %v1960
    %1962 = vmatprep.mubr.f32.mxu0 %v631
    %1963 = vmatmul.mubr.f32.gmra.mrb[0].mxu0 %v607
    %v1964 = vpop.f32.mrb[0].mxu0
    %v1965 = vadd.f32 0.0, %v1964
    %v1966 = vpop.f32.mrb[0].mxu0
    %v1967 = vadd.f32 0.0, %v1966
    %1968 = vmatprep.mubr.f32.mxu0 %v632
    %1969 = vmatmul.mubr.f32.gmra.mrb[0].mxu0 %v608
    %v1970 = vpop.f32.mrb[0].mxu0
    %v1971 = vadd.f32 0.0, %v1970
    %v1972 = vpop.f32.mrb[0].mxu0
    %v1973 = vadd.f32 0.0, %v1972
    %1974 = vmatprep.mubr.f32.mxu0 %v633
    %1975 = vmatmul.mubr.f32.gmra.mrb[0].mxu0 %v609
    %v1976 = vpop.f32.mrb[0].mxu0
    %v1977 = vadd.f32 0.0, %v1976
    %v1978 = vpop.f32.mrb[0].mxu0
    %v1979 = vadd.f32 0.0, %v1978
    %1980 = vmatprep.mubr.f32.mxu0 %v634
    %1981 = vmatmul.mubr.f32.gmra.mrb[0].mxu0 %v610
    %v1982 = vpop.f32.mrb[0].mxu0
    %v1983 = vadd.f32 0.0, %v1982
    %v1984 = vpop.f32.mrb[0].mxu0
    %v1985 = vadd.f32 0.0, %v1984
    %1986 = vmatprep.mubr.f32.mxu0 %v635
    %1987 = vmatmul.mubr.f32.gmra.mrb[0].mxu0 %v611
    %v1988 = vpop.f32.mrb[0].mxu0
    %v1989 = vadd.f32 0.0, %v1988
    %v1990 = vpop.f32.mrb[0].mxu0
    %v1991 = vadd.f32 0.0, %v1990
    %1992 = vmatprep.mubr.f32.mxu0 %v636
    %1993 = vmatmul.mubr.f32.gmra.mrb[0].mxu0 %v612
    %v1994 = vpop.f32.mrb[0].mxu0
    %v1995 = vadd.f32 0.0, %v1994
    %v1996 = vpop.f32.mrb[0].mxu0
    %v1997 = vadd.f32 0.0, %v1996
    %1998 = vmatprep.mubr.f32.mxu0 %v637
    %1999 = vmatmul.mubr.f32.gmra.mrb[0].mxu0 %v613
    %v2000 = vpop.f32.mrb[0].mxu0
    %v2001 = vadd.f32 0.0, %v2000
    %v2002 = vpop.f32.mrb[0].mxu0
    %v2003 = vadd.f32 0.0, %v2002
    %2004 = vdwg.mxu0
    %2005 = vmatprep.subr.mxu0 %v1094
    %2006 = vmatpush1.msra.mxu0 %v1093
    %2007 = vmatprep.subr.mxu0 %v1108
    %2008 = vmatpush1.msra.mxu0 %v1107
    %2009 = vmatprep.subr.mxu0 %v1122
    %2010 = vmatpush1.msra.mxu0 %v1121
    %2011 = vmatprep.subr.mxu0 %v1136
    %2012 = vmatpush1.msra.mxu0 %v1135
    %2013 = vmatprep.subr.mxu0 %v1150
    %2014 = vmatpush1.msra.mxu0 %v1149
    %2015 = vmatprep.subr.mxu0 %v1164
    %2016 = vmatpush1.msra.mxu0 %v1163
    %2017 = vmatprep.subr.mxu0 %v1178
    %2018 = vmatpush1.msra.mxu0 %v1177
    %2019 = vmatprep.subr.mxu0 %v1192
    %2020 = vmatpush1.msra.mxu0 %v1191
    %2021 = vmatprep.subr.mxu0 0.0
    %2022 = vmatpush1.msra.mxu0 0.0
    %2023 = vmatprep.subr.mxu0 0.0
    %2024 = vmatpush1.msra.mxu0 0.0
    %2025 = vmatprep.subr.mxu0 0.0
    %2026 = vmatpush1.msra.mxu0 0.0
    %2027 = vmatprep.subr.mxu0 0.0
    %2028 = vmatpush1.msra.mxu0 0.0
    %2029 = vmatprep.subr.mxu0 0.0
    %2030 = vmatpush1.msra.mxu0 0.0
    %2031 = vmatprep.subr.mxu0 0.0
    %2032 = vmatpush1.msra.mxu0 0.0
    %2033 = vmatprep.subr.mxu0 0.0
    %2034 = vmatpush1.msra.mxu0 0.0
    %2035 = vmatprep.subr.mxu0 0.0
    %2036 = vmatpush1.msra.mxu0 0.0
    %2037 = vmatprep.subr.mxu0 0.0
    %2038 = vmatpush1.msra.mxu0 0.0
    %2039 = vmatprep.subr.mxu0 0.0
    %2040 = vmatpush1.msra.mxu0 0.0
    %2041 = vmatprep.subr.mxu0 0.0
    %2042 = vmatpush1.msra.mxu0 0.0
    %2043 = vmatprep.subr.mxu0 0.0
    %2044 = vmatpush1.msra.mxu0 0.0
    %2045 = vmatprep.subr.mxu0 0.0
    %2046 = vmatpush1.msra.mxu0 0.0
    %2047 = vmatprep.subr.mxu0 0.0
    %2048 = vmatpush1.msra.mxu0 0.0
    %2049 = vmatprep.subr.mxu0 0.0
    %2050 = vmatpush1.msra.mxu0 0.0
    %2051 = vmatprep.subr.mxu0 0.0
    %2052 = vmatpush1.msra.mxu0 0.0
    %2053 = vmatprep.subr.mxu0 0.0
    %2054 = vmatpush1.msra.mxu0 0.0
    %2055 = vmatprep.subr.mxu0 0.0
    %2056 = vmatpush1.msra.mxu0 0.0
    %2057 = vmatprep.subr.mxu0 0.0
    %2058 = vmatpush1.msra.mxu0 0.0
    %2059 = vmatprep.subr.mxu0 0.0
    %2060 = vmatpush1.msra.mxu0 0.0
    %2061 = vmatprep.subr.mxu0 0.0
    %2062 = vmatpush1.msra.mxu0 0.0
    %2063 = vmatprep.subr.mxu0 0.0
    %2064 = vmatpush1.msra.mxu0 0.0
    %2065 = vmatprep.subr.mxu0 0.0
    %2066 = vmatpush1.msra.mxu0 0.0
    %2067 = vmatprep.subr.mxu0 0.0
    %2068 = vmatpush1.msra.mxu0 0.0
    %2069 = vmatprep.mubr.f32.mxu0 0.0
    %2070 = vmatmul.mubr.f32.gmra.mrb[0].mxu0 %v1200
    %v2071 = vpop.f32.mrb[0].mxu0
    %v2072 = vadd.f32 %v1959, %v2071
    %v2073 = vpop.f32.mrb[0].mxu0
    %v2074 = vadd.f32 %v1961, %v2073
    %2075 = vmatprep.mubr.f32.mxu0 0.0
    %2076 = vmatmul.mubr.f32.gmra.mrb[0].mxu0 %v1203
    %v2077 = vpop.f32.mrb[0].mxu0
    %v2078 = vadd.f32 %v1965, %v2077
    %v2079 = vpop.f32.mrb[0].mxu0
    %v2080 = vadd.f32 %v1967, %v2079
    %2081 = vmatprep.mubr.f32.mxu0 0.0
    %2082 = vmatmul.mubr.f32.gmra.mrb[0].mxu0 %v1206
    %v2083 = vpop.f32.mrb[0].mxu0
    %v2084 = vadd.f32 %v1971, %v2083
    %v2085 = vpop.f32.mrb[0].mxu0
    %v2086 = vadd.f32 %v1973, %v2085
    %2087 = vmatprep.mubr.f32.mxu0 0.0
    %2088 = vmatmul.mubr.f32.gmra.mrb[0].mxu0 %v1203
    %v2089 = vpop.f32.mrb[0].mxu0
    %v2090 = vadd.f32 %v1977, %v2089
    %v2091 = vpop.f32.mrb[0].mxu0
    %v2092 = vadd.f32 %v1979, %v2091
    %2093 = vmatprep.mubr.f32.mxu0 0.0
    %2094 = vmatmul.mubr.f32.gmra.mrb[0].mxu0 %v1209
    %v2095 = vpop.f32.mrb[0].mxu0
    %v2096 = vadd.f32 %v1983, %v2095
    %v2097 = vpop.f32.mrb[0].mxu0
    %v2098 = vadd.f32 %v1985, %v2097
    %2099 = vmatprep.mubr.f32.mxu0 0.0
    %2100 = vmatmul.mubr.f32.gmra.mrb[0].mxu0 %v1203
    %v2101 = vpop.f32.mrb[0].mxu0
    %v2102 = vadd.f32 %v1989, %v2101
    %v2103 = vpop.f32.mrb[0].mxu0
    %v2104 = vadd.f32 %v1991, %v2103
    %2105 = vmatprep.mubr.f32.mxu0 0.0
    %2106 = vmatmul.mubr.f32.gmra.mrb[0].mxu0 %v1212
    %v2107 = vpop.f32.mrb[0].mxu0
    %v2108 = vadd.f32 %v1995, %v2107
    %v2109 = vpop.f32.mrb[0].mxu0
    %v2110 = vadd.f32 %v1997, %v2109
    %2111 = vmatprep.mubr.f32.mxu0 0.0
    %2112 = vmatmul.mubr.f32.gmra.mrb[0].mxu0 %v1203
    %v2113 = vpop.f32.mrb[0].mxu0
    %v2114 = vadd.f32 %v2001, %v2113
    %v2115 = vpop.f32.mrb[0].mxu0
    %v2116 = vadd.f32 %v2003, %v2115
    %2117 = vdwg.mxu0
    %2118 = vmatprep.subr.mxu0 %v648
    %2119 = vmatpush1.msra.mxu0 %v647
    %2120 = vmatprep.subr.mxu0 %v662
    %2121 = vmatpush1.msra.mxu0 %v661
    %2122 = vmatprep.subr.mxu0 %v676
    %2123 = vmatpush1.msra.mxu0 %v675
    %2124 = vmatprep.subr.mxu0 %v690
    %2125 = vmatpush1.msra.mxu0 %v689
    %2126 = vmatprep.subr.mxu0 %v704
    %2127 = vmatpush1.msra.mxu0 %v703
    %2128 = vmatprep.subr.mxu0 %v718
    %2129 = vmatpush1.msra.mxu0 %v717
    %2130 = vmatprep.subr.mxu0 %v732
    %2131 = vmatpush1.msra.mxu0 %v731
    %2132 = vmatprep.subr.mxu0 %v746
    %2133 = vmatpush1.msra.mxu0 %v745
    %2134 = vmatprep.subr.mxu0 %v760
    %2135 = vmatpush1.msra.mxu0 %v759
    %2136 = vmatprep.subr.mxu0 %v774
    %2137 = vmatpush1.msra.mxu0 %v773
    %2138 = vmatprep.subr.mxu0 %v788
    %2139 = vmatpush1.msra.mxu0 %v787
    %2140 = vmatprep.subr.mxu0 %v802
    %2141 = vmatpush1.msra.mxu0 %v801
    %2142 = vmatprep.subr.mxu0 %v816
    %2143 = vmatpush1.msra.mxu0 %v815
    %2144 = vmatprep.subr.mxu0 %v830
    %2145 = vmatpush1.msra.mxu0 %v829
    %2146 = vmatprep.subr.mxu0 %v844
    %2147 = vmatpush1.msra.mxu0 %v843
    %2148 = vmatprep.subr.mxu0 %v858
    %2149 = vmatpush1.msra.mxu0 %v857
    %2150 = vmatprep.subr.mxu0 %v872
    %2151 = vmatpush1.msra.mxu0 %v871
    %2152 = vmatprep.subr.mxu0 %v886
    %2153 = vmatpush1.msra.mxu0 %v885
    %2154 = vmatprep.subr.mxu0 %v900
    %2155 = vmatpush1.msra.mxu0 %v899
    %2156 = vmatprep.subr.mxu0 %v914
    %2157 = vmatpush1.msra.mxu0 %v913
    %2158 = vmatprep.subr.mxu0 %v928
    %2159 = vmatpush1.msra.mxu0 %v927
    %2160 = vmatprep.subr.mxu0 %v942
    %2161 = vmatpush1.msra.mxu0 %v941
    %2162 = vmatprep.subr.mxu0 %v956
    %2163 = vmatpush1.msra.mxu0 %v955
    %2164 = vmatprep.subr.mxu0 %v970
    %2165 = vmatpush1.msra.mxu0 %v969
    %2166 = vmatprep.subr.mxu0 %v984
    %2167 = vmatpush1.msra.mxu0 %v983
    %2168 = vmatprep.subr.mxu0 %v998
    %2169 = vmatpush1.msra.mxu0 %v997
    %2170 = vmatprep.subr.mxu0 %v1012
    %2171 = vmatpush1.msra.mxu0 %v1011
    %2172 = vmatprep.subr.mxu0 %v1026
    %2173 = vmatpush1.msra.mxu0 %v1025
    %2174 = vmatprep.subr.mxu0 %v1040
    %2175 = vmatpush1.msra.mxu0 %v1039
    %2176 = vmatprep.subr.mxu0 %v1054
    %2177 = vmatpush1.msra.mxu0 %v1053
    %2178 = vmatprep.subr.mxu0 %v1068
    %2179 = vmatpush1.msra.mxu0 %v1067
    %2180 = vmatprep.subr.mxu0 %v1082
    %2181 = vmatpush1.msra.mxu0 %v1081
    %2182 = vmatprep.mubr.f32.mxu0 %v630
    %2183 = vmatmul.mubr.f32.gmra.mrb[0].mxu0 %v606
    %v2184 = vpop.f32.mrb[0].mxu0
    %v2185 = vadd.f32 0.0, %v2184
    %v2186 = vpop.f32.mrb[0].mxu0
    %v2187 = vadd.f32 0.0, %v2186
    %2188 = vmatprep.mubr.f32.mxu0 %v631
    %2189 = vmatmul.mubr.f32.gmra.mrb[0].mxu0 %v607
    %v2190 = vpop.f32.mrb[0].mxu0
    %v2191 = vadd.f32 0.0, %v2190
    %v2192 = vpop.f32.mrb[0].mxu0
    %v2193 = vadd.f32 0.0, %v2192
    %2194 = vmatprep.mubr.f32.mxu0 %v632
    %2195 = vmatmul.mubr.f32.gmra.mrb[0].mxu0 %v608
    %v2196 = vpop.f32.mrb[0].mxu0
    %v2197 = vadd.f32 0.0, %v2196
    %v2198 = vpop.f32.mrb[0].mxu0
    %v2199 = vadd.f32 0.0, %v2198
    %2200 = vmatprep.mubr.f32.mxu0 %v633
    %2201 = vmatmul.mubr.f32.gmra.mrb[0].mxu0 %v609
    %v2202 = vpop.f32.mrb[0].mxu0
    %v2203 = vadd.f32 0.0, %v2202
    %v2204 = vpop.f32.mrb[0].mxu0
    %v2205 = vadd.f32 0.0, %v2204
    %2206 = vmatprep.mubr.f32.mxu0 %v634
    %2207 = vmatmul.mubr.f32.gmra.mrb[0].mxu0 %v610
    %v2208 = vpop.f32.mrb[0].mxu0
    %v2209 = vadd.f32 0.0, %v2208
    %v2210 = vpop.f32.mrb[0].mxu0
    %v2211 = vadd.f32 0.0, %v2210
    %2212 = vmatprep.mubr.f32.mxu0 %v635
    %2213 = vmatmul.mubr.f32.gmra.mrb[0].mxu0 %v611
    %v2214 = vpop.f32.mrb[0].mxu0
    %v2215 = vadd.f32 0.0, %v2214
    %v2216 = vpop.f32.mrb[0].mxu0
    %v2217 = vadd.f32 0.0, %v2216
    %2218 = vmatprep.mubr.f32.mxu0 %v636
    %2219 = vmatmul.mubr.f32.gmra.mrb[0].mxu0 %v612
    %v2220 = vpop.f32.mrb[0].mxu0
    %v2221 = vadd.f32 0.0, %v2220
    %v2222 = vpop.f32.mrb[0].mxu0
    %v2223 = vadd.f32 0.0, %v2222
    %2224 = vmatprep.mubr.f32.mxu0 %v637
    %2225 = vmatmul.mubr.f32.gmra.mrb[0].mxu0 %v613
    %v2226 = vpop.f32.mrb[0].mxu0
    %v2227 = vadd.f32 0.0, %v2226
    %v2228 = vpop.f32.mrb[0].mxu0
    %v2229 = vadd.f32 0.0, %v2228
    %2230 = vdwg.mxu0
    %2231 = vmatprep.subr.mxu0 %v1096
    %2232 = vmatpush1.msra.mxu0 %v1095
    %2233 = vmatprep.subr.mxu0 %v1110
    %2234 = vmatpush1.msra.mxu0 %v1109
    %2235 = vmatprep.subr.mxu0 %v1124
    %2236 = vmatpush1.msra.mxu0 %v1123
    %2237 = vmatprep.subr.mxu0 %v1138
    %2238 = vmatpush1.msra.mxu0 %v1137
    %2239 = vmatprep.subr.mxu0 %v1152
    %2240 = vmatpush1.msra.mxu0 %v1151
    %2241 = vmatprep.subr.mxu0 %v1166
    %2242 = vmatpush1.msra.mxu0 %v1165
    %2243 = vmatprep.subr.mxu0 %v1180
    %2244 = vmatpush1.msra.mxu0 %v1179
    %2245 = vmatprep.subr.mxu0 %v1194
    %2246 = vmatpush1.msra.mxu0 %v1193
    %2247 = vmatprep.subr.mxu0 0.0
    %2248 = vmatpush1.msra.mxu0 0.0
    %2249 = vmatprep.subr.mxu0 0.0
    %2250 = vmatpush1.msra.mxu0 0.0
    %2251 = vmatprep.subr.mxu0 0.0
    %2252 = vmatpush1.msra.mxu0 0.0
    %2253 = vmatprep.subr.mxu0 0.0
    %2254 = vmatpush1.msra.mxu0 0.0
    %2255 = vmatprep.subr.mxu0 0.0
    %2256 = vmatpush1.msra.mxu0 0.0
    %2257 = vmatprep.subr.mxu0 0.0
    %2258 = vmatpush1.msra.mxu0 0.0
    %2259 = vmatprep.subr.mxu0 0.0
    %2260 = vmatpush1.msra.mxu0 0.0
    %2261 = vmatprep.subr.mxu0 0.0
    %2262 = vmatpush1.msra.mxu0 0.0
    %2263 = vmatprep.subr.mxu0 0.0
    %2264 = vmatpush1.msra.mxu0 0.0
    %2265 = vmatprep.subr.mxu0 0.0
    %2266 = vmatpush1.msra.mxu0 0.0
    %2267 = vmatprep.subr.mxu0 0.0
    %2268 = vmatpush1.msra.mxu0 0.0
    %2269 = vmatprep.subr.mxu0 0.0
    %2270 = vmatpush1.msra.mxu0 0.0
    %2271 = vmatprep.subr.mxu0 0.0
    %2272 = vmatpush1.msra.mxu0 0.0
    %2273 = vmatprep.subr.mxu0 0.0
    %2274 = vmatpush1.msra.mxu0 0.0
    %2275 = vmatprep.subr.mxu0 0.0
    %2276 = vmatpush1.msra.mxu0 0.0
    %2277 = vmatprep.subr.mxu0 0.0
    %2278 = vmatpush1.msra.mxu0 0.0
    %2279 = vmatprep.subr.mxu0 0.0
    %2280 = vmatpush1.msra.mxu0 0.0
    %2281 = vmatprep.subr.mxu0 0.0
    %2282 = vmatpush1.msra.mxu0 0.0
    %2283 = vmatprep.subr.mxu0 0.0
    %2284 = vmatpush1.msra.mxu0 0.0
    %2285 = vmatprep.subr.mxu0 0.0
    %2286 = vmatpush1.msra.mxu0 0.0
    %2287 = vmatprep.subr.mxu0 0.0
    %2288 = vmatpush1.msra.mxu0 0.0
    %2289 = vmatprep.subr.mxu0 0.0
    %2290 = vmatpush1.msra.mxu0 0.0
    %2291 = vmatprep.subr.mxu0 0.0
    %2292 = vmatpush1.msra.mxu0 0.0
    %2293 = vmatprep.subr.mxu0 0.0
    %2294 = vmatpush1.msra.mxu0 0.0
    %2295 = vmatprep.mubr.f32.mxu0 0.0
    %2296 = vmatmul.mubr.f32.gmra.mrb[0].mxu0 %v1200
    %v2297 = vpop.f32.mrb[0].mxu0
    %v2298 = vadd.f32 %v2185, %v2297
    %v2299 = vpop.f32.mrb[0].mxu0
    %v2300 = vadd.f32 %v2187, %v2299
    %2301 = vmatprep.mubr.f32.mxu0 0.0
    %2302 = vmatmul.mubr.f32.gmra.mrb[0].mxu0 %v1203
    %v2303 = vpop.f32.mrb[0].mxu0
    %v2304 = vadd.f32 %v2191, %v2303
    %v2305 = vpop.f32.mrb[0].mxu0
    %v2306 = vadd.f32 %v2193, %v2305
    %2307 = vmatprep.mubr.f32.mxu0 0.0
    %2308 = vmatmul.mubr.f32.gmra.mrb[0].mxu0 %v1206
    %v2309 = vpop.f32.mrb[0].mxu0
    %v2310 = vadd.f32 %v2197, %v2309
    %v2311 = vpop.f32.mrb[0].mxu0
    %v2312 = vadd.f32 %v2199, %v2311
    %2313 = vmatprep.mubr.f32.mxu0 0.0
    %2314 = vmatmul.mubr.f32.gmra.mrb[0].mxu0 %v1203
    %v2315 = vpop.f32.mrb[0].mxu0
    %v2316 = vadd.f32 %v2203, %v2315
    %v2317 = vpop.f32.mrb[0].mxu0
    %v2318 = vadd.f32 %v2205, %v2317
    %2319 = vmatprep.mubr.f32.mxu0 0.0
    %2320 = vmatmul.mubr.f32.gmra.mrb[0].mxu0 %v1209
    %v2321 = vpop.f32.mrb[0].mxu0
    %v2322 = vadd.f32 %v2209, %v2321
    %v2323 = vpop.f32.mrb[0].mxu0
    %v2324 = vadd.f32 %v2211, %v2323
    %2325 = vmatprep.mubr.f32.mxu0 0.0
    %2326 = vmatmul.mubr.f32.gmra.mrb[0].mxu0 %v1203
    %v2327 = vpop.f32.mrb[0].mxu0
    %v2328 = vadd.f32 %v2215, %v2327
    %v2329 = vpop.f32.mrb[0].mxu0
    %v2330 = vadd.f32 %v2217, %v2329
    %2331 = vmatprep.mubr.f32.mxu0 0.0
    %2332 = vmatmul.mubr.f32.gmra.mrb[0].mxu0 %v1212
    %v2333 = vpop.f32.mrb[0].mxu0
    %v2334 = vadd.f32 %v2221, %v2333
    %v2335 = vpop.f32.mrb[0].mxu0
    %v2336 = vadd.f32 %v2223, %v2335
    %2337 = vmatprep.mubr.f32.mxu0 0.0
    %2338 = vmatmul.mubr.f32.gmra.mrb[0].mxu0 %v1203
    %v2339 = vpop.f32.mrb[0].mxu0
    %v2340 = vadd.f32 %v2227, %v2339
    %v2341 = vpop.f32.mrb[0].mxu0
    %v2342 = vadd.f32 %v2229, %v2341
    %2343 = vdwg.mxu0
    %2344 = vmatprep.subr.mxu0 %v650
    %2345 = vmatpush1.msra.mxu0 %v649
    %2346 = vmatprep.subr.mxu0 %v664
    %2347 = vmatpush1.msra.mxu0 %v663
    %2348 = vmatprep.subr.mxu0 %v678
    %2349 = vmatpush1.msra.mxu0 %v677
    %2350 = vmatprep.subr.mxu0 %v692
    %2351 = vmatpush1.msra.mxu0 %v691
    %2352 = vmatprep.subr.mxu0 %v706
    %2353 = vmatpush1.msra.mxu0 %v705
    %2354 = vmatprep.subr.mxu0 %v720
    %2355 = vmatpush1.msra.mxu0 %v719
    %2356 = vmatprep.subr.mxu0 %v734
    %2357 = vmatpush1.msra.mxu0 %v733
    %2358 = vmatprep.subr.mxu0 %v748
    %2359 = vmatpush1.msra.mxu0 %v747
    %2360 = vmatprep.subr.mxu0 %v762
    %2361 = vmatpush1.msra.mxu0 %v761
    %2362 = vmatprep.subr.mxu0 %v776
    %2363 = vmatpush1.msra.mxu0 %v775
    %2364 = vmatprep.subr.mxu0 %v790
    %2365 = vmatpush1.msra.mxu0 %v789
    %2366 = vmatprep.subr.mxu0 %v804
    %2367 = vmatpush1.msra.mxu0 %v803
    %2368 = vmatprep.subr.mxu0 %v818
    %2369 = vmatpush1.msra.mxu0 %v817
    %2370 = vmatprep.subr.mxu0 %v832
    %2371 = vmatpush1.msra.mxu0 %v831
    %2372 = vmatprep.subr.mxu0 %v846
    %2373 = vmatpush1.msra.mxu0 %v845
    %2374 = vmatprep.subr.mxu0 %v860
    %2375 = vmatpush1.msra.mxu0 %v859
    %2376 = vmatprep.subr.mxu0 %v874
    %2377 = vmatpush1.msra.mxu0 %v873
    %2378 = vmatprep.subr.mxu0 %v888
    %2379 = vmatpush1.msra.mxu0 %v887
    %2380 = vmatprep.subr.mxu0 %v902
    %2381 = vmatpush1.msra.mxu0 %v901
    %2382 = vmatprep.subr.mxu0 %v916
    %2383 = vmatpush1.msra.mxu0 %v915
    %2384 = vmatprep.subr.mxu0 %v930
    %2385 = vmatpush1.msra.mxu0 %v929
    %2386 = vmatprep.subr.mxu0 %v944
    %2387 = vmatpush1.msra.mxu0 %v943
    %2388 = vmatprep.subr.mxu0 %v958
    %2389 = vmatpush1.msra.mxu0 %v957
    %2390 = vmatprep.subr.mxu0 %v972
    %2391 = vmatpush1.msra.mxu0 %v971
    %2392 = vmatprep.subr.mxu0 %v986
    %2393 = vmatpush1.msra.mxu0 %v985
    %2394 = vmatprep.subr.mxu0 %v1000
    %2395 = vmatpush1.msra.mxu0 %v999
    %2396 = vmatprep.subr.mxu0 %v1014
    %2397 = vmatpush1.msra.mxu0 %v1013
    %2398 = vmatprep.subr.mxu0 %v1028
    %2399 = vmatpush1.msra.mxu0 %v1027
    %2400 = vmatprep.subr.mxu0 %v1042
    %2401 = vmatpush1.msra.mxu0 %v1041
    %2402 = vmatprep.subr.mxu0 %v1056
    %2403 = vmatpush1.msra.mxu0 %v1055
    %2404 = vmatprep.subr.mxu0 %v1070
    %2405 = vmatpush1.msra.mxu0 %v1069
    %2406 = vmatprep.subr.mxu0 %v1084
    %2407 = vmatpush1.msra.mxu0 %v1083
    %2408 = vmatprep.mubr.f32.mxu0 %v630
    %2409 = vmatmul.mubr.f32.gmra.mrb[0].mxu0 %v606
    %v2410 = vpop.f32.mrb[0].mxu0
    %v2411 = vadd.f32 0.0, %v2410
    %v2412 = vpop.f32.mrb[0].mxu0
    %v2413 = vadd.f32 0.0, %v2412
    %2414 = vmatprep.mubr.f32.mxu0 %v631
    %2415 = vmatmul.mubr.f32.gmra.mrb[0].mxu0 %v607
    %v2416 = vpop.f32.mrb[0].mxu0
    %v2417 = vadd.f32 0.0, %v2416
    %v2418 = vpop.f32.mrb[0].mxu0
    %v2419 = vadd.f32 0.0, %v2418
    %2420 = vmatprep.mubr.f32.mxu0 %v632
    %2421 = vmatmul.mubr.f32.gmra.mrb[0].mxu0 %v608
    %v2422 = vpop.f32.mrb[0].mxu0
    %v2423 = vadd.f32 0.0, %v2422
    %v2424 = vpop.f32.mrb[0].mxu0
    %v2425 = vadd.f32 0.0, %v2424
    %2426 = vmatprep.mubr.f32.mxu0 %v633
    %2427 = vmatmul.mubr.f32.gmra.mrb[0].mxu0 %v609
    %v2428 = vpop.f32.mrb[0].mxu0
    %v2429 = vadd.f32 0.0, %v2428
    %v2430 = vpop.f32.mrb[0].mxu0
    %v2431 = vadd.f32 0.0, %v2430
    %2432 = vmatprep.mubr.f32.mxu0 %v634
    %2433 = vmatmul.mubr.f32.gmra.mrb[0].mxu0 %v610
    %v2434 = vpop.f32.mrb[0].mxu0
    %v2435 = vadd.f32 0.0, %v2434
    %v2436 = vpop.f32.mrb[0].mxu0
    %v2437 = vadd.f32 0.0, %v2436
    %2438 = vmatprep.mubr.f32.mxu0 %v635
    %2439 = vmatmul.mubr.f32.gmra.mrb[0].mxu0 %v611
    %v2440 = vpop.f32.mrb[0].mxu0
    %v2441 = vadd.f32 0.0, %v2440
    %v2442 = vpop.f32.mrb[0].mxu0
    %v2443 = vadd.f32 0.0, %v2442
    %2444 = vmatprep.mubr.f32.mxu0 %v636
    %2445 = vmatmul.mubr.f32.gmra.mrb[0].mxu0 %v612
    %v2446 = vpop.f32.mrb[0].mxu0
    %v2447 = vadd.f32 0.0, %v2446
    %v2448 = vpop.f32.mrb[0].mxu0
    %v2449 = vadd.f32 0.0, %v2448
    %2450 = vmatprep.mubr.f32.mxu0 %v637
    %2451 = vmatmul.mubr.f32.gmra.mrb[0].mxu0 %v613
    %v2452 = vpop.f32.mrb[0].mxu0
    %v2453 = vadd.f32 0.0, %v2452
    %v2454 = vpop.f32.mrb[0].mxu0
    %v2455 = vadd.f32 0.0, %v2454
    %2456 = vdwg.mxu0
    %2457 = vmatprep.subr.mxu0 %v1098
    %2458 = vmatpush1.msra.mxu0 %v1097
    %2459 = vmatprep.subr.mxu0 %v1112
    %2460 = vmatpush1.msra.mxu0 %v1111
    %2461 = vmatprep.subr.mxu0 %v1126
    %2462 = vmatpush1.msra.mxu0 %v1125
    %2463 = vmatprep.subr.mxu0 %v1140
    %2464 = vmatpush1.msra.mxu0 %v1139
    %2465 = vmatprep.subr.mxu0 %v1154
    %2466 = vmatpush1.msra.mxu0 %v1153
    %2467 = vmatprep.subr.mxu0 %v1168
    %2468 = vmatpush1.msra.mxu0 %v1167
    %2469 = vmatprep.subr.mxu0 %v1182
    %2470 = vmatpush1.msra.mxu0 %v1181
    %2471 = vmatprep.subr.mxu0 %v1196
    %2472 = vmatpush1.msra.mxu0 %v1195
    %2473 = vmatprep.subr.mxu0 0.0
    %2474 = vmatpush1.msra.mxu0 0.0
    %2475 = vmatprep.subr.mxu0 0.0
    %2476 = vmatpush1.msra.mxu0 0.0
    %2477 = vmatprep.subr.mxu0 0.0
    %2478 = vmatpush1.msra.mxu0 0.0
    %2479 = vmatprep.subr.mxu0 0.0
    %2480 = vmatpush1.msra.mxu0 0.0
    %2481 = vmatprep.subr.mxu0 0.0
    %2482 = vmatpush1.msra.mxu0 0.0
    %2483 = vmatprep.subr.mxu0 0.0
    %2484 = vmatpush1.msra.mxu0 0.0
    %2485 = vmatprep.subr.mxu0 0.0
    %2486 = vmatpush1.msra.mxu0 0.0
    %2487 = vmatprep.subr.mxu0 0.0
    %2488 = vmatpush1.msra.mxu0 0.0
    %2489 = vmatprep.subr.mxu0 0.0
    %2490 = vmatpush1.msra.mxu0 0.0
    %2491 = vmatprep.subr.mxu0 0.0
    %2492 = vmatpush1.msra.mxu0 0.0
    %2493 = vmatprep.subr.mxu0 0.0
    %2494 = vmatpush1.msra.mxu0 0.0
    %2495 = vmatprep.subr.mxu0 0.0
    %2496 = vmatpush1.msra.mxu0 0.0
    %2497 = vmatprep.subr.mxu0 0.0
    %2498 = vmatpush1.msra.mxu0 0.0
    %2499 = vmatprep.subr.mxu0 0.0
    %2500 = vmatpush1.msra.mxu0 0.0
    %2501 = vmatprep.subr.mxu0 0.0
    %2502 = vmatpush1.msra.mxu0 0.0
    %2503 = vmatprep.subr.mxu0 0.0
    %2504 = vmatpush1.msra.mxu0 0.0
    %2505 = vmatprep.subr.mxu0 0.0
    %2506 = vmatpush1.msra.mxu0 0.0
    %2507 = vmatprep.subr.mxu0 0.0
    %2508 = vmatpush1.msra.mxu0 0.0
    %2509 = vmatprep.subr.mxu0 0.0
    %2510 = vmatpush1.msra.mxu0 0.0
    %2511 = vmatprep.subr.mxu0 0.0
    %2512 = vmatpush1.msra.mxu0 0.0
    %2513 = vmatprep.subr.mxu0 0.0
    %2514 = vmatpush1.msra.mxu0 0.0
    %2515 = vmatprep.subr.mxu0 0.0
    %2516 = vmatpush1.msra.mxu0 0.0
    %2517 = vmatprep.subr.mxu0 0.0
    %2518 = vmatpush1.msra.mxu0 0.0
    %2519 = vmatprep.subr.mxu0 0.0
    %2520 = vmatpush1.msra.mxu0 0.0
    %2521 = vmatprep.mubr.f32.mxu0 0.0
    %2522 = vmatmul.mubr.f32.gmra.mrb[0].mxu0 %v1200
    %v2523 = vpop.f32.mrb[0].mxu0
    %v2524 = vadd.f32 %v2411, %v2523
    %v2525 = vpop.f32.mrb[0].mxu0
    %v2526 = vadd.f32 %v2413, %v2525
    %2527 = vmatprep.mubr.f32.mxu0 0.0
    %2528 = vmatmul.mubr.f32.gmra.mrb[0].mxu0 %v1203
    %v2529 = vpop.f32.mrb[0].mxu0
    %v2530 = vadd.f32 %v2417, %v2529
    %v2531 = vpop.f32.mrb[0].mxu0
    %v2532 = vadd.f32 %v2419, %v2531
    %2533 = vmatprep.mubr.f32.mxu0 0.0
    %2534 = vmatmul.mubr.f32.gmra.mrb[0].mxu0 %v1206
    %v2535 = vpop.f32.mrb[0].mxu0
    %v2536 = vadd.f32 %v2423, %v2535
    %v2537 = vpop.f32.mrb[0].mxu0
    %v2538 = vadd.f32 %v2425, %v2537
    %2539 = vmatprep.mubr.f32.mxu0 0.0
    %2540 = vmatmul.mubr.f32.gmra.mrb[0].mxu0 %v1203
    %v2541 = vpop.f32.mrb[0].mxu0
    %v2542 = vadd.f32 %v2429, %v2541
    %v2543 = vpop.f32.mrb[0].mxu0
    %v2544 = vadd.f32 %v2431, %v2543
    %2545 = vmatprep.mubr.f32.mxu0 0.0
    %2546 = vmatmul.mubr.f32.gmra.mrb[0].mxu0 %v1209
    %v2547 = vpop.f32.mrb[0].mxu0
    %v2548 = vadd.f32 %v2435, %v2547
    %v2549 = vpop.f32.mrb[0].mxu0
    %v2550 = vadd.f32 %v2437, %v2549
    %2551 = vmatprep.mubr.f32.mxu0 0.0
    %2552 = vmatmul.mubr.f32.gmra.mrb[0].mxu0 %v1203
    %v2553 = vpop.f32.mrb[0].mxu0
    %v2554 = vadd.f32 %v2441, %v2553
    %v2555 = vpop.f32.mrb[0].mxu0
    %v2556 = vadd.f32 %v2443, %v2555
    %2557 = vmatprep.mubr.f32.mxu0 0.0
    %2558 = vmatmul.mubr.f32.gmra.mrb[0].mxu0 %v1212
    %v2559 = vpop.f32.mrb[0].mxu0
    %v2560 = vadd.f32 %v2447, %v2559
    %v2561 = vpop.f32.mrb[0].mxu0
    %v2562 = vadd.f32 %v2449, %v2561
    %2563 = vmatprep.mubr.f32.mxu0 0.0
    %2564 = vmatmul.mubr.f32.gmra.mrb[0].mxu0 %v1203
    %v2565 = vpop.f32.mrb[0].mxu0
    %v2566 = vadd.f32 %v2453, %v2565
    %v2567 = vpop.f32.mrb[0].mxu0
    %v2568 = vadd.f32 %v2455, %v2567
    %2569 = vdwg.mxu0
    %2570 = vmatprep.subr.mxu0 %v652
    %2571 = vmatpush1.msra.mxu0 %v651
    %2572 = vmatprep.subr.mxu0 %v666
    %2573 = vmatpush1.msra.mxu0 %v665
    %2574 = vmatprep.subr.mxu0 %v680
    %2575 = vmatpush1.msra.mxu0 %v679
    %2576 = vmatprep.subr.mxu0 %v694
    %2577 = vmatpush1.msra.mxu0 %v693
    %2578 = vmatprep.subr.mxu0 %v708
    %2579 = vmatpush1.msra.mxu0 %v707
    %2580 = vmatprep.subr.mxu0 %v722
    %2581 = vmatpush1.msra.mxu0 %v721
    %2582 = vmatprep.subr.mxu0 %v736
    %2583 = vmatpush1.msra.mxu0 %v735
    %2584 = vmatprep.subr.mxu0 %v750
    %2585 = vmatpush1.msra.mxu0 %v749
    %2586 = vmatprep.subr.mxu0 %v764
    %2587 = vmatpush1.msra.mxu0 %v763
    %2588 = vmatprep.subr.mxu0 %v778
    %2589 = vmatpush1.msra.mxu0 %v777
    %2590 = vmatprep.subr.mxu0 %v792
    %2591 = vmatpush1.msra.mxu0 %v791
    %2592 = vmatprep.subr.mxu0 %v806
    %2593 = vmatpush1.msra.mxu0 %v805
    %2594 = vmatprep.subr.mxu0 %v820
    %2595 = vmatpush1.msra.mxu0 %v819
    %2596 = vmatprep.subr.mxu0 %v834
    %2597 = vmatpush1.msra.mxu0 %v833
    %2598 = vmatprep.subr.mxu0 %v848
    %2599 = vmatpush1.msra.mxu0 %v847
    %2600 = vmatprep.subr.mxu0 %v862
    %2601 = vmatpush1.msra.mxu0 %v861
    %2602 = vmatprep.subr.mxu0 %v876
    %2603 = vmatpush1.msra.mxu0 %v875
    %2604 = vmatprep.subr.mxu0 %v890
    %2605 = vmatpush1.msra.mxu0 %v889
    %2606 = vmatprep.subr.mxu0 %v904
    %2607 = vmatpush1.msra.mxu0 %v903
    %2608 = vmatprep.subr.mxu0 %v918
    %2609 = vmatpush1.msra.mxu0 %v917
    %2610 = vmatprep.subr.mxu0 %v932
    %2611 = vmatpush1.msra.mxu0 %v931
    %2612 = vmatprep.subr.mxu0 %v946
    %2613 = vmatpush1.msra.mxu0 %v945
    %2614 = vmatprep.subr.mxu0 %v960
    %2615 = vmatpush1.msra.mxu0 %v959
    %2616 = vmatprep.subr.mxu0 %v974
    %2617 = vmatpush1.msra.mxu0 %v973
    %2618 = vmatprep.subr.mxu0 %v988
    %2619 = vmatpush1.msra.mxu0 %v987
    %2620 = vmatprep.subr.mxu0 %v1002
    %2621 = vmatpush1.msra.mxu0 %v1001
    %2622 = vmatprep.subr.mxu0 %v1016
    %2623 = vmatpush1.msra.mxu0 %v1015
    %2624 = vmatprep.subr.mxu0 %v1030
    %2625 = vmatpush1.msra.mxu0 %v1029
    %2626 = vmatprep.subr.mxu0 %v1044
    %2627 = vmatpush1.msra.mxu0 %v1043
    %2628 = vmatprep.subr.mxu0 %v1058
    %2629 = vmatpush1.msra.mxu0 %v1057
    %2630 = vmatprep.subr.mxu0 %v1072
    %2631 = vmatpush1.msra.mxu0 %v1071
    %2632 = vmatprep.subr.mxu0 %v1086
    %2633 = vmatpush1.msra.mxu0 %v1085
    %2634 = vmatprep.mubr.f32.mxu0 %v630
    %2635 = vmatmul.mubr.f32.gmra.mrb[0].mxu0 %v606
    %v2636 = vpop.f32.mrb[0].mxu0
    %v2637 = vadd.f32 0.0, %v2636
    %v2638 = vpop.f32.mrb[0].mxu0
    %v2639 = vadd.f32 0.0, %v2638
    %2640 = vmatprep.mubr.f32.mxu0 %v631
    %2641 = vmatmul.mubr.f32.gmra.mrb[0].mxu0 %v607
    %v2642 = vpop.f32.mrb[0].mxu0
    %v2643 = vadd.f32 0.0, %v2642
    %v2644 = vpop.f32.mrb[0].mxu0
    %v2645 = vadd.f32 0.0, %v2644
    %2646 = vmatprep.mubr.f32.mxu0 %v632
    %2647 = vmatmul.mubr.f32.gmra.mrb[0].mxu0 %v608
    %v2648 = vpop.f32.mrb[0].mxu0
    %v2649 = vadd.f32 0.0, %v2648
    %v2650 = vpop.f32.mrb[0].mxu0
    %v2651 = vadd.f32 0.0, %v2650
    %2652 = vmatprep.mubr.f32.mxu0 %v633
    %2653 = vmatmul.mubr.f32.gmra.mrb[0].mxu0 %v609
    %v2654 = vpop.f32.mrb[0].mxu0
    %v2655 = vadd.f32 0.0, %v2654
    %v2656 = vpop.f32.mrb[0].mxu0
    %v2657 = vadd.f32 0.0, %v2656
    %2658 = vmatprep.mubr.f32.mxu0 %v634
    %2659 = vmatmul.mubr.f32.gmra.mrb[0].mxu0 %v610
    %v2660 = vpop.f32.mrb[0].mxu0
    %v2661 = vadd.f32 0.0, %v2660
    %v2662 = vpop.f32.mrb[0].mxu0
    %v2663 = vadd.f32 0.0, %v2662
    %2664 = vmatprep.mubr.f32.mxu0 %v635
    %2665 = vmatmul.mubr.f32.gmra.mrb[0].mxu0 %v611
    %v2666 = vpop.f32.mrb[0].mxu0
    %v2667 = vadd.f32 0.0, %v2666
    %v2668 = vpop.f32.mrb[0].mxu0
    %v2669 = vadd.f32 0.0, %v2668
    %2670 = vmatprep.mubr.f32.mxu0 %v636
    %2671 = vmatmul.mubr.f32.gmra.mrb[0].mxu0 %v612
    %v2672 = vpop.f32.mrb[0].mxu0
    %v2673 = vadd.f32 0.0, %v2672
    %v2674 = vpop.f32.mrb[0].mxu0
    %v2675 = vadd.f32 0.0, %v2674
    %2676 = vmatprep.mubr.f32.mxu0 %v637
    %2677 = vmatmul.mubr.f32.gmra.mrb[0].mxu0 %v613
    %v2678 = vpop.f32.mrb[0].mxu0
    %v2679 = vadd.f32 0.0, %v2678
    %v2680 = vpop.f32.mrb[0].mxu0
    %v2681 = vadd.f32 0.0, %v2680
    %2682 = vdwg.mxu0
    %2683 = vmatprep.subr.mxu0 %v1100
    %2684 = vmatpush1.msra.mxu0 %v1099
    %2685 = vmatprep.subr.mxu0 %v1114
    %2686 = vmatpush1.msra.mxu0 %v1113
    %2687 = vmatprep.subr.mxu0 %v1128
    %2688 = vmatpush1.msra.mxu0 %v1127
    %2689 = vmatprep.subr.mxu0 %v1142
    %2690 = vmatpush1.msra.mxu0 %v1141
    %2691 = vmatprep.subr.mxu0 %v1156
    %2692 = vmatpush1.msra.mxu0 %v1155
    %2693 = vmatprep.subr.mxu0 %v1170
    %2694 = vmatpush1.msra.mxu0 %v1169
    %2695 = vmatprep.subr.mxu0 %v1184
    %2696 = vmatpush1.msra.mxu0 %v1183
    %2697 = vmatprep.subr.mxu0 %v1198
    %2698 = vmatpush1.msra.mxu0 %v1197
    %2699 = vmatprep.subr.mxu0 0.0
    %2700 = vmatpush1.msra.mxu0 0.0
    %2701 = vmatprep.subr.mxu0 0.0
    %2702 = vmatpush1.msra.mxu0 0.0
    %2703 = vmatprep.subr.mxu0 0.0
    %2704 = vmatpush1.msra.mxu0 0.0
    %2705 = vmatprep.subr.mxu0 0.0
    %2706 = vmatpush1.msra.mxu0 0.0
    %2707 = vmatprep.subr.mxu0 0.0
    %2708 = vmatpush1.msra.mxu0 0.0
    %2709 = vmatprep.subr.mxu0 0.0
    %2710 = vmatpush1.msra.mxu0 0.0
    %2711 = vmatprep.subr.mxu0 0.0
    %2712 = vmatpush1.msra.mxu0 0.0
    %2713 = vmatprep.subr.mxu0 0.0
    %2714 = vmatpush1.msra.mxu0 0.0
    %2715 = vmatprep.subr.mxu0 0.0
    %2716 = vmatpush1.msra.mxu0 0.0
    %2717 = vmatprep.subr.mxu0 0.0
    %2718 = vmatpush1.msra.mxu0 0.0
    %2719 = vmatprep.subr.mxu0 0.0
    %2720 = vmatpush1.msra.mxu0 0.0
    %2721 = vmatprep.subr.mxu0 0.0
    %2722 = vmatpush1.msra.mxu0 0.0
    %2723 = vmatprep.subr.mxu0 0.0
    %2724 = vmatpush1.msra.mxu0 0.0
    %2725 = vmatprep.subr.mxu0 0.0
    %2726 = vmatpush1.msra.mxu0 0.0
    %2727 = vmatprep.subr.mxu0 0.0
    %2728 = vmatpush1.msra.mxu0 0.0
    %2729 = vmatprep.subr.mxu0 0.0
    %2730 = vmatpush1.msra.mxu0 0.0
    %2731 = vmatprep.subr.mxu0 0.0
    %2732 = vmatpush1.msra.mxu0 0.0
    %2733 = vmatprep.subr.mxu0 0.0
    %2734 = vmatpush1.msra.mxu0 0.0
    %2735 = vmatprep.subr.mxu0 0.0
    %2736 = vmatpush1.msra.mxu0 0.0
    %2737 = vmatprep.subr.mxu0 0.0
    %2738 = vmatpush1.msra.mxu0 0.0
    %2739 = vmatprep.subr.mxu0 0.0
    %2740 = vmatpush1.msra.mxu0 0.0
    %2741 = vmatprep.subr.mxu0 0.0
    %2742 = vmatpush1.msra.mxu0 0.0
    %2743 = vmatprep.subr.mxu0 0.0
    %2744 = vmatpush1.msra.mxu0 0.0
    %2745 = vmatprep.subr.mxu0 0.0
    %2746 = vmatpush1.msra.mxu0 0.0
    %2747 = vmatprep.mubr.f32.mxu0 0.0
    %2748 = vmatmul.mubr.f32.gmra.mrb[0].mxu0 %v1200
    %v2749 = vpop.f32.mrb[0].mxu0
    %v2750 = vadd.f32 %v2637, %v2749
    %v2751 = vpop.f32.mrb[0].mxu0
    %v2752 = vadd.f32 %v2639, %v2751
    %2753 = vmatprep.mubr.f32.mxu0 0.0
    %2754 = vmatmul.mubr.f32.gmra.mrb[0].mxu0 %v1203
    %v2755 = vpop.f32.mrb[0].mxu0
    %v2756 = vadd.f32 %v2643, %v2755
    %v2757 = vpop.f32.mrb[0].mxu0
    %v2758 = vadd.f32 %v2645, %v2757
    %2759 = vmatprep.mubr.f32.mxu0 0.0
    %2760 = vmatmul.mubr.f32.gmra.mrb[0].mxu0 %v1206
    %v2761 = vpop.f32.mrb[0].mxu0
    %v2762 = vadd.f32 %v2649, %v2761
    %v2763 = vpop.f32.mrb[0].mxu0
    %v2764 = vadd.f32 %v2651, %v2763
    %2765 = vmatprep.mubr.f32.mxu0 0.0
    %2766 = vmatmul.mubr.f32.gmra.mrb[0].mxu0 %v1203
    %v2767 = vpop.f32.mrb[0].mxu0
    %v2768 = vadd.f32 %v2655, %v2767
    %v2769 = vpop.f32.mrb[0].mxu0
    %v2770 = vadd.f32 %v2657, %v2769
    %2771 = vmatprep.mubr.f32.mxu0 0.0
    %2772 = vmatmul.mubr.f32.gmra.mrb[0].mxu0 %v1209
    %v2773 = vpop.f32.mrb[0].mxu0
    %v2774 = vadd.f32 %v2661, %v2773
    %v2775 = vpop.f32.mrb[0].mxu0
    %v2776 = vadd.f32 %v2663, %v2775
    %2777 = vmatprep.mubr.f32.mxu0 0.0
    %2778 = vmatmul.mubr.f32.gmra.mrb[0].mxu0 %v1203
    %v2779 = vpop.f32.mrb[0].mxu0
    %v2780 = vadd.f32 %v2667, %v2779
    %v2781 = vpop.f32.mrb[0].mxu0
    %v2782 = vadd.f32 %v2669, %v2781
    %2783 = vmatprep.mubr.f32.mxu0 0.0
    %2784 = vmatmul.mubr.f32.gmra.mrb[0].mxu0 %v1212
    %v2785 = vpop.f32.mrb[0].mxu0
    %v2786 = vadd.f32 %v2673, %v2785
    %v2787 = vpop.f32.mrb[0].mxu0
    %v2788 = vadd.f32 %v2675, %v2787
    %2789 = vmatprep.mubr.f32.mxu0 0.0
    %2790 = vmatmul.mubr.f32.gmra.mrb[0].mxu0 %v1203
    %v2791 = vpop.f32.mrb[0].mxu0
    %v2792 = vadd.f32 %v2679, %v2791
    %v2793 = vpop.f32.mrb[0].mxu0
    %v2794 = vadd.f32 %v2681, %v2793
    %2795 = vdwg.mxu0
    %v2796 = vld [vmem:[#allocation5] sm:$0xf]
    %v2797 = vlaneseq
    %v2798 = vshrl.u32 %v2797, 7
    %v2799 = vsub.s32 0, %v2798
    %v2800 = vrot.slane %v2796, %v2799
    %2802 = vbcast.lane.b32.xlu0 %v2800, 256
    %v2803 = vpop.permute.xlu0 %2802
    %s2805 = sor.u32 256, 8
    %2806 = vbcast.lane.b32.xlu0 %v2800, %s2805
    %v2807 = vpop.permute.xlu0 %2806
    %v2808 = vlaneseq
    %v2809 = vshrl.u32 %v2808, 7
    %v2810 = vsub.s32 1, %v2809
    %v2811 = vrot.slane %v2796, %v2810
    %2813 = vbcast.lane.b32.xlu0 %v2811, 256
    %v2814 = vpop.permute.xlu0 %2813
    %s2816 = sor.u32 256, 8
    %2817 = vbcast.lane.b32.xlu0 %v2811, %s2816
    %v2818 = vpop.permute.xlu0 %2817
    %v2819 = vlaneseq
    %v2820 = vshrl.u32 %v2819, 7
    %v2821 = vsub.s32 2, %v2820
    %v2822 = vrot.slane %v2796, %v2821
    %2824 = vbcast.lane.b32.xlu0 %v2822, 256
    %v2825 = vpop.permute.xlu0 %2824
    %s2827 = sor.u32 256, 8
    %2828 = vbcast.lane.b32.xlu0 %v2822, %s2827
    %v2829 = vpop.permute.xlu0 %2828
    %v2830 = vlaneseq
    %v2831 = vshrl.u32 %v2830, 7
    %v2832 = vsub.s32 3, %v2831
    %v2833 = vrot.slane %v2796, %v2832
    %2835 = vbcast.lane.b32.xlu0 %v2833, 256
    %v2836 = vpop.permute.xlu0 %2835
    %s2838 = sor.u32 256, 8
    %2839 = vbcast.lane.b32.xlu0 %v2833, %s2838
    %v2840 = vpop.permute.xlu0 %2839
    %vm2841 = vcmp.ne.f32.partialorder %v2803, 0.0
    %vm2842 = vcmp.ne.f32.partialorder %v2807, 0.0
    %vm2843 = vcmp.ne.f32.partialorder %v2814, 0.0
    %vm2844 = vcmp.ne.f32.partialorder %v2818, 0.0
    %vm2845 = vcmp.ne.f32.partialorder %v2825, 0.0
    %vm2846 = vcmp.ne.f32.partialorder %v2829, 0.0
    %vm2847 = vcmp.ne.f32.partialorder %v2836, 0.0
    %vm2848 = vcmp.ne.f32.partialorder %v2840, 0.0
    %v2849 = vsel %vm2841, %v1394, -1e+30
    %v2850 = vsel %vm2842, %v1400, -1e+30
    %v2851 = vsel %vm2843, %v1406, -1e+30
    %v2852 = vsel %vm2844, %v1412, -1e+30
    %v2853 = vsel %vm2845, %v1418, -1e+30
    %v2854 = vsel %vm2846, %v1424, -1e+30
    %v2855 = vsel %vm2847, %v1430, -1e+30
    %v2856 = vsel %vm2848, %v1436, -1e+30
    %vm2857 = vcmask 7168
    %v2858 = vsel %vm2857, %v2849, -inf
    %v2859 = vsel %vm2857, %v2850, -inf
    %v2860 = vmax.f32 %v2858, %v2859
    %v2861 = vrot.slane %v2860, 4
    %v2862 = vmax.f32 %v2860, %v2861
    %v2863 = vrot.slane %v2862, 2
    %v2864 = vmax.f32 %v2862, %v2863
    %v2865 = vrot.slane %v2864, 1
    %v2866 = vmax.f32 %v2864, %v2865
    %v2867 = vsel %vm2857, %v2851, -inf
    %v2868 = vsel %vm2857, %v2852, -inf
    %v2869 = vmax.f32 %v2867, %v2868
    %v2870 = vrot.slane %v2869, 4
    %v2871 = vmax.f32 %v2869, %v2870
    %v2872 = vrot.slane %v2871, 2
    %v2873 = vmax.f32 %v2871, %v2872
    %v2874 = vrot.slane %v2873, 1
    %v2875 = vmax.f32 %v2873, %v2874
    %v2876 = vsel %vm2857, %v2853, -inf
    %v2877 = vsel %vm2857, %v2854, -inf
    %v2878 = vmax.f32 %v2876, %v2877
    %v2879 = vrot.slane %v2878, 4
    %v2880 = vmax.f32 %v2878, %v2879
    %v2881 = vrot.slane %v2880, 2
    %v2882 = vmax.f32 %v2880, %v2881
    %v2883 = vrot.slane %v2882, 1
    %v2884 = vmax.f32 %v2882, %v2883
    %v2885 = vsel %vm2857, %v2855, -inf
    %v2886 = vsel %vm2857, %v2856, -inf
    %v2887 = vmax.f32 %v2885, %v2886
    %v2888 = vrot.slane %v2887, 4
    %v2889 = vmax.f32 %v2887, %v2888
    %v2890 = vrot.slane %v2889, 2
    %v2891 = vmax.f32 %v2889, %v2890
    %v2892 = vrot.slane %v2891, 1
    %v2893 = vmax.f32 %v2891, %v2892
    %v2894 = vsub.f32 %v2849, %v2866
    %v2895 = vsub.f32 %v2850, %v2866
    %v2896 = vsub.f32 %v2851, %v2875
    %v2897 = vsub.f32 %v2852, %v2875
    %v2898 = vsub.f32 %v2853, %v2884
    %v2899 = vsub.f32 %v2854, %v2884
    %v2900 = vsub.f32 %v2855, %v2893
    %v2901 = vsub.f32 %v2856, %v2893
    %v2902 = vmul.f32 %v2894, 1.442695
    %v2903 = vpow.pop %v2902
    %v2904 = vmul.f32 %v2895, 1.442695
    %v2905 = vpow.pop %v2904
    %v2906 = vmul.f32 %v2896, 1.442695
    %v2907 = vpow.pop %v2906
    %v2908 = vmul.f32 %v2897, 1.442695
    %v2909 = vpow.pop %v2908
    %v2910 = vmul.f32 %v2898, 1.442695
    %v2911 = vpow.pop %v2910
    %v2912 = vmul.f32 %v2899, 1.442695
    %v2913 = vpow.pop %v2912
    %v2914 = vmul.f32 %v2900, 1.442695
    %v2915 = vpow.pop %v2914
    %v2916 = vmul.f32 %v2901, 1.442695
    %v2917 = vpow.pop %v2916
    %v2918 = vsel %vm2857, %v2903, 0.0
    %v2919 = vsel %vm2857, %v2905, 0.0
    %v2920 = vadd.f32 %v2918, %v2919
    %v2921 = vrot.slane %v2920, 4
    %v2922 = vadd.f32 %v2920, %v2921
    %v2923 = vrot.slane %v2922, 2
    %v2924 = vadd.f32 %v2922, %v2923
    %v2925 = vrot.slane %v2924, 1
    %v2926 = vadd.f32 %v2924, %v2925
    %v2927 = vsel %vm2857, %v2907, 0.0
    %v2928 = vsel %vm2857, %v2909, 0.0
    %v2929 = vadd.f32 %v2927, %v2928
    %v2930 = vrot.slane %v2929, 4
    %v2931 = vadd.f32 %v2929, %v2930
    %v2932 = vrot.slane %v2931, 2
    %v2933 = vadd.f32 %v2931, %v2932
    %v2934 = vrot.slane %v2933, 1
    %v2935 = vadd.f32 %v2933, %v2934
    %v2936 = vsel %vm2857, %v2911, 0.0
    %v2937 = vsel %vm2857, %v2913, 0.0
    %v2938 = vadd.f32 %v2936, %v2937
    %v2939 = vrot.slane %v2938, 4
    %v2940 = vadd.f32 %v2938, %v2939
    %v2941 = vrot.slane %v2940, 2
    %v2942 = vadd.f32 %v2940, %v2941
    %v2943 = vrot.slane %v2942, 1
    %v2944 = vadd.f32 %v2942, %v2943
    %v2945 = vsel %vm2857, %v2915, 0.0
    %v2946 = vsel %vm2857, %v2917, 0.0
    %v2947 = vadd.f32 %v2945, %v2946
    %v2948 = vrot.slane %v2947, 4
    %v2949 = vadd.f32 %v2947, %v2948
    %v2950 = vrot.slane %v2949, 2
    %v2951 = vadd.f32 %v2949, %v2950
    %v2952 = vrot.slane %v2951, 1
    %v2953 = vadd.f32 %v2951, %v2952
    %v2954 = vrcp.pop %v2926
    %v2955 = vmul.f32 %v2903, %v2954
    %v2956 = vmul.f32 %v2905, %v2954
    %v2957 = vrcp.pop %v2935
    %v2958 = vmul.f32 %v2907, %v2957
    %v2959 = vmul.f32 %v2909, %v2957
    %v2960 = vrcp.pop %v2944
    %v2961 = vmul.f32 %v2911, %v2960
    %v2962 = vmul.f32 %v2913, %v2960
    %v2963 = vrcp.pop %v2953
    %v2964 = vmul.f32 %v2915, %v2963
    %v2965 = vmul.f32 %v2917, %v2963
    %2967 = vset.pattern.permute.xlu0 0
    %2968 = vperm.xlu0 %2967, %v2955
    %v2969 = vpop.permute.xlu0 %2968
    %2972 = vset.pattern.permute.xlu0 0
    %2973 = vperm.xlu0 %2972, %v2956
    %v2974 = vpop.permute.xlu0 %2973
    %2977 = vset.pattern.permute.xlu0 0
    %2978 = vperm.xlu0 %2977, %v2958
    %v2979 = vpop.permute.xlu0 %2978
    %2982 = vset.pattern.permute.xlu0 0
    %2983 = vperm.xlu0 %2982, %v2959
    %v2984 = vpop.permute.xlu0 %2983
    %2987 = vset.pattern.permute.xlu0 0
    %2988 = vperm.xlu0 %2987, %v2961
    %v2989 = vpop.permute.xlu0 %2988
    %2992 = vset.pattern.permute.xlu0 0
    %2993 = vperm.xlu0 %2992, %v2962
    %v2994 = vpop.permute.xlu0 %2993
    %2997 = vset.pattern.permute.xlu0 0
    %2998 = vperm.xlu0 %2997, %v2964
    %v2999 = vpop.permute.xlu0 %2998
    %3002 = vset.pattern.permute.xlu0 0
    %3003 = vperm.xlu0 %3002, %v2965
    %v3004 = vpop.permute.xlu0 %3003
    %v3006 = vmul.f32 %v2969, %v288
    %v3007 = vmul.f32 %v2974, %v289
    %v3008 = vmul.f32 %v2979, %v290
    %v3009 = vmul.f32 %v2984, %v291
    %v3010 = vmul.f32 %v2989, %v292
    %v3011 = vmul.f32 %v2994, %v293
    %v3012 = vmul.f32 %v2999, %v294
    %v3013 = vmul.f32 %v3004, %v295
    %v3014 = vsel %vm587, %v3006, 0.0
    %v3015 = vsel %vm587, %v3007, 0.0
    %v3016 = vadd.f32 %v3014, %v3015
    %v3017 = vrot.slane %v3016, 4
    %v3018 = vadd.f32 %v3016, %v3017
    %v3019 = vrot.slane %v3018, 2
    %v3020 = vadd.f32 %v3018, %v3019
    %v3021 = vrot.slane %v3020, 1
    %v3022 = vadd.f32 %v3020, %v3021
    %v3023 = vsel %vm587, %v3008, 0.0
    %v3024 = vsel %vm587, %v3009, 0.0
    %v3025 = vadd.f32 %v3023, %v3024
    %v3026 = vrot.slane %v3025, 4
    %v3027 = vadd.f32 %v3025, %v3026
    %v3028 = vrot.slane %v3027, 2
    %v3029 = vadd.f32 %v3027, %v3028
    %v3030 = vrot.slane %v3029, 1
    %v3031 = vadd.f32 %v3029, %v3030
    %v3032 = vsel %vm587, %v3010, 0.0
    %v3033 = vsel %vm587, %v3011, 0.0
    %v3034 = vadd.f32 %v3032, %v3033
    %v3035 = vrot.slane %v3034, 4
    %v3036 = vadd.f32 %v3034, %v3035
    %v3037 = vrot.slane %v3036, 2
    %v3038 = vadd.f32 %v3036, %v3037
    %v3039 = vrot.slane %v3038, 1
    %v3040 = vadd.f32 %v3038, %v3039
    %v3041 = vsel %vm587, %v3012, 0.0
    %v3042 = vsel %vm587, %v3013, 0.0
    %v3043 = vadd.f32 %v3041, %v3042
    %v3044 = vrot.slane %v3043, 4
    %v3045 = vadd.f32 %v3043, %v3044
    %v3046 = vrot.slane %v3045, 2
    %v3047 = vadd.f32 %v3045, %v3046
    %v3048 = vrot.slane %v3047, 1
    %v3049 = vadd.f32 %v3047, %v3048
    %v3050 = vld [vmem:[#allocation7] sm:$0xf]
    %v3051 = vld [vmem:[#allocation13] sm:$0xff]
    %v3052 = vld [vmem:[#allocation13 + $0x8] sm:$0x1]
    %vm3053 = vcmask 72704
    %v3055 = vsel %vm3053, %v3050, 0
    %v3058 = vsel %vm541, %v3052, 0
    %3060 = vmatprep.subr.mxu0 0.0
    %3061 = vmatpush1.msra.mxu0 %v3051
    %3062 = vmatprep.subr.mxu0 0.0
    %3063 = vmatpush1.msra.mxu0 %v3058
    %3064 = vmatprep.subr.mxu0 0.0
    %3065 = vmatpush1.msra.mxu0 0.0
    %3066 = vmatprep.subr.mxu0 0.0
    %3067 = vmatpush1.msra.mxu0 0.0
    %3068 = vmatprep.subr.mxu0 0.0
    %3069 = vmatpush1.msra.mxu0 0.0
    %3070 = vmatprep.subr.mxu0 0.0
    %3071 = vmatpush1.msra.mxu0 0.0
    %3072 = vmatprep.subr.mxu0 0.0
    %3073 = vmatpush1.msra.mxu0 0.0
    %3074 = vmatprep.subr.mxu0 0.0
    %3075 = vmatpush1.msra.mxu0 0.0
    %3076 = vmatprep.subr.mxu0 0.0
    %3077 = vmatpush1.msra.mxu0 0.0
    %3078 = vmatprep.subr.mxu0 0.0
    %3079 = vmatpush1.msra.mxu0 0.0
    %3080 = vmatprep.subr.mxu0 0.0
    %3081 = vmatpush1.msra.mxu0 0.0
    %3082 = vmatprep.subr.mxu0 0.0
    %3083 = vmatpush1.msra.mxu0 0.0
    %3084 = vmatprep.subr.mxu0 0.0
    %3085 = vmatpush1.msra.mxu0 0.0
    %3086 = vmatprep.subr.mxu0 0.0
    %3087 = vmatpush1.msra.mxu0 0.0
    %3088 = vmatprep.subr.mxu0 0.0
    %3089 = vmatpush1.msra.mxu0 0.0
    %3090 = vmatprep.subr.mxu0 0.0
    %3091 = vmatpush1.msra.mxu0 0.0
    %3092 = vmatprep.subr.mxu0 0.0
    %3093 = vmatpush1.msra.mxu0 0.0
    %3094 = vmatprep.subr.mxu0 0.0
    %3095 = vmatpush1.msra.mxu0 0.0
    %3096 = vmatprep.subr.mxu0 0.0
    %3097 = vmatpush1.msra.mxu0 0.0
    %3098 = vmatprep.subr.mxu0 0.0
    %3099 = vmatpush1.msra.mxu0 0.0
    %3100 = vmatprep.subr.mxu0 0.0
    %3101 = vmatpush1.msra.mxu0 0.0
    %3102 = vmatprep.subr.mxu0 0.0
    %3103 = vmatpush1.msra.mxu0 0.0
    %3104 = vmatprep.subr.mxu0 0.0
    %3105 = vmatpush1.msra.mxu0 0.0
    %3106 = vmatprep.subr.mxu0 0.0
    %3107 = vmatpush1.msra.mxu0 0.0
    %3108 = vmatprep.subr.mxu0 0.0
    %3109 = vmatpush1.msra.mxu0 0.0
    %3110 = vmatprep.subr.mxu0 0.0
    %3111 = vmatpush1.msra.mxu0 0.0
    %3112 = vmatprep.subr.mxu0 0.0
    %3113 = vmatpush1.msra.mxu0 0.0
    %3114 = vmatprep.subr.mxu0 0.0
    %3115 = vmatpush1.msra.mxu0 0.0
    %3116 = vmatprep.subr.mxu0 0.0
    %3117 = vmatpush1.msra.mxu0 0.0
    %3118 = vmatprep.subr.mxu0 0.0
    %3119 = vmatpush1.msra.mxu0 0.0
    %3120 = vmatprep.subr.mxu0 0.0
    %3121 = vmatpush1.msra.mxu0 0.0
    %3122 = vmatprep.subr.mxu0 0.0
    %3123 = vmatpush1.msra.mxu0 0.0
    %3124 = vmatprep.mubr.f32.mxu0 0.0
    %3125 = vmatmul.mubr.f32.gmra.mrb[0].mxu0 %v3055
    %v3126 = vpop.f32.mrb[0].mxu0
    %v3127 = vadd.f32 0.0, %v3126
    %v3128 = vpop.f32.mrb[0].mxu0
    %3129 = vdwg.mxu0
    %v3130 = vld [vmem:[#allocation14] sm:$0xff]
    %v3131 = vld [vmem:[#allocation14 + $0x8] sm:$0xff]
    %v3132 = vld [vmem:[#allocation14 + $0x10] sm:$0xff]
    %v3133 = vld [vmem:[#allocation14 + $0x18] sm:$0xff]
    %v3134 = vld [vmem:[#allocation16] sm:$0xff]
    %v3135 = vld [vmem:[#allocation16 + $0x8] sm:$0xff]
    %v3136 = vld [vmem:[#allocation16 + $0x10] sm:$0xff]
    %v3137 = vld [vmem:[#allocation16 + $0x18] sm:$0xff]
    %vm3142 = vcmask 1041409
    %v3143 = vsel %vm3142, %v3031, %v3022
    %vm3144 = vcmask 1042434
    %v3145 = vsel %vm3144, %v3040, %v3143
    %vm3146 = vcmask 1043459
    %v3147 = vsel %vm3146, %v3049, %v3145
    %v3148 = vsel %vm587, %v3147, 0
    %3150 = vmatprep.subr.mxu0 0.0
    %3151 = vmatpush1.msra.mxu0 %v3134
    %3152 = vmatprep.subr.mxu0 0.0
    %3153 = vmatpush1.msra.mxu0 %v3135
    %3154 = vmatprep.subr.mxu0 0.0
    %3155 = vmatpush1.msra.mxu0 %v3136
    %3156 = vmatprep.subr.mxu0 0.0
    %3157 = vmatpush1.msra.mxu0 %v3137
    %3158 = vmatprep.subr.mxu0 0.0
    %3159 = vmatpush1.msra.mxu0 0.0
    %3160 = vmatprep.subr.mxu0 0.0
    %3161 = vmatpush1.msra.mxu0 0.0
    %3162 = vmatprep.subr.mxu0 0.0
    %3163 = vmatpush1.msra.mxu0 0.0
    %3164 = vmatprep.subr.mxu0 0.0
    %3165 = vmatpush1.msra.mxu0 0.0
    %3166 = vmatprep.subr.mxu0 0.0
    %3167 = vmatpush1.msra.mxu0 0.0
    %3168 = vmatprep.subr.mxu0 0.0
    %3169 = vmatpush1.msra.mxu0 0.0
    %3170 = vmatprep.subr.mxu0 0.0
    %3171 = vmatpush1.msra.mxu0 0.0
    %3172 = vmatprep.subr.mxu0 0.0
    %3173 = vmatpush1.msra.mxu0 0.0
    %3174 = vmatprep.subr.mxu0 0.0
    %3175 = vmatpush1.msra.mxu0 0.0
    %3176 = vmatprep.subr.mxu0 0.0
    %3177 = vmatpush1.msra.mxu0 0.0
    %3178 = vmatprep.subr.mxu0 0.0
    %3179 = vmatpush1.msra.mxu0 0.0
    %3180 = vmatprep.subr.mxu0 0.0
    %3181 = vmatpush1.msra.mxu0 0.0
    %3182 = vmatprep.subr.mxu0 0.0
    %3183 = vmatpush1.msra.mxu0 0.0
    %3184 = vmatprep.subr.mxu0 0.0
    %3185 = vmatpush1.msra.mxu0 0.0
    %3186 = vmatprep.subr.mxu0 0.0
    %3187 = vmatpush1.msra.mxu0 0.0
    %3188 = vmatprep.subr.mxu0 0.0
    %3189 = vmatpush1.msra.mxu0 0.0
    %3190 = vmatprep.subr.mxu0 0.0
    %3191 = vmatpush1.msra.mxu0 0.0
    %3192 = vmatprep.subr.mxu0 0.0
    %3193 = vmatpush1.msra.mxu0 0.0
    %3194 = vmatprep.subr.mxu0 0.0
    %3195 = vmatpush1.msra.mxu0 0.0
    %3196 = vmatprep.subr.mxu0 0.0
    %3197 = vmatpush1.msra.mxu0 0.0
    %3198 = vmatprep.subr.mxu0 0.0
    %3199 = vmatpush1.msra.mxu0 0.0
    %3200 = vmatprep.subr.mxu0 0.0
    %3201 = vmatpush1.msra.mxu0 0.0
    %3202 = vmatprep.subr.mxu0 0.0
    %3203 = vmatpush1.msra.mxu0 0.0
    %3204 = vmatprep.subr.mxu0 0.0
    %3205 = vmatpush1.msra.mxu0 0.0
    %3206 = vmatprep.subr.mxu0 0.0
    %3207 = vmatpush1.msra.mxu0 0.0
    %3208 = vmatprep.subr.mxu0 0.0
    %3209 = vmatpush1.msra.mxu0 0.0
    %3210 = vmatprep.subr.mxu0 0.0
    %3211 = vmatpush1.msra.mxu0 0.0
    %3212 = vmatprep.subr.mxu0 0.0
    %3213 = vmatpush1.msra.mxu0 0.0
    %3214 = vmatprep.mubr.f32.mxu0 0.0
    %3215 = vmatmul.mubr.f32.gmra.mrb[0].mxu0 %v3148
    %v3216 = vpop.f32.mrb[0].mxu0
    %v3217 = vadd.f32 0.0, %v3216
    %v3218 = vpop.f32.mrb[0].mxu0
    %3219 = vdwg.mxu0
    %v3221 = vsel %vm587, %v3127, 0
    %3223 = vmatprep.subr.mxu0 0.0
    %3224 = vmatpush1.msra.mxu0 %v3130
    %3225 = vmatprep.subr.mxu0 0.0
    %3226 = vmatpush1.msra.mxu0 %v3131
    %3227 = vmatprep.subr.mxu0 0.0
    %3228 = vmatpush1.msra.mxu0 %v3132
    %3229 = vmatprep.subr.mxu0 0.0
    %3230 = vmatpush1.msra.mxu0 %v3133
    %3231 = vmatprep.subr.mxu0 0.0
    %3232 = vmatpush1.msra.mxu0 0.0
    %3233 = vmatprep.subr.mxu0 0.0
    %3234 = vmatpush1.msra.mxu0 0.0
    %3235 = vmatprep.subr.mxu0 0.0
    %3236 = vmatpush1.msra.mxu0 0.0
    %3237 = vmatprep.subr.mxu0 0.0
    %3238 = vmatpush1.msra.mxu0 0.0
    %3239 = vmatprep.subr.mxu0 0.0
    %3240 = vmatpush1.msra.mxu0 0.0
    %3241 = vmatprep.subr.mxu0 0.0
    %3242 = vmatpush1.msra.mxu0 0.0
    %3243 = vmatprep.subr.mxu0 0.0
    %3244 = vmatpush1.msra.mxu0 0.0
    %3245 = vmatprep.subr.mxu0 0.0
    %3246 = vmatpush1.msra.mxu0 0.0
    %3247 = vmatprep.subr.mxu0 0.0
    %3248 = vmatpush1.msra.mxu0 0.0
    %3249 = vmatprep.subr.mxu0 0.0
    %3250 = vmatpush1.msra.mxu0 0.0
    %3251 = vmatprep.subr.mxu0 0.0
    %3252 = vmatpush1.msra.mxu0 0.0
    %3253 = vmatprep.subr.mxu0 0.0
    %3254 = vmatpush1.msra.mxu0 0.0
    %3255 = vmatprep.subr.mxu0 0.0
    %3256 = vmatpush1.msra.mxu0 0.0
    %3257 = vmatprep.subr.mxu0 0.0
    %3258 = vmatpush1.msra.mxu0 0.0
    %3259 = vmatprep.subr.mxu0 0.0
    %3260 = vmatpush1.msra.mxu0 0.0
    %3261 = vmatprep.subr.mxu0 0.0
    %3262 = vmatpush1.msra.mxu0 0.0
    %3263 = vmatprep.subr.mxu0 0.0
    %3264 = vmatpush1.msra.mxu0 0.0
    %3265 = vmatprep.subr.mxu0 0.0
    %3266 = vmatpush1.msra.mxu0 0.0
    %3267 = vmatprep.subr.mxu0 0.0
    %3268 = vmatpush1.msra.mxu0 0.0
    %3269 = vmatprep.subr.mxu0 0.0
    %3270 = vmatpush1.msra.mxu0 0.0
    %3271 = vmatprep.subr.mxu0 0.0
    %3272 = vmatpush1.msra.mxu0 0.0
    %3273 = vmatprep.subr.mxu0 0.0
    %3274 = vmatpush1.msra.mxu0 0.0
    %3275 = vmatprep.subr.mxu0 0.0
    %3276 = vmatpush1.msra.mxu0 0.0
    %3277 = vmatprep.subr.mxu0 0.0
    %3278 = vmatpush1.msra.mxu0 0.0
    %3279 = vmatprep.subr.mxu0 0.0
    %3280 = vmatpush1.msra.mxu0 0.0
    %3281 = vmatprep.subr.mxu0 0.0
    %3282 = vmatpush1.msra.mxu0 0.0
    %3283 = vmatprep.subr.mxu0 0.0
    %3284 = vmatpush1.msra.mxu0 0.0
    %3285 = vmatprep.subr.mxu0 0.0
    %3286 = vmatpush1.msra.mxu0 0.0
    %3287 = vmatprep.mubr.f32.mxu0 0.0
    %3288 = vmatmul.mubr.f32.gmra.mrb[0].mxu0 %v3221
    %v3289 = vpop.f32.mrb[0].mxu0
    %v3290 = vadd.f32 %v3217, %v3289
    %v3291 = vpop.f32.mrb[0].mxu0
    %3292 = vdwg.mxu0
    %v3293 = vld [vmem:[#allocation17] sm:$0x1]
    %v3295 = vlaneseq
    %v3296 = vshrl.u32 %v3295, 7
    %v3297 = vsub.s32 0, %v3296
    %v3298 = vrot.slane %v3293, %v3297
    %v3300 = vadd.f32 %v3290, %v3298
    %v3301 = vmax.f32 %v3300, 0.0
    %v3302 = vld [vmem:[%s11] sm:$0xff]
    %v3303 = vld [vmem:[%s11 + $0x8] sm:$0xff]
    %v3304 = vld [vmem:[%s11 + $0x10] sm:$0xff]
    %v3305 = vld [vmem:[%s11 + $0x18] sm:$0xff]
    %v3306 = vld [vmem:[%s11 + $0x20] sm:$0xff]
    %v3307 = vld [vmem:[%s11 + $0x28] sm:$0xff]
    %v3308 = vld [vmem:[%s11 + $0x30] sm:$0xff]
    %v3309 = vld [vmem:[%s11 + $0x38] sm:$0xff]
    %v3310 = vld [vmem:[#allocation19] sm:$0x1]
    %v3312 = vlaneseq
    %v3313 = vshrl.u32 %v3312, 7
    %v3314 = vsub.s32 0, %v3313
    %v3315 = vrot.slane %v3310, %v3314
    %v3318 = vsel %vm596, %v3301, 0
    %3320 = vmatprep.subr.mxu0 0.0
    %3321 = vmatpush1.msra.mxu0 %v3302
    %3322 = vmatprep.subr.mxu0 0.0
    %3323 = vmatpush1.msra.mxu0 %v3303
    %3324 = vmatprep.subr.mxu0 0.0
    %3325 = vmatpush1.msra.mxu0 %v3304
    %3326 = vmatprep.subr.mxu0 0.0
    %3327 = vmatpush1.msra.mxu0 %v3305
    %3328 = vmatprep.subr.mxu0 0.0
    %3329 = vmatpush1.msra.mxu0 %v3306
    %3330 = vmatprep.subr.mxu0 0.0
    %3331 = vmatpush1.msra.mxu0 %v3307
    %3332 = vmatprep.subr.mxu0 0.0
    %3333 = vmatpush1.msra.mxu0 %v3308
    %3334 = vmatprep.subr.mxu0 0.0
    %3335 = vmatpush1.msra.mxu0 %v3309
    %3336 = vmatprep.subr.mxu0 0.0
    %3337 = vmatpush1.msra.mxu0 0.0
    %3338 = vmatprep.subr.mxu0 0.0
    %3339 = vmatpush1.msra.mxu0 0.0
    %3340 = vmatprep.subr.mxu0 0.0
    %3341 = vmatpush1.msra.mxu0 0.0
    %3342 = vmatprep.subr.mxu0 0.0
    %3343 = vmatpush1.msra.mxu0 0.0
    %3344 = vmatprep.subr.mxu0 0.0
    %3345 = vmatpush1.msra.mxu0 0.0
    %3346 = vmatprep.subr.mxu0 0.0
    %3347 = vmatpush1.msra.mxu0 0.0
    %3348 = vmatprep.subr.mxu0 0.0
    %3349 = vmatpush1.msra.mxu0 0.0
    %3350 = vmatprep.subr.mxu0 0.0
    %3351 = vmatpush1.msra.mxu0 0.0
    %3352 = vmatprep.subr.mxu0 0.0
    %3353 = vmatpush1.msra.mxu0 0.0
    %3354 = vmatprep.subr.mxu0 0.0
    %3355 = vmatpush1.msra.mxu0 0.0
    %3356 = vmatprep.subr.mxu0 0.0
    %3357 = vmatpush1.msra.mxu0 0.0
    %3358 = vmatprep.subr.mxu0 0.0
    %3359 = vmatpush1.msra.mxu0 0.0
    %3360 = vmatprep.subr.mxu0 0.0
    %3361 = vmatpush1.msra.mxu0 0.0
    %3362 = vmatprep.subr.mxu0 0.0
    %3363 = vmatpush1.msra.mxu0 0.0
    %3364 = vmatprep.subr.mxu0 0.0
    %3365 = vmatpush1.msra.mxu0 0.0
    %3366 = vmatprep.subr.mxu0 0.0
    %3367 = vmatpush1.msra.mxu0 0.0
    %3368 = vmatprep.subr.mxu0 0.0
    %3369 = vmatpush1.msra.mxu0 0.0
    %3370 = vmatprep.subr.mxu0 0.0
    %3371 = vmatpush1.msra.mxu0 0.0
    %3372 = vmatprep.subr.mxu0 0.0
    %3373 = vmatpush1.msra.mxu0 0.0
    %3374 = vmatprep.subr.mxu0 0.0
    %3375 = vmatpush1.msra.mxu0 0.0
    %3376 = vmatprep.subr.mxu0 0.0
    %3377 = vmatpush1.msra.mxu0 0.0
    %3378 = vmatprep.subr.mxu0 0.0
    %3379 = vmatpush1.msra.mxu0 0.0
    %3380 = vmatprep.subr.mxu0 0.0
    %3381 = vmatpush1.msra.mxu0 0.0
    %3382 = vmatprep.subr.mxu0 0.0
    %3383 = vmatpush1.msra.mxu0 0.0
    %3384 = vmatprep.mubr.f32.mxu0 0.0
    %3385 = vmatmul.mubr.f32.gmra.mrb[0].mxu0 %v3318
    %v3386 = vpop.f32.mrb[0].mxu0
    %v3387 = vadd.f32 %v3315, %v3386
    %v3388 = vpop.f32.mrb[0].mxu0
    %3389 = vdwg.mxu0
    %vm3390 = vcmask 35840
    %v3391 = vsel %vm3390, %v3387, -inf
    %3392 = vmax.xlane.f32.xlu0 %v3391
    %v3393 = vpop.xlane.xlu0 %3392
    %v3394 = vsub.f32 %v3387, %v3393
    %v3395 = vmul.f32 %v3394, 1.442695
    %v3396 = vpow.pop %v3395
    %v3397 = vsel %vm3390, %v3396, 0.0
    %3398 = vadd.xlane.f32.xlu0 %v3397
    %v3399 = vpop.xlane.xlu0 %3398
    %v3400 = vrcp.pop %v3399
    %v3401 = vmul.f32 %v3396, %v3400
    %v3402 = vld [vmem:[#allocation10] sm:$0xff]
    %v3403 = vld [vmem:[#allocation10 + $0x8] sm:$0xff]
    %v3404 = vld [vmem:[#allocation10 + $0x10] sm:$0xff]
    %v3405 = vld [vmem:[#allocation10 + $0x18] sm:$0xff]
    %v3406 = vld [vmem:[#allocation10 + $0x20] sm:$0xff]
    %v3407 = vld [vmem:[#allocation10 + $0x28] sm:$0xff]
    %v3408 = vld [vmem:[#allocation10 + $0x30] sm:$0xff]
    %v3409 = vld [vmem:[#allocation10 + $0x38] sm:$0xff]
    %v3410 = vld [vmem:[#allocation10 + $0x40] sm:$0xff]
    %v3411 = vld [vmem:[#allocation10 + $0x48] sm:$0xff]
    %v3412 = vld [vmem:[#allocation10 + $0x50] sm:$0xff]
    %v3413 = vld [vmem:[#allocation10 + $0x58] sm:$0xff]
    %v3414 = vld [vmem:[#allocation10 + $0x60] sm:$0xff]
    %v3415 = vld [vmem:[#allocation10 + $0x68] sm:$0xff]
    %v3416 = vld [vmem:[#allocation10 + $0x70] sm:$0xff]
    %v3417 = vld [vmem:[#allocation10 + $0x78] sm:$0xff]
    %v3418 = vld [vmem:[#allocation10 + $0x80] sm:$0xff]
    %v3419 = vld [vmem:[#allocation10 + $0x88] sm:$0xff]
    %v3420 = vld [vmem:[#allocation10 + $0x90] sm:$0xff]
    %v3421 = vld [vmem:[#allocation10 + $0x98] sm:$0xff]
    %v3422 = vld [vmem:[#allocation10 + $0xa0] sm:$0xff]
    %v3423 = vld [vmem:[#allocation10 + $0xa8] sm:$0xff]
    %v3424 = vld [vmem:[#allocation10 + $0xb0] sm:$0xff]
    %v3425 = vld [vmem:[#allocation10 + $0xb8] sm:$0xff]
    %v3426 = vld [vmem:[#allocation10 + $0xc0] sm:$0xff]
    %v3427 = vld [vmem:[#allocation10 + $0xc8] sm:$0xff]
    %v3428 = vld [vmem:[#allocation10 + $0xd0] sm:$0xff]
    %v3429 = vld [vmem:[#allocation10 + $0xd8] sm:$0xff]
    %v3430 = vadd.f32 %v1394, %v3402
    %v3431 = vadd.f32 %v1396, %v3403
    %v3432 = vadd.f32 %v1620, %v3404
    %v3433 = vadd.f32 %v1622, %v3405
    %v3434 = vadd.f32 %v1846, %v3406
    %v3435 = vadd.f32 %v1848, %v3407
    %v3436 = vadd.f32 %v2072, %v3408
    %v3437 = vadd.f32 %v2074, %v3409
    %v3438 = vadd.f32 %v2298, %v3410
    %v3439 = vadd.f32 %v2300, %v3411
    %v3440 = vadd.f32 %v2524, %v3412
    %v3441 = vadd.f32 %v2526, %v3413
    %v3442 = vadd.f32 %v2750, %v3414
    %v3443 = vadd.f32 %v2752, %v3415
    %v3444 = vadd.f32 %v1400, %v3416
    %v3445 = vadd.f32 %v1402, %v3417
    %v3446 = vadd.f32 %v1626, %v3418
    %v3447 = vadd.f32 %v1628, %v3419
    %v3448 = vadd.f32 %v1852, %v3420
    %v3449 = vadd.f32 %v1854, %v3421
    %v3450 = vadd.f32 %v2078, %v3422
    %v3451 = vadd.f32 %v2080, %v3423
    %v3452 = vadd.f32 %v2304, %v3424
    %v3453 = vadd.f32 %v2306, %v3425
    %v3454 = vadd.f32 %v2530, %v3426
    %v3455 = vadd.f32 %v2532, %v3427
    %v3456 = vadd.f32 %v2756, %v3428
    %v3457 = vadd.f32 %v2758, %v3429
    %v3458 = vadd.f32 %v1406, %v3402
    %v3459 = vadd.f32 %v1408, %v3403
    %v3460 = vadd.f32 %v1632, %v3404
    %v3461 = vadd.f32 %v1634, %v3405
    %v3462 = vadd.f32 %v1858, %v3406
    %v3463 = vadd.f32 %v1860, %v3407
    %v3464 = vadd.f32 %v2084, %v3408
    %v3465 = vadd.f32 %v2086, %v3409
    %v3466 = vadd.f32 %v2310, %v3410
    %v3467 = vadd.f32 %v2312, %v3411
    %v3468 = vadd.f32 %v2536, %v3412
    %v3469 = vadd.f32 %v2538, %v3413
    %v3470 = vadd.f32 %v2762, %v3414
    %v3471 = vadd.f32 %v2764, %v3415
    %v3472 = vadd.f32 %v1412, %v3416
    %v3473 = vadd.f32 %v1414, %v3417
    %v3474 = vadd.f32 %v1638, %v3418
    %v3475 = vadd.f32 %v1640, %v3419
    %v3476 = vadd.f32 %v1864, %v3420
    %v3477 = vadd.f32 %v1866, %v3421
    %v3478 = vadd.f32 %v2090, %v3422
    %v3479 = vadd.f32 %v2092, %v3423
    %v3480 = vadd.f32 %v2316, %v3424
    %v3481 = vadd.f32 %v2318, %v3425
    %v3482 = vadd.f32 %v2542, %v3426
    %v3483 = vadd.f32 %v2544, %v3427
    %v3484 = vadd.f32 %v2768, %v3428
    %v3485 = vadd.f32 %v2770, %v3429
    %v3486 = vadd.f32 %v1418, %v3402
    %v3487 = vadd.f32 %v1420, %v3403
    %v3488 = vadd.f32 %v1644, %v3404
    %v3489 = vadd.f32 %v1646, %v3405
    %v3490 = vadd.f32 %v1870, %v3406
    %v3491 = vadd.f32 %v1872, %v3407
    %v3492 = vadd.f32 %v2096, %v3408
    %v3493 = vadd.f32 %v2098, %v3409
    %v3494 = vadd.f32 %v2322, %v3410
    %v3495 = vadd.f32 %v2324, %v3411
    %v3496 = vadd.f32 %v2548, %v3412
    %v3497 = vadd.f32 %v2550, %v3413
    %v3498 = vadd.f32 %v2774, %v3414
    %v3499 = vadd.f32 %v2776, %v3415
    %v3500 = vadd.f32 %v1424, %v3416
    %v3501 = vadd.f32 %v1426, %v3417
    %v3502 = vadd.f32 %v1650, %v3418
    %v3503 = vadd.f32 %v1652, %v3419
    %v3504 = vadd.f32 %v1876, %v3420
    %v3505 = vadd.f32 %v1878, %v3421
    %v3506 = vadd.f32 %v2102, %v3422
    %v3507 = vadd.f32 %v2104, %v3423
    %v3508 = vadd.f32 %v2328, %v3424
    %v3509 = vadd.f32 %v2330, %v3425
    %v3510 = vadd.f32 %v2554, %v3426
    %v3511 = vadd.f32 %v2556, %v3427
    %v3512 = vadd.f32 %v2780, %v3428
    %v3513 = vadd.f32 %v2782, %v3429
    %v3514 = vadd.f32 %v1430, %v3402
    %v3515 = vadd.f32 %v1432, %v3403
    %v3516 = vadd.f32 %v1656, %v3404
    %v3517 = vadd.f32 %v1658, %v3405
    %v3518 = vadd.f32 %v1882, %v3406
    %v3519 = vadd.f32 %v1884, %v3407
    %v3520 = vadd.f32 %v2108, %v3408
    %v3521 = vadd.f32 %v2110, %v3409
    %v3522 = vadd.f32 %v2334, %v3410
    %v3523 = vadd.f32 %v2336, %v3411
    %v3524 = vadd.f32 %v2560, %v3412
    %v3525 = vadd.f32 %v2562, %v3413
    %v3526 = vadd.f32 %v2786, %v3414
    %v3527 = vadd.f32 %v2788, %v3415
    %v3528 = vadd.f32 %v1436, %v3416
    %v3529 = vadd.f32 %v1438, %v3417
    %v3530 = vadd.f32 %v1662, %v3418
    %v3531 = vadd.f32 %v1664, %v3419
    %v3532 = vadd.f32 %v1888, %v3420
    %v3533 = vadd.f32 %v1890, %v3421
    %v3534 = vadd.f32 %v2114, %v3422
    %v3535 = vadd.f32 %v2116, %v3423
    %v3536 = vadd.f32 %v2340, %v3424
    %v3537 = vadd.f32 %v2342, %v3425
    %v3538 = vadd.f32 %v2566, %v3426
    %v3539 = vadd.f32 %v2568, %v3427
    %v3540 = vadd.f32 %v2792, %v3428
    %v3541 = vadd.f32 %v2794, %v3429
    %v3542 = vmax.f32 %v3430, %v3444
    %v3543 = vrot.slane %v3542, 4
    %v3544 = vmax.f32 %v3542, %v3543
    %v3545 = vrot.slane %v3544, 2
    %v3546 = vmax.f32 %v3544, %v3545
    %v3547 = vrot.slane %v3546, 1
    %v3548 = vmax.f32 %v3546, %v3547
    %v3549 = vmax.f32 %v3431, %v3445
    %v3550 = vrot.slane %v3549, 4
    %v3551 = vmax.f32 %v3549, %v3550
    %v3552 = vrot.slane %v3551, 2
    %v3553 = vmax.f32 %v3551, %v3552
    %v3554 = vrot.slane %v3553, 1
    %v3555 = vmax.f32 %v3553, %v3554
    %v3556 = vmax.f32 %v3432, %v3446
    %v3557 = vrot.slane %v3556, 4
    %v3558 = vmax.f32 %v3556, %v3557
    %v3559 = vrot.slane %v3558, 2
    %v3560 = vmax.f32 %v3558, %v3559
    %v3561 = vrot.slane %v3560, 1
    %v3562 = vmax.f32 %v3560, %v3561
    %v3563 = vmax.f32 %v3433, %v3447
    %v3564 = vrot.slane %v3563, 4
    %v3565 = vmax.f32 %v3563, %v3564
    %v3566 = vrot.slane %v3565, 2
    %v3567 = vmax.f32 %v3565, %v3566
    %v3568 = vrot.slane %v3567, 1
    %v3569 = vmax.f32 %v3567, %v3568
    %v3570 = vmax.f32 %v3434, %v3448
    %v3571 = vrot.slane %v3570, 4
    %v3572 = vmax.f32 %v3570, %v3571
    %v3573 = vrot.slane %v3572, 2
    %v3574 = vmax.f32 %v3572, %v3573
    %v3575 = vrot.slane %v3574, 1
    %v3576 = vmax.f32 %v3574, %v3575
    %v3577 = vmax.f32 %v3435, %v3449
    %v3578 = vrot.slane %v3577, 4
    %v3579 = vmax.f32 %v3577, %v3578
    %v3580 = vrot.slane %v3579, 2
    %v3581 = vmax.f32 %v3579, %v3580
    %v3582 = vrot.slane %v3581, 1
    %v3583 = vmax.f32 %v3581, %v3582
    %v3584 = vmax.f32 %v3436, %v3450
    %v3585 = vrot.slane %v3584, 4
    %v3586 = vmax.f32 %v3584, %v3585
    %v3587 = vrot.slane %v3586, 2
    %v3588 = vmax.f32 %v3586, %v3587
    %v3589 = vrot.slane %v3588, 1
    %v3590 = vmax.f32 %v3588, %v3589
    %v3591 = vmax.f32 %v3437, %v3451
    %v3592 = vrot.slane %v3591, 4
    %v3593 = vmax.f32 %v3591, %v3592
    %v3594 = vrot.slane %v3593, 2
    %v3595 = vmax.f32 %v3593, %v3594
    %v3596 = vrot.slane %v3595, 1
    %v3597 = vmax.f32 %v3595, %v3596
    %v3598 = vmax.f32 %v3438, %v3452
    %v3599 = vrot.slane %v3598, 4
    %v3600 = vmax.f32 %v3598, %v3599
    %v3601 = vrot.slane %v3600, 2
    %v3602 = vmax.f32 %v3600, %v3601
    %v3603 = vrot.slane %v3602, 1
    %v3604 = vmax.f32 %v3602, %v3603
    %v3605 = vmax.f32 %v3439, %v3453
    %v3606 = vrot.slane %v3605, 4
    %v3607 = vmax.f32 %v3605, %v3606
    %v3608 = vrot.slane %v3607, 2
    %v3609 = vmax.f32 %v3607, %v3608
    %v3610 = vrot.slane %v3609, 1
    %v3611 = vmax.f32 %v3609, %v3610
    %v3612 = vmax.f32 %v3440, %v3454
    %v3613 = vrot.slane %v3612, 4
    %v3614 = vmax.f32 %v3612, %v3613
    %v3615 = vrot.slane %v3614, 2
    %v3616 = vmax.f32 %v3614, %v3615
    %v3617 = vrot.slane %v3616, 1
    %v3618 = vmax.f32 %v3616, %v3617
    %v3619 = vmax.f32 %v3441, %v3455
    %v3620 = vrot.slane %v3619, 4
    %v3621 = vmax.f32 %v3619, %v3620
    %v3622 = vrot.slane %v3621, 2
    %v3623 = vmax.f32 %v3621, %v3622
    %v3624 = vrot.slane %v3623, 1
    %v3625 = vmax.f32 %v3623, %v3624
    %v3626 = vmax.f32 %v3442, %v3456
    %v3627 = vrot.slane %v3626, 4
    %v3628 = vmax.f32 %v3626, %v3627
    %v3629 = vrot.slane %v3628, 2
    %v3630 = vmax.f32 %v3628, %v3629
    %v3631 = vrot.slane %v3630, 1
    %v3632 = vmax.f32 %v3630, %v3631
    %v3633 = vmax.f32 %v3443, %v3457
    %v3634 = vrot.slane %v3633, 4
    %v3635 = vmax.f32 %v3633, %v3634
    %v3636 = vrot.slane %v3635, 2
    %v3637 = vmax.f32 %v3635, %v3636
    %v3638 = vrot.slane %v3637, 1
    %v3639 = vmax.f32 %v3637, %v3638
    %v3640 = vmax.f32 %v3458, %v3472
    %v3641 = vrot.slane %v3640, 4
    %v3642 = vmax.f32 %v3640, %v3641
    %v3643 = vrot.slane %v3642, 2
    %v3644 = vmax.f32 %v3642, %v3643
    %v3645 = vrot.slane %v3644, 1
    %v3646 = vmax.f32 %v3644, %v3645
    %v3647 = vmax.f32 %v3459, %v3473
    %v3648 = vrot.slane %v3647, 4
    %v3649 = vmax.f32 %v3647, %v3648
    %v3650 = vrot.slane %v3649, 2
    %v3651 = vmax.f32 %v3649, %v3650
    %v3652 = vrot.slane %v3651, 1
    %v3653 = vmax.f32 %v3651, %v3652
    %v3654 = vmax.f32 %v3460, %v3474
    %v3655 = vrot.slane %v3654, 4
    %v3656 = vmax.f32 %v3654, %v3655
    %v3657 = vrot.slane %v3656, 2
    %v3658 = vmax.f32 %v3656, %v3657
    %v3659 = vrot.slane %v3658, 1
    %v3660 = vmax.f32 %v3658, %v3659
    %v3661 = vmax.f32 %v3461, %v3475
    %v3662 = vrot.slane %v3661, 4
    %v3663 = vmax.f32 %v3661, %v3662
    %v3664 = vrot.slane %v3663, 2
    %v3665 = vmax.f32 %v3663, %v3664
    %v3666 = vrot.slane %v3665, 1
    %v3667 = vmax.f32 %v3665, %v3666
    %v3668 = vmax.f32 %v3462, %v3476
    %v3669 = vrot.slane %v3668, 4
    %v3670 = vmax.f32 %v3668, %v3669
    %v3671 = vrot.slane %v3670, 2
    %v3672 = vmax.f32 %v3670, %v3671
    %v3673 = vrot.slane %v3672, 1
    %v3674 = vmax.f32 %v3672, %v3673
    %v3675 = vmax.f32 %v3463, %v3477
    %v3676 = vrot.slane %v3675, 4
    %v3677 = vmax.f32 %v3675, %v3676
    %v3678 = vrot.slane %v3677, 2
    %v3679 = vmax.f32 %v3677, %v3678
    %v3680 = vrot.slane %v3679, 1
    %v3681 = vmax.f32 %v3679, %v3680
    %v3682 = vmax.f32 %v3464, %v3478
    %v3683 = vrot.slane %v3682, 4
    %v3684 = vmax.f32 %v3682, %v3683
    %v3685 = vrot.slane %v3684, 2
    %v3686 = vmax.f32 %v3684, %v3685
    %v3687 = vrot.slane %v3686, 1
    %v3688 = vmax.f32 %v3686, %v3687
    %v3689 = vmax.f32 %v3465, %v3479
    %v3690 = vrot.slane %v3689, 4
    %v3691 = vmax.f32 %v3689, %v3690
    %v3692 = vrot.slane %v3691, 2
    %v3693 = vmax.f32 %v3691, %v3692
    %v3694 = vrot.slane %v3693, 1
    %v3695 = vmax.f32 %v3693, %v3694
    %v3696 = vmax.f32 %v3466, %v3480
    %v3697 = vrot.slane %v3696, 4
    %v3698 = vmax.f32 %v3696, %v3697
    %v3699 = vrot.slane %v3698, 2
    %v3700 = vmax.f32 %v3698, %v3699
    %v3701 = vrot.slane %v3700, 1
    %v3702 = vmax.f32 %v3700, %v3701
    %v3703 = vmax.f32 %v3467, %v3481
    %v3704 = vrot.slane %v3703, 4
    %v3705 = vmax.f32 %v3703, %v3704
    %v3706 = vrot.slane %v3705, 2
    %v3707 = vmax.f32 %v3705, %v3706
    %v3708 = vrot.slane %v3707, 1
    %v3709 = vmax.f32 %v3707, %v3708
    %v3710 = vmax.f32 %v3468, %v3482
    %v3711 = vrot.slane %v3710, 4
    %v3712 = vmax.f32 %v3710, %v3711
    %v3713 = vrot.slane %v3712, 2
    %v3714 = vmax.f32 %v3712, %v3713
    %v3715 = vrot.slane %v3714, 1
    %v3716 = vmax.f32 %v3714, %v3715
    %v3717 = vmax.f32 %v3469, %v3483
    %v3718 = vrot.slane %v3717, 4
    %v3719 = vmax.f32 %v3717, %v3718
    %v3720 = vrot.slane %v3719, 2
    %v3721 = vmax.f32 %v3719, %v3720
    %v3722 = vrot.slane %v3721, 1
    %v3723 = vmax.f32 %v3721, %v3722
    %v3724 = vmax.f32 %v3470, %v3484
    %v3725 = vrot.slane %v3724, 4
    %v3726 = vmax.f32 %v3724, %v3725
    %v3727 = vrot.slane %v3726, 2
    %v3728 = vmax.f32 %v3726, %v3727
    %v3729 = vrot.slane %v3728, 1
    %v3730 = vmax.f32 %v3728, %v3729
    %v3731 = vmax.f32 %v3471, %v3485
    %v3732 = vrot.slane %v3731, 4
    %v3733 = vmax.f32 %v3731, %v3732
    %v3734 = vrot.slane %v3733, 2
    %v3735 = vmax.f32 %v3733, %v3734
    %v3736 = vrot.slane %v3735, 1
    %v3737 = vmax.f32 %v3735, %v3736
    %v3738 = vmax.f32 %v3486, %v3500
    %v3739 = vrot.slane %v3738, 4
    %v3740 = vmax.f32 %v3738, %v3739
    %v3741 = vrot.slane %v3740, 2
    %v3742 = vmax.f32 %v3740, %v3741
    %v3743 = vrot.slane %v3742, 1
    %v3744 = vmax.f32 %v3742, %v3743
    %v3745 = vmax.f32 %v3487, %v3501
    %v3746 = vrot.slane %v3745, 4
    %v3747 = vmax.f32 %v3745, %v3746
    %v3748 = vrot.slane %v3747, 2
    %v3749 = vmax.f32 %v3747, %v3748
    %v3750 = vrot.slane %v3749, 1
    %v3751 = vmax.f32 %v3749, %v3750
    %v3752 = vmax.f32 %v3488, %v3502
    %v3753 = vrot.slane %v3752, 4
    %v3754 = vmax.f32 %v3752, %v3753
    %v3755 = vrot.slane %v3754, 2
    %v3756 = vmax.f32 %v3754, %v3755
    %v3757 = vrot.slane %v3756, 1
    %v3758 = vmax.f32 %v3756, %v3757
    %v3759 = vmax.f32 %v3489, %v3503
    %v3760 = vrot.slane %v3759, 4
    %v3761 = vmax.f32 %v3759, %v3760
    %v3762 = vrot.slane %v3761, 2
    %v3763 = vmax.f32 %v3761, %v3762
    %v3764 = vrot.slane %v3763, 1
    %v3765 = vmax.f32 %v3763, %v3764
    %v3766 = vmax.f32 %v3490, %v3504
    %v3767 = vrot.slane %v3766, 4
    %v3768 = vmax.f32 %v3766, %v3767
    %v3769 = vrot.slane %v3768, 2
    %v3770 = vmax.f32 %v3768, %v3769
    %v3771 = vrot.slane %v3770, 1
    %v3772 = vmax.f32 %v3770, %v3771
    %v3773 = vmax.f32 %v3491, %v3505
    %v3774 = vrot.slane %v3773, 4
    %v3775 = vmax.f32 %v3773, %v3774
    %v3776 = vrot.slane %v3775, 2
    %v3777 = vmax.f32 %v3775, %v3776
    %v3778 = vrot.slane %v3777, 1
    %v3779 = vmax.f32 %v3777, %v3778
    %v3780 = vmax.f32 %v3492, %v3506
    %v3781 = vrot.slane %v3780, 4
    %v3782 = vmax.f32 %v3780, %v3781
    %v3783 = vrot.slane %v3782, 2
    %v3784 = vmax.f32 %v3782, %v3783
    %v3785 = vrot.slane %v3784, 1
    %v3786 = vmax.f32 %v3784, %v3785
    %v3787 = vmax.f32 %v3493, %v3507
    %v3788 = vrot.slane %v3787, 4
    %v3789 = vmax.f32 %v3787, %v3788
    %v3790 = vrot.slane %v3789, 2
    %v3791 = vmax.f32 %v3789, %v3790
    %v3792 = vrot.slane %v3791, 1
    %v3793 = vmax.f32 %v3791, %v3792
    %v3794 = vmax.f32 %v3494, %v3508
    %v3795 = vrot.slane %v3794, 4
    %v3796 = vmax.f32 %v3794, %v3795
    %v3797 = vrot.slane %v3796, 2
    %v3798 = vmax.f32 %v3796, %v3797
    %v3799 = vrot.slane %v3798, 1
    %v3800 = vmax.f32 %v3798, %v3799
    %v3801 = vmax.f32 %v3495, %v3509
    %v3802 = vrot.slane %v3801, 4
    %v3803 = vmax.f32 %v3801, %v3802
    %v3804 = vrot.slane %v3803, 2
    %v3805 = vmax.f32 %v3803, %v3804
    %v3806 = vrot.slane %v3805, 1
    %v3807 = vmax.f32 %v3805, %v3806
    %v3808 = vmax.f32 %v3496, %v3510
    %v3809 = vrot.slane %v3808, 4
    %v3810 = vmax.f32 %v3808, %v3809
    %v3811 = vrot.slane %v3810, 2
    %v3812 = vmax.f32 %v3810, %v3811
    %v3813 = vrot.slane %v3812, 1
    %v3814 = vmax.f32 %v3812, %v3813
    %v3815 = vmax.f32 %v3497, %v3511
    %v3816 = vrot.slane %v3815, 4
    %v3817 = vmax.f32 %v3815, %v3816
    %v3818 = vrot.slane %v3817, 2
    %v3819 = vmax.f32 %v3817, %v3818
    %v3820 = vrot.slane %v3819, 1
    %v3821 = vmax.f32 %v3819, %v3820
    %v3822 = vmax.f32 %v3498, %v3512
    %v3823 = vrot.slane %v3822, 4
    %v3824 = vmax.f32 %v3822, %v3823
    %v3825 = vrot.slane %v3824, 2
    %v3826 = vmax.f32 %v3824, %v3825
    %v3827 = vrot.slane %v3826, 1
    %v3828 = vmax.f32 %v3826, %v3827
    %v3829 = vmax.f32 %v3499, %v3513
    %v3830 = vrot.slane %v3829, 4
    %v3831 = vmax.f32 %v3829, %v3830
    %v3832 = vrot.slane %v3831, 2
    %v3833 = vmax.f32 %v3831, %v3832
    %v3834 = vrot.slane %v3833, 1
    %v3835 = vmax.f32 %v3833, %v3834
    %v3836 = vmax.f32 %v3514, %v3528
    %v3837 = vrot.slane %v3836, 4
    %v3838 = vmax.f32 %v3836, %v3837
    %v3839 = vrot.slane %v3838, 2
    %v3840 = vmax.f32 %v3838, %v3839
    %v3841 = vrot.slane %v3840, 1
    %v3842 = vmax.f32 %v3840, %v3841
    %v3843 = vmax.f32 %v3515, %v3529
    %v3844 = vrot.slane %v3843, 4
    %v3845 = vmax.f32 %v3843, %v3844
    %v3846 = vrot.slane %v3845, 2
    %v3847 = vmax.f32 %v3845, %v3846
    %v3848 = vrot.slane %v3847, 1
    %v3849 = vmax.f32 %v3847, %v3848
    %v3850 = vmax.f32 %v3516, %v3530
    %v3851 = vrot.slane %v3850, 4
    %v3852 = vmax.f32 %v3850, %v3851
    %v3853 = vrot.slane %v3852, 2
    %v3854 = vmax.f32 %v3852, %v3853
    %v3855 = vrot.slane %v3854, 1
    %v3856 = vmax.f32 %v3854, %v3855
    %v3857 = vmax.f32 %v3517, %v3531
    %v3858 = vrot.slane %v3857, 4
    %v3859 = vmax.f32 %v3857, %v3858
    %v3860 = vrot.slane %v3859, 2
    %v3861 = vmax.f32 %v3859, %v3860
    %v3862 = vrot.slane %v3861, 1
    %v3863 = vmax.f32 %v3861, %v3862
    %v3864 = vmax.f32 %v3518, %v3532
    %v3865 = vrot.slane %v3864, 4
    %v3866 = vmax.f32 %v3864, %v3865
    %v3867 = vrot.slane %v3866, 2
    %v3868 = vmax.f32 %v3866, %v3867
    %v3869 = vrot.slane %v3868, 1
    %v3870 = vmax.f32 %v3868, %v3869
    %v3871 = vmax.f32 %v3519, %v3533
    %v3872 = vrot.slane %v3871, 4
    %v3873 = vmax.f32 %v3871, %v3872
    %v3874 = vrot.slane %v3873, 2
    %v3875 = vmax.f32 %v3873, %v3874
    %v3876 = vrot.slane %v3875, 1
    %v3877 = vmax.f32 %v3875, %v3876
    %v3878 = vmax.f32 %v3520, %v3534
    %v3879 = vrot.slane %v3878, 4
    %v3880 = vmax.f32 %v3878, %v3879
    %v3881 = vrot.slane %v3880, 2
    %v3882 = vmax.f32 %v3880, %v3881
    %v3883 = vrot.slane %v3882, 1
    %v3884 = vmax.f32 %v3882, %v3883
    %v3885 = vmax.f32 %v3521, %v3535
    %v3886 = vrot.slane %v3885, 4
    %v3887 = vmax.f32 %v3885, %v3886
    %v3888 = vrot.slane %v3887, 2
    %v3889 = vmax.f32 %v3887, %v3888
    %v3890 = vrot.slane %v3889, 1
    %v3891 = vmax.f32 %v3889, %v3890
    %v3892 = vmax.f32 %v3522, %v3536
    %v3893 = vrot.slane %v3892, 4
    %v3894 = vmax.f32 %v3892, %v3893
    %v3895 = vrot.slane %v3894, 2
    %v3896 = vmax.f32 %v3894, %v3895
    %v3897 = vrot.slane %v3896, 1
    %v3898 = vmax.f32 %v3896, %v3897
    %v3899 = vmax.f32 %v3523, %v3537
    %v3900 = vrot.slane %v3899, 4
    %v3901 = vmax.f32 %v3899, %v3900
    %v3902 = vrot.slane %v3901, 2
    %v3903 = vmax.f32 %v3901, %v3902
    %v3904 = vrot.slane %v3903, 1
    %v3905 = vmax.f32 %v3903, %v3904
    %v3906 = vmax.f32 %v3524, %v3538
    %v3907 = vrot.slane %v3906, 4
    %v3908 = vmax.f32 %v3906, %v3907
    %v3909 = vrot.slane %v3908, 2
    %v3910 = vmax.f32 %v3908, %v3909
    %v3911 = vrot.slane %v3910, 1
    %v3912 = vmax.f32 %v3910, %v3911
    %v3913 = vmax.f32 %v3525, %v3539
    %v3914 = vrot.slane %v3913, 4
    %v3915 = vmax.f32 %v3913, %v3914
    %v3916 = vrot.slane %v3915, 2
    %v3917 = vmax.f32 %v3915, %v3916
    %v3918 = vrot.slane %v3917, 1
    %v3919 = vmax.f32 %v3917, %v3918
    %v3920 = vmax.f32 %v3526, %v3540
    %v3921 = vrot.slane %v3920, 4
    %v3922 = vmax.f32 %v3920, %v3921
    %v3923 = vrot.slane %v3922, 2
    %v3924 = vmax.f32 %v3922, %v3923
    %v3925 = vrot.slane %v3924, 1
    %v3926 = vmax.f32 %v3924, %v3925
    %v3927 = vmax.f32 %v3527, %v3541
    %v3928 = vrot.slane %v3927, 4
    %v3929 = vmax.f32 %v3927, %v3928
    %v3930 = vrot.slane %v3929, 2
    %v3931 = vmax.f32 %v3929, %v3930
    %v3932 = vrot.slane %v3931, 1
    %v3933 = vmax.f32 %v3931, %v3932
    %v3934 = vld [vmem:[#allocation11] sm:$0x1f]
    %v3935 = vld [vmem:[#allocation11 + $0x8] sm:$0x1f]
    %v3936 = vld [vmem:[#allocation11 + $0x10] sm:$0x1f]
    %v3937 = vld [vmem:[#allocation11 + $0x18] sm:$0x1f]
    %v3938 = vld [vmem:[#allocation11 + $0x20] sm:$0x1f]
    %v3939 = vld [vmem:[#allocation11 + $0x28] sm:$0x1f]
    %v3940 = vld [vmem:[#allocation11 + $0x30] sm:$0x1f]
    %v3941 = vld [vmem:[#allocation11 + $0x38] sm:$0x1f]
    %v3942 = vld [vmem:[#allocation11 + $0x40] sm:$0x1f]
    %v3943 = vld [vmem:[#allocation11 + $0x48] sm:$0x1f]
    %v3944 = vld [vmem:[#allocation11 + $0x50] sm:$0x1f]
    %v3945 = vld [vmem:[#allocation11 + $0x58] sm:$0x1f]
    %v3946 = vld [vmem:[#allocation11 + $0x60] sm:$0x1f]
    %v3947 = vld [vmem:[#allocation11 + $0x68] sm:$0x1f]
    %vm3948 = vcmask 39936
    %v3950 = vsel %vm3948, %v3401, 0
    %v3953 = vsel %vm389, %v3934, 0
    %v3956 = vsel %vm389, %v3935, 0
    %v3959 = vsel %vm389, %v3936, 0
    %v3962 = vsel %vm389, %v3937, 0
    %v3965 = vsel %vm389, %v3938, 0
    %v3968 = vsel %vm389, %v3939, 0
    %v3971 = vsel %vm389, %v3940, 0
    %v3974 = vsel %vm389, %v3941, 0
    %v3977 = vsel %vm389, %v3942, 0
    %v3980 = vsel %vm389, %v3943, 0
    %v3983 = vsel %vm389, %v3944, 0
    %v3986 = vsel %vm389, %v3945, 0
    %v3989 = vsel %vm389, %v3946, 0
    %v3992 = vsel %vm389, %v3947, 0
    %3994 = vmatprep.subr.mxu0 %v3956
    %3995 = vmatpush1.msra.mxu0 %v3953
    %3996 = vmatprep.subr.mxu0 0.0
    %3997 = vmatpush1.msra.mxu0 0.0
    %3998 = vmatprep.subr.mxu0 0.0
    %3999 = vmatpush1.msra.mxu0 0.0
    %4000 = vmatprep.subr.mxu0 0.0
    %4001 = vmatpush1.msra.mxu0 0.0
    %4002 = vmatprep.subr.mxu0 0.0
    %4003 = vmatpush1.msra.mxu0 0.0
    %4004 = vmatprep.subr.mxu0 0.0
    %4005 = vmatpush1.msra.mxu0 0.0
    %4006 = vmatprep.subr.mxu0 0.0
    %4007 = vmatpush1.msra.mxu0 0.0
    %4008 = vmatprep.subr.mxu0 0.0
    %4009 = vmatpush1.msra.mxu0 0.0
    %4010 = vmatprep.subr.mxu0 0.0
    %4011 = vmatpush1.msra.mxu0 0.0
    %4012 = vmatprep.subr.mxu0 0.0
    %4013 = vmatpush1.msra.mxu0 0.0
    %4014 = vmatprep.subr.mxu0 0.0
    %4015 = vmatpush1.msra.mxu0 0.0
    %4016 = vmatprep.subr.mxu0 0.0
    %4017 = vmatpush1.msra.mxu0 0.0
    %4018 = vmatprep.subr.mxu0 0.0
    %4019 = vmatpush1.msra.mxu0 0.0
    %4020 = vmatprep.subr.mxu0 0.0
    %4021 = vmatpush1.msra.mxu0 0.0
    %4022 = vmatprep.subr.mxu0 0.0
    %4023 = vmatpush1.msra.mxu0 0.0
    %4024 = vmatprep.subr.mxu0 0.0
    %4025 = vmatpush1.msra.mxu0 0.0
    %4026 = vmatprep.subr.mxu0 0.0
    %4027 = vmatpush1.msra.mxu0 0.0
    %4028 = vmatprep.subr.mxu0 0.0
    %4029 = vmatpush1.msra.mxu0 0.0
    %4030 = vmatprep.subr.mxu0 0.0
    %4031 = vmatpush1.msra.mxu0 0.0
    %4032 = vmatprep.subr.mxu0 0.0
    %4033 = vmatpush1.msra.mxu0 0.0
    %4034 = vmatprep.subr.mxu0 0.0
    %4035 = vmatpush1.msra.mxu0 0.0
    %4036 = vmatprep.subr.mxu0 0.0
    %4037 = vmatpush1.msra.mxu0 0.0
    %4038 = vmatprep.subr.mxu0 0.0
    %4039 = vmatpush1.msra.mxu0 0.0
    %4040 = vmatprep.subr.mxu0 0.0
    %4041 = vmatpush1.msra.mxu0 0.0
    %4042 = vmatprep.subr.mxu0 0.0
    %4043 = vmatpush1.msra.mxu0 0.0
    %4044 = vmatprep.subr.mxu0 0.0
    %4045 = vmatpush1.msra.mxu0 0.0
    %4046 = vmatprep.subr.mxu0 0.0
    %4047 = vmatpush1.msra.mxu0 0.0
    %4048 = vmatprep.subr.mxu0 0.0
    %4049 = vmatpush1.msra.mxu0 0.0
    %4050 = vmatprep.subr.mxu0 0.0
    %4051 = vmatpush1.msra.mxu0 0.0
    %4052 = vmatprep.subr.mxu0 0.0
    %4053 = vmatpush1.msra.mxu0 0.0
    %4054 = vmatprep.subr.mxu0 0.0
    %4055 = vmatpush1.msra.mxu0 0.0
    %4056 = vmatprep.subr.mxu0 0.0
    %4057 = vmatpush1.msra.mxu0 0.0
    %4058 = vmatprep.mubr.f32.mxu0 0.0
    %4059 = vmatmul.mubr.f32.gmra.mrb[0].mxu0 %v3950
    %v4060 = vpop.f32.mrb[0].mxu0
    %v4061 = vadd.f32 0.0, %v4060
    %v4062 = vpop.f32.mrb[0].mxu0
    %v4063 = vadd.f32 0.0, %v4062
    %4064 = vdwg.mxu0
    %4065 = vmatprep.subr.mxu0 %v3962
    %4066 = vmatpush1.msra.mxu0 %v3959
    %4067 = vmatprep.subr.mxu0 0.0
    %4068 = vmatpush1.msra.mxu0 0.0
    %4069 = vmatprep.subr.mxu0 0.0
    %4070 = vmatpush1.msra.mxu0 0.0
    %4071 = vmatprep.subr.mxu0 0.0
    %4072 = vmatpush1.msra.mxu0 0.0
    %4073 = vmatprep.subr.mxu0 0.0
    %4074 = vmatpush1.msra.mxu0 0.0
    %4075 = vmatprep.subr.mxu0 0.0
    %4076 = vmatpush1.msra.mxu0 0.0
    %4077 = vmatprep.subr.mxu0 0.0
    %4078 = vmatpush1.msra.mxu0 0.0
    %4079 = vmatprep.subr.mxu0 0.0
    %4080 = vmatpush1.msra.mxu0 0.0
    %4081 = vmatprep.subr.mxu0 0.0
    %4082 = vmatpush1.msra.mxu0 0.0
    %4083 = vmatprep.subr.mxu0 0.0
    %4084 = vmatpush1.msra.mxu0 0.0
    %4085 = vmatprep.subr.mxu0 0.0
    %4086 = vmatpush1.msra.mxu0 0.0
    %4087 = vmatprep.subr.mxu0 0.0
    %4088 = vmatpush1.msra.mxu0 0.0
    %4089 = vmatprep.subr.mxu0 0.0
    %4090 = vmatpush1.msra.mxu0 0.0
    %4091 = vmatprep.subr.mxu0 0.0
    %4092 = vmatpush1.msra.mxu0 0.0
    %4093 = vmatprep.subr.mxu0 0.0
    %4094 = vmatpush1.msra.mxu0 0.0
    %4095 = vmatprep.subr.mxu0 0.0
    %4096 = vmatpush1.msra.mxu0 0.0
    %4097 = vmatprep.subr.mxu0 0.0
    %4098 = vmatpush1.msra.mxu0 0.0
    %4099 = vmatprep.subr.mxu0 0.0
    %4100 = vmatpush1.msra.mxu0 0.0
    %4101 = vmatprep.subr.mxu0 0.0
    %4102 = vmatpush1.msra.mxu0 0.0
    %4103 = vmatprep.subr.mxu0 0.0
    %4104 = vmatpush1.msra.mxu0 0.0
    %4105 = vmatprep.subr.mxu0 0.0
    %4106 = vmatpush1.msra.mxu0 0.0
    %4107 = vmatprep.subr.mxu0 0.0
    %4108 = vmatpush1.msra.mxu0 0.0
    %4109 = vmatprep.subr.mxu0 0.0
    %4110 = vmatpush1.msra.mxu0 0.0
    %4111 = vmatprep.subr.mxu0 0.0
    %4112 = vmatpush1.msra.mxu0 0.0
    %4113 = vmatprep.subr.mxu0 0.0
    %4114 = vmatpush1.msra.mxu0 0.0
    %4115 = vmatprep.subr.mxu0 0.0
    %4116 = vmatpush1.msra.mxu0 0.0
    %4117 = vmatprep.subr.mxu0 0.0
    %4118 = vmatpush1.msra.mxu0 0.0
    %4119 = vmatprep.subr.mxu0 0.0
    %4120 = vmatpush1.msra.mxu0 0.0
    %4121 = vmatprep.subr.mxu0 0.0
    %4122 = vmatpush1.msra.mxu0 0.0
    %4123 = vmatprep.subr.mxu0 0.0
    %4124 = vmatpush1.msra.mxu0 0.0
    %4125 = vmatprep.subr.mxu0 0.0
    %4126 = vmatpush1.msra.mxu0 0.0
    %4127 = vmatprep.subr.mxu0 0.0
    %4128 = vmatpush1.msra.mxu0 0.0
    %4129 = vmatprep.mubr.f32.mxu0 0.0
    %4130 = vmatmul.mubr.f32.gmra.mrb[0].mxu0 %v3950
    %v4131 = vpop.f32.mrb[0].mxu0
    %v4132 = vadd.f32 0.0, %v4131
    %v4133 = vpop.f32.mrb[0].mxu0
    %v4134 = vadd.f32 0.0, %v4133
    %4135 = vdwg.mxu0
    %4136 = vmatprep.subr.mxu0 %v3968
    %4137 = vmatpush1.msra.mxu0 %v3965
    %4138 = vmatprep.subr.mxu0 0.0
    %4139 = vmatpush1.msra.mxu0 0.0
    %4140 = vmatprep.subr.mxu0 0.0
    %4141 = vmatpush1.msra.mxu0 0.0
    %4142 = vmatprep.subr.mxu0 0.0
    %4143 = vmatpush1.msra.mxu0 0.0
    %4144 = vmatprep.subr.mxu0 0.0
    %4145 = vmatpush1.msra.mxu0 0.0
    %4146 = vmatprep.subr.mxu0 0.0
    %4147 = vmatpush1.msra.mxu0 0.0
    %4148 = vmatprep.subr.mxu0 0.0
    %4149 = vmatpush1.msra.mxu0 0.0
    %4150 = vmatprep.subr.mxu0 0.0
    %4151 = vmatpush1.msra.mxu0 0.0
    %4152 = vmatprep.subr.mxu0 0.0
    %4153 = vmatpush1.msra.mxu0 0.0
    %4154 = vmatprep.subr.mxu0 0.0
    %4155 = vmatpush1.msra.mxu0 0.0
    %4156 = vmatprep.subr.mxu0 0.0
    %4157 = vmatpush1.msra.mxu0 0.0
    %4158 = vmatprep.subr.mxu0 0.0
    %4159 = vmatpush1.msra.mxu0 0.0
    %4160 = vmatprep.subr.mxu0 0.0
    %4161 = vmatpush1.msra.mxu0 0.0
    %4162 = vmatprep.subr.mxu0 0.0
    %4163 = vmatpush1.msra.mxu0 0.0
    %4164 = vmatprep.subr.mxu0 0.0
    %4165 = vmatpush1.msra.mxu0 0.0
    %4166 = vmatprep.subr.mxu0 0.0
    %4167 = vmatpush1.msra.mxu0 0.0
    %4168 = vmatprep.subr.mxu0 0.0
    %4169 = vmatpush1.msra.mxu0 0.0
    %4170 = vmatprep.subr.mxu0 0.0
    %4171 = vmatpush1.msra.mxu0 0.0
    %4172 = vmatprep.subr.mxu0 0.0
    %4173 = vmatpush1.msra.mxu0 0.0
    %4174 = vmatprep.subr.mxu0 0.0
    %4175 = vmatpush1.msra.mxu0 0.0
    %4176 = vmatprep.subr.mxu0 0.0
    %4177 = vmatpush1.msra.mxu0 0.0
    %4178 = vmatprep.subr.mxu0 0.0
    %4179 = vmatpush1.msra.mxu0 0.0
    %4180 = vmatprep.subr.mxu0 0.0
    %4181 = vmatpush1.msra.mxu0 0.0
    %4182 = vmatprep.subr.mxu0 0.0
    %4183 = vmatpush1.msra.mxu0 0.0
    %4184 = vmatprep.subr.mxu0 0.0
    %4185 = vmatpush1.msra.mxu0 0.0
    %4186 = vmatprep.subr.mxu0 0.0
    %4187 = vmatpush1.msra.mxu0 0.0
    %4188 = vmatprep.subr.mxu0 0.0
    %4189 = vmatpush1.msra.mxu0 0.0
    %4190 = vmatprep.subr.mxu0 0.0
    %4191 = vmatpush1.msra.mxu0 0.0
    %4192 = vmatprep.subr.mxu0 0.0
    %4193 = vmatpush1.msra.mxu0 0.0
    %4194 = vmatprep.subr.mxu0 0.0
    %4195 = vmatpush1.msra.mxu0 0.0
    %4196 = vmatprep.subr.mxu0 0.0
    %4197 = vmatpush1.msra.mxu0 0.0
    %4198 = vmatprep.subr.mxu0 0.0
    %4199 = vmatpush1.msra.mxu0 0.0
    %4200 = vmatprep.mubr.f32.mxu0 0.0
    %4201 = vmatmul.mubr.f32.gmra.mrb[0].mxu0 %v3950
    %v4202 = vpop.f32.mrb[0].mxu0
    %v4203 = vadd.f32 0.0, %v4202
    %v4204 = vpop.f32.mrb[0].mxu0
    %v4205 = vadd.f32 0.0, %v4204
    %4206 = vdwg.mxu0
    %4207 = vmatprep.subr.mxu0 %v3974
    %4208 = vmatpush1.msra.mxu0 %v3971
    %4209 = vmatprep.subr.mxu0 0.0
    %4210 = vmatpush1.msra.mxu0 0.0
    %4211 = vmatprep.subr.mxu0 0.0
    %4212 = vmatpush1.msra.mxu0 0.0
    %4213 = vmatprep.subr.mxu0 0.0
    %4214 = vmatpush1.msra.mxu0 0.0
    %4215 = vmatprep.subr.mxu0 0.0
    %4216 = vmatpush1.msra.mxu0 0.0
    %4217 = vmatprep.subr.mxu0 0.0
    %4218 = vmatpush1.msra.mxu0 0.0
    %4219 = vmatprep.subr.mxu0 0.0
    %4220 = vmatpush1.msra.mxu0 0.0
    %4221 = vmatprep.subr.mxu0 0.0
    %4222 = vmatpush1.msra.mxu0 0.0
    %4223 = vmatprep.subr.mxu0 0.0
    %4224 = vmatpush1.msra.mxu0 0.0
    %4225 = vmatprep.subr.mxu0 0.0
    %4226 = vmatpush1.msra.mxu0 0.0
    %4227 = vmatprep.subr.mxu0 0.0
    %4228 = vmatpush1.msra.mxu0 0.0
    %4229 = vmatprep.subr.mxu0 0.0
    %4230 = vmatpush1.msra.mxu0 0.0
    %4231 = vmatprep.subr.mxu0 0.0
    %4232 = vmatpush1.msra.mxu0 0.0
    %4233 = vmatprep.subr.mxu0 0.0
    %4234 = vmatpush1.msra.mxu0 0.0
    %4235 = vmatprep.subr.mxu0 0.0
    %4236 = vmatpush1.msra.mxu0 0.0
    %4237 = vmatprep.subr.mxu0 0.0
    %4238 = vmatpush1.msra.mxu0 0.0
    %4239 = vmatprep.subr.mxu0 0.0
    %4240 = vmatpush1.msra.mxu0 0.0
    %4241 = vmatprep.subr.mxu0 0.0
    %4242 = vmatpush1.msra.mxu0 0.0
    %4243 = vmatprep.subr.mxu0 0.0
    %4244 = vmatpush1.msra.mxu0 0.0
    %4245 = vmatprep.subr.mxu0 0.0
    %4246 = vmatpush1.msra.mxu0 0.0
    %4247 = vmatprep.subr.mxu0 0.0
    %4248 = vmatpush1.msra.mxu0 0.0
    %4249 = vmatprep.subr.mxu0 0.0
    %4250 = vmatpush1.msra.mxu0 0.0
    %4251 = vmatprep.subr.mxu0 0.0
    %4252 = vmatpush1.msra.mxu0 0.0
    %4253 = vmatprep.subr.mxu0 0.0
    %4254 = vmatpush1.msra.mxu0 0.0
    %4255 = vmatprep.subr.mxu0 0.0
    %4256 = vmatpush1.msra.mxu0 0.0
    %4257 = vmatprep.subr.mxu0 0.0
    %4258 = vmatpush1.msra.mxu0 0.0
    %4259 = vmatprep.subr.mxu0 0.0
    %4260 = vmatpush1.msra.mxu0 0.0
    %4261 = vmatprep.subr.mxu0 0.0
    %4262 = vmatpush1.msra.mxu0 0.0
    %4263 = vmatprep.subr.mxu0 0.0
    %4264 = vmatpush1.msra.mxu0 0.0
    %4265 = vmatprep.subr.mxu0 0.0
    %4266 = vmatpush1.msra.mxu0 0.0
    %4267 = vmatprep.subr.mxu0 0.0
    %4268 = vmatpush1.msra.mxu0 0.0
    %4269 = vmatprep.subr.mxu0 0.0
    %4270 = vmatpush1.msra.mxu0 0.0
    %4271 = vmatprep.mubr.f32.mxu0 0.0
    %4272 = vmatmul.mubr.f32.gmra.mrb[0].mxu0 %v3950
    %v4273 = vpop.f32.mrb[0].mxu0
    %v4274 = vadd.f32 0.0, %v4273
    %v4275 = vpop.f32.mrb[0].mxu0
    %v4276 = vadd.f32 0.0, %v4275
    %4277 = vdwg.mxu0
    %4278 = vmatprep.subr.mxu0 %v3980
    %4279 = vmatpush1.msra.mxu0 %v3977
    %4280 = vmatprep.subr.mxu0 0.0
    %4281 = vmatpush1.msra.mxu0 0.0
    %4282 = vmatprep.subr.mxu0 0.0
    %4283 = vmatpush1.msra.mxu0 0.0
    %4284 = vmatprep.subr.mxu0 0.0
    %4285 = vmatpush1.msra.mxu0 0.0
    %4286 = vmatprep.subr.mxu0 0.0
    %4287 = vmatpush1.msra.mxu0 0.0
    %4288 = vmatprep.subr.mxu0 0.0
    %4289 = vmatpush1.msra.mxu0 0.0
    %4290 = vmatprep.subr.mxu0 0.0
    %4291 = vmatpush1.msra.mxu0 0.0
    %4292 = vmatprep.subr.mxu0 0.0
    %4293 = vmatpush1.msra.mxu0 0.0
    %4294 = vmatprep.subr.mxu0 0.0
    %4295 = vmatpush1.msra.mxu0 0.0
    %4296 = vmatprep.subr.mxu0 0.0
    %4297 = vmatpush1.msra.mxu0 0.0
    %4298 = vmatprep.subr.mxu0 0.0
    %4299 = vmatpush1.msra.mxu0 0.0
    %4300 = vmatprep.subr.mxu0 0.0
    %4301 = vmatpush1.msra.mxu0 0.0
    %4302 = vmatprep.subr.mxu0 0.0
    %4303 = vmatpush1.msra.mxu0 0.0
    %4304 = vmatprep.subr.mxu0 0.0
    %4305 = vmatpush1.msra.mxu0 0.0
    %4306 = vmatprep.subr.mxu0 0.0
    %4307 = vmatpush1.msra.mxu0 0.0
    %4308 = vmatprep.subr.mxu0 0.0
    %4309 = vmatpush1.msra.mxu0 0.0
    %4310 = vmatprep.subr.mxu0 0.0
    %4311 = vmatpush1.msra.mxu0 0.0
    %4312 = vmatprep.subr.mxu0 0.0
    %4313 = vmatpush1.msra.mxu0 0.0
    %4314 = vmatprep.subr.mxu0 0.0
    %4315 = vmatpush1.msra.mxu0 0.0
    %4316 = vmatprep.subr.mxu0 0.0
    %4317 = vmatpush1.msra.mxu0 0.0
    %4318 = vmatprep.subr.mxu0 0.0
    %4319 = vmatpush1.msra.mxu0 0.0
    %4320 = vmatprep.subr.mxu0 0.0
    %4321 = vmatpush1.msra.mxu0 0.0
    %4322 = vmatprep.subr.mxu0 0.0
    %4323 = vmatpush1.msra.mxu0 0.0
    %4324 = vmatprep.subr.mxu0 0.0
    %4325 = vmatpush1.msra.mxu0 0.0
    %4326 = vmatprep.subr.mxu0 0.0
    %4327 = vmatpush1.msra.mxu0 0.0
    %4328 = vmatprep.subr.mxu0 0.0
    %4329 = vmatpush1.msra.mxu0 0.0
    %4330 = vmatprep.subr.mxu0 0.0
    %4331 = vmatpush1.msra.mxu0 0.0
    %4332 = vmatprep.subr.mxu0 0.0
    %4333 = vmatpush1.msra.mxu0 0.0
    %4334 = vmatprep.subr.mxu0 0.0
    %4335 = vmatpush1.msra.mxu0 0.0
    %4336 = vmatprep.subr.mxu0 0.0
    %4337 = vmatpush1.msra.mxu0 0.0
    %4338 = vmatprep.subr.mxu0 0.0
    %4339 = vmatpush1.msra.mxu0 0.0
    %4340 = vmatprep.subr.mxu0 0.0
    %4341 = vmatpush1.msra.mxu0 0.0
    %4342 = vmatprep.mubr.f32.mxu0 0.0
    %4343 = vmatmul.mubr.f32.gmra.mrb[0].mxu0 %v3950
    %v4344 = vpop.f32.mrb[0].mxu0
    %v4345 = vadd.f32 0.0, %v4344
    %v4346 = vpop.f32.mrb[0].mxu0
    %v4347 = vadd.f32 0.0, %v4346
    %4348 = vdwg.mxu0
    %4349 = vmatprep.subr.mxu0 %v3986
    %4350 = vmatpush1.msra.mxu0 %v3983
    %4351 = vmatprep.subr.mxu0 0.0
    %4352 = vmatpush1.msra.mxu0 0.0
    %4353 = vmatprep.subr.mxu0 0.0
    %4354 = vmatpush1.msra.mxu0 0.0
    %4355 = vmatprep.subr.mxu0 0.0
    %4356 = vmatpush1.msra.mxu0 0.0
    %4357 = vmatprep.subr.mxu0 0.0
    %4358 = vmatpush1.msra.mxu0 0.0
    %4359 = vmatprep.subr.mxu0 0.0
    %4360 = vmatpush1.msra.mxu0 0.0
    %4361 = vmatprep.subr.mxu0 0.0
    %4362 = vmatpush1.msra.mxu0 0.0
    %4363 = vmatprep.subr.mxu0 0.0
    %4364 = vmatpush1.msra.mxu0 0.0
    %4365 = vmatprep.subr.mxu0 0.0
    %4366 = vmatpush1.msra.mxu0 0.0
    %4367 = vmatprep.subr.mxu0 0.0
    %4368 = vmatpush1.msra.mxu0 0.0
    %4369 = vmatprep.subr.mxu0 0.0
    %4370 = vmatpush1.msra.mxu0 0.0
    %4371 = vmatprep.subr.mxu0 0.0
    %4372 = vmatpush1.msra.mxu0 0.0
    %4373 = vmatprep.subr.mxu0 0.0
    %4374 = vmatpush1.msra.mxu0 0.0
    %4375 = vmatprep.subr.mxu0 0.0
    %4376 = vmatpush1.msra.mxu0 0.0
    %4377 = vmatprep.subr.mxu0 0.0
    %4378 = vmatpush1.msra.mxu0 0.0
    %4379 = vmatprep.subr.mxu0 0.0
    %4380 = vmatpush1.msra.mxu0 0.0
    %4381 = vmatprep.subr.mxu0 0.0
    %4382 = vmatpush1.msra.mxu0 0.0
    %4383 = vmatprep.subr.mxu0 0.0
    %4384 = vmatpush1.msra.mxu0 0.0
    %4385 = vmatprep.subr.mxu0 0.0
    %4386 = vmatpush1.msra.mxu0 0.0
    %4387 = vmatprep.subr.mxu0 0.0
    %4388 = vmatpush1.msra.mxu0 0.0
    %4389 = vmatprep.subr.mxu0 0.0
    %4390 = vmatpush1.msra.mxu0 0.0
    %4391 = vmatprep.subr.mxu0 0.0
    %4392 = vmatpush1.msra.mxu0 0.0
    %4393 = vmatprep.subr.mxu0 0.0
    %4394 = vmatpush1.msra.mxu0 0.0
    %4395 = vmatprep.subr.mxu0 0.0
    %4396 = vmatpush1.msra.mxu0 0.0
    %4397 = vmatprep.subr.mxu0 0.0
    %4398 = vmatpush1.msra.mxu0 0.0
    %4399 = vmatprep.subr.mxu0 0.0
    %4400 = vmatpush1.msra.mxu0 0.0
    %4401 = vmatprep.subr.mxu0 0.0
    %4402 = vmatpush1.msra.mxu0 0.0
    %4403 = vmatprep.subr.mxu0 0.0
    %4404 = vmatpush1.msra.mxu0 0.0
    %4405 = vmatprep.subr.mxu0 0.0
    %4406 = vmatpush1.msra.mxu0 0.0
    %4407 = vmatprep.subr.mxu0 0.0
    %4408 = vmatpush1.msra.mxu0 0.0
    %4409 = vmatprep.subr.mxu0 0.0
    %4410 = vmatpush1.msra.mxu0 0.0
    %4411 = vmatprep.subr.mxu0 0.0
    %4412 = vmatpush1.msra.mxu0 0.0
    %4413 = vmatprep.mubr.f32.mxu0 0.0
    %4414 = vmatmul.mubr.f32.gmra.mrb[0].mxu0 %v3950
    %v4415 = vpop.f32.mrb[0].mxu0
    %v4416 = vadd.f32 0.0, %v4415
    %v4417 = vpop.f32.mrb[0].mxu0
    %v4418 = vadd.f32 0.0, %v4417
    %4419 = vdwg.mxu0
    %4420 = vmatprep.subr.mxu0 %v3992
    %4421 = vmatpush1.msra.mxu0 %v3989
    %4422 = vmatprep.subr.mxu0 0.0
    %4423 = vmatpush1.msra.mxu0 0.0
    %4424 = vmatprep.subr.mxu0 0.0
    %4425 = vmatpush1.msra.mxu0 0.0
    %4426 = vmatprep.subr.mxu0 0.0
    %4427 = vmatpush1.msra.mxu0 0.0
    %4428 = vmatprep.subr.mxu0 0.0
    %4429 = vmatpush1.msra.mxu0 0.0
    %4430 = vmatprep.subr.mxu0 0.0
    %4431 = vmatpush1.msra.mxu0 0.0
    %4432 = vmatprep.subr.mxu0 0.0
    %4433 = vmatpush1.msra.mxu0 0.0
    %4434 = vmatprep.subr.mxu0 0.0
    %4435 = vmatpush1.msra.mxu0 0.0
    %4436 = vmatprep.subr.mxu0 0.0
    %4437 = vmatpush1.msra.mxu0 0.0
    %4438 = vmatprep.subr.mxu0 0.0
    %4439 = vmatpush1.msra.mxu0 0.0
    %4440 = vmatprep.subr.mxu0 0.0
    %4441 = vmatpush1.msra.mxu0 0.0
    %4442 = vmatprep.subr.mxu0 0.0
    %4443 = vmatpush1.msra.mxu0 0.0
    %4444 = vmatprep.subr.mxu0 0.0
    %4445 = vmatpush1.msra.mxu0 0.0
    %4446 = vmatprep.subr.mxu0 0.0
    %4447 = vmatpush1.msra.mxu0 0.0
    %4448 = vmatprep.subr.mxu0 0.0
    %4449 = vmatpush1.msra.mxu0 0.0
    %4450 = vmatprep.subr.mxu0 0.0
    %4451 = vmatpush1.msra.mxu0 0.0
    %4452 = vmatprep.subr.mxu0 0.0
    %4453 = vmatpush1.msra.mxu0 0.0
    %4454 = vmatprep.subr.mxu0 0.0
    %4455 = vmatpush1.msra.mxu0 0.0
    %4456 = vmatprep.subr.mxu0 0.0
    %4457 = vmatpush1.msra.mxu0 0.0
    %4458 = vmatprep.subr.mxu0 0.0
    %4459 = vmatpush1.msra.mxu0 0.0
    %4460 = vmatprep.subr.mxu0 0.0
    %4461 = vmatpush1.msra.mxu0 0.0
    %4462 = vmatprep.subr.mxu0 0.0
    %4463 = vmatpush1.msra.mxu0 0.0
    %4464 = vmatprep.subr.mxu0 0.0
    %4465 = vmatpush1.msra.mxu0 0.0
    %4466 = vmatprep.subr.mxu0 0.0
    %4467 = vmatpush1.msra.mxu0 0.0
    %4468 = vmatprep.subr.mxu0 0.0
    %4469 = vmatpush1.msra.mxu0 0.0
    %4470 = vmatprep.subr.mxu0 0.0
    %4471 = vmatpush1.msra.mxu0 0.0
    %4472 = vmatprep.subr.mxu0 0.0
    %4473 = vmatpush1.msra.mxu0 0.0
    %4474 = vmatprep.subr.mxu0 0.0
    %4475 = vmatpush1.msra.mxu0 0.0
    %4476 = vmatprep.subr.mxu0 0.0
    %4477 = vmatpush1.msra.mxu0 0.0
    %4478 = vmatprep.subr.mxu0 0.0
    %4479 = vmatpush1.msra.mxu0 0.0
    %4480 = vmatprep.subr.mxu0 0.0
    %4481 = vmatpush1.msra.mxu0 0.0
    %4482 = vmatprep.subr.mxu0 0.0
    %4483 = vmatpush1.msra.mxu0 0.0
    %4484 = vmatprep.mubr.f32.mxu0 0.0
    %4485 = vmatmul.mubr.f32.gmra.mrb[0].mxu0 %v3950
    %v4486 = vpop.f32.mrb[0].mxu0
    %v4487 = vadd.f32 0.0, %v4486
    %v4488 = vpop.f32.mrb[0].mxu0
    %v4489 = vadd.f32 0.0, %v4488
    %4490 = vdwg.mxu0
    %v4505 = vrot.slane %v4061, 1
    %v4506 = vrot.slane %v4063, 1
    %v4507 = vrot.slane %v4132, 1
    %v4508 = vrot.slane %v4134, 1
    %v4509 = vrot.slane %v4203, 1
    %v4510 = vrot.slane %v4205, 1
    %v4511 = vrot.slane %v4274, 1
    %v4512 = vrot.slane %v4276, 1
    %v4513 = vrot.slane %v4345, 1
    %v4514 = vrot.slane %v4347, 1
    %v4515 = vrot.slane %v4416, 1
    %v4516 = vrot.slane %v4418, 1
    %v4517 = vrot.slane %v4487, 1
    %v4518 = vrot.slane %v4489, 1
    %v4519 = vrot.slane %v4061, 2
    %v4520 = vrot.slane %v4063, 2
    %v4521 = vrot.slane %v4132, 2
    %v4522 = vrot.slane %v4134, 2
    %v4523 = vrot.slane %v4203, 2
    %v4524 = vrot.slane %v4205, 2
    %v4525 = vrot.slane %v4274, 2
    %v4526 = vrot.slane %v4276, 2
    %v4527 = vrot.slane %v4345, 2
    %v4528 = vrot.slane %v4347, 2
    %v4529 = vrot.slane %v4416, 2
    %v4530 = vrot.slane %v4418, 2
    %v4531 = vrot.slane %v4487, 2
    %v4532 = vrot.slane %v4489, 2
    %v4533 = vrot.slane %v4061, 3
    %v4534 = vrot.slane %v4063, 3
    %v4535 = vrot.slane %v4132, 3
    %v4536 = vrot.slane %v4134, 3
    %v4537 = vrot.slane %v4203, 3
    %v4538 = vrot.slane %v4205, 3
    %v4539 = vrot.slane %v4274, 3
    %v4540 = vrot.slane %v4276, 3
    %v4541 = vrot.slane %v4345, 3
    %v4542 = vrot.slane %v4347, 3
    %v4543 = vrot.slane %v4416, 3
    %v4544 = vrot.slane %v4418, 3
    %v4545 = vrot.slane %v4487, 3
    %v4546 = vrot.slane %v4489, 3
    %v4603 = vmul.f32 %v3548, %v4061
    %v4604 = vmul.f32 %v3555, %v4063
    %v4605 = vmul.f32 %v3562, %v4132
    %v4606 = vmul.f32 %v3569, %v4134
    %v4607 = vmul.f32 %v3576, %v4203
    %v4608 = vmul.f32 %v3583, %v4205
    %v4609 = vmul.f32 %v3590, %v4274
    %v4610 = vmul.f32 %v3597, %v4276
    %v4611 = vmul.f32 %v3604, %v4345
    %v4612 = vmul.f32 %v3611, %v4347
    %v4613 = vmul.f32 %v3618, %v4416
    %v4614 = vmul.f32 %v3625, %v4418
    %v4615 = vmul.f32 %v3632, %v4487
    %v4616 = vmul.f32 %v3639, %v4489
    %v4617 = vmul.f32 %v3646, %v4505
    %v4618 = vmul.f32 %v3653, %v4506
    %v4619 = vmul.f32 %v3660, %v4507
    %v4620 = vmul.f32 %v3667, %v4508
    %v4621 = vmul.f32 %v3674, %v4509
    %v4622 = vmul.f32 %v3681, %v4510
    %v4623 = vmul.f32 %v3688, %v4511
    %v4624 = vmul.f32 %v3695, %v4512
    %v4625 = vmul.f32 %v3702, %v4513
    %v4626 = vmul.f32 %v3709, %v4514
    %v4627 = vmul.f32 %v3716, %v4515
    %v4628 = vmul.f32 %v3723, %v4516
    %v4629 = vmul.f32 %v3730, %v4517
    %v4630 = vmul.f32 %v3737, %v4518
    %v4631 = vmul.f32 %v3744, %v4519
    %v4632 = vmul.f32 %v3751, %v4520
    %v4633 = vmul.f32 %v3758, %v4521
    %v4634 = vmul.f32 %v3765, %v4522
    %v4635 = vmul.f32 %v3772, %v4523
    %v4636 = vmul.f32 %v3779, %v4524
    %v4637 = vmul.f32 %v3786, %v4525
    %v4638 = vmul.f32 %v3793, %v4526
    %v4639 = vmul.f32 %v3800, %v4527
    %v4640 = vmul.f32 %v3807, %v4528
    %v4641 = vmul.f32 %v3814, %v4529
    %v4642 = vmul.f32 %v3821, %v4530
    %v4643 = vmul.f32 %v3828, %v4531
    %v4644 = vmul.f32 %v3835, %v4532
    %v4645 = vmul.f32 %v3842, %v4533
    %v4646 = vmul.f32 %v3849, %v4534
    %v4647 = vmul.f32 %v3856, %v4535
    %v4648 = vmul.f32 %v3863, %v4536
    %v4649 = vmul.f32 %v3870, %v4537
    %v4650 = vmul.f32 %v3877, %v4538
    %v4651 = vmul.f32 %v3884, %v4539
    %v4652 = vmul.f32 %v3891, %v4540
    %v4653 = vmul.f32 %v3898, %v4541
    %v4654 = vmul.f32 %v3905, %v4542
    %v4655 = vmul.f32 %v3912, %v4543
    %v4656 = vmul.f32 %v3919, %v4544
    %v4657 = vmul.f32 %v3926, %v4545
    %v4658 = vmul.f32 %v3933, %v4546
    %v4659 = vld [vmem:[#allocation20] sm:$0x1]
    %v4660 = vld [vmem:[%s6] sm:$0xff]
    %v4661 = vld [vmem:[%s6 + $0x8] sm:$0xff]
    %v4662 = vld [vmem:[%s6 + $0x10] sm:$0xff]
    %v4663 = vld [vmem:[%s6 + $0x18] sm:$0xff]
    %v4664 = vld [vmem:[%s6 + $0x20] sm:$0xff]
    %v4665 = vld [vmem:[%s6 + $0x28] sm:$0xff]
    %v4666 = vld [vmem:[%s6 + $0x30] sm:$0xff]
    %v4667 = vld [vmem:[%s6 + $0x38] sm:$0xff]
    %v4668 = vld [vmem:[%s6 + $0x40] sm:$0xff]
    %v4669 = vld [vmem:[%s6 + $0x48] sm:$0xff]
    %v4670 = vld [vmem:[%s6 + $0x50] sm:$0xff]
    %v4671 = vld [vmem:[%s6 + $0x58] sm:$0xff]
    %v4672 = vld [vmem:[%s6 + $0x60] sm:$0xff]
    %v4673 = vld [vmem:[%s6 + $0x68] sm:$0xff]
    %v4674 = vld [vmem:[%s6 + $0x70] sm:$0xff]
    %v4675 = vld [vmem:[%s6 + $0x78] sm:$0xff]
    %v4676 = vld [vmem:[%s6 + $0x80] sm:$0xff]
    %v4677 = vld [vmem:[%s6 + $0x88] sm:$0xff]
    %v4678 = vld [vmem:[%s6 + $0x90] sm:$0xff]
    %v4679 = vld [vmem:[%s6 + $0x98] sm:$0xff]
    %v4680 = vld [vmem:[%s6 + $0xa0] sm:$0xff]
    %v4681 = vld [vmem:[%s6 + $0xa8] sm:$0xff]
    %v4682 = vld [vmem:[%s6 + $0xb0] sm:$0xff]
    %v4683 = vld [vmem:[%s6 + $0xb8] sm:$0xff]
    %v4684 = vld [vmem:[%s6 + $0xc0] sm:$0xff]
    %v4685 = vld [vmem:[%s6 + $0xc8] sm:$0xff]
    %v4686 = vld [vmem:[%s6 + $0xd0] sm:$0xff]
    %v4687 = vld [vmem:[%s6 + $0xd8] sm:$0xff]
    %v4688 = vld [vmem:[%s6 + $0xe0] sm:$0xff]
    %v4689 = vld [vmem:[%s6 + $0xe8] sm:$0xff]
    %v4690 = vld [vmem:[%s6 + $0xf0] sm:$0xff]
    %v4691 = vld [vmem:[%s6 + $0xf8] sm:$0xff]
    %v4692 = vld [vmem:[%s6 + $0x100] sm:$0xff]
    %v4693 = vld [vmem:[%s6 + $0x108] sm:$0xff]
    %v4694 = vld [vmem:[%s6 + $0x110] sm:$0xff]
    %v4695 = vld [vmem:[%s6 + $0x118] sm:$0xff]
    %v4696 = vld [vmem:[%s6 + $0x120] sm:$0xff]
    %v4697 = vld [vmem:[%s6 + $0x128] sm:$0xff]
    %v4698 = vld [vmem:[%s6 + $0x130] sm:$0xff]
    %v4699 = vld [vmem:[%s6 + $0x138] sm:$0xff]
    %v4700 = vld [vmem:[%s6 + $0x140] sm:$0xff]
    %v4701 = vld [vmem:[%s6 + $0x148] sm:$0xff]
    %v4702 = vld [vmem:[%s6 + $0x150] sm:$0xff]
    %v4703 = vld [vmem:[%s6 + $0x158] sm:$0xff]
    %v4704 = vld [vmem:[%s6 + $0x160] sm:$0xff]
    %v4705 = vld [vmem:[%s6 + $0x168] sm:$0xff]
    %v4706 = vld [vmem:[%s6 + $0x170] sm:$0xff]
    %v4707 = vld [vmem:[%s6 + $0x178] sm:$0xff]
    %v4708 = vld [vmem:[%s6 + $0x180] sm:$0xff]
    %v4709 = vld [vmem:[%s6 + $0x188] sm:$0xff]
    %v4710 = vld [vmem:[%s6 + $0x190] sm:$0xff]
    %v4711 = vld [vmem:[%s6 + $0x198] sm:$0xff]
    %v4712 = vld [vmem:[%s6 + $0x1a0] sm:$0xff]
    %v4713 = vld [vmem:[%s6 + $0x1a8] sm:$0xff]
    %v4714 = vld [vmem:[%s6 + $0x1b0] sm:$0xff]
    %v4715 = vld [vmem:[%s6 + $0x1b8] sm:$0xff]
    %v4716 = vld [vmem:[%s6 + $0x1c0] sm:$0xff]
    %v4717 = vld [vmem:[%s6 + $0x1c8] sm:$0xff]
    %v4718 = vld [vmem:[%s6 + $0x1d0] sm:$0xff]
    %v4719 = vld [vmem:[%s6 + $0x1d8] sm:$0xff]
    %v4720 = vld [vmem:[%s6 + $0x1e0] sm:$0xff]
    %v4721 = vld [vmem:[%s6 + $0x1e8] sm:$0xff]
    %v4722 = vld [vmem:[%s6 + $0x1f0] sm:$0xff]
    %v4723 = vld [vmem:[%s6 + $0x1f8] sm:$0xff]
    %v4724 = vld [vmem:[%s6 + $0x200] sm:$0xff]
    %v4725 = vld [vmem:[%s6 + $0x208] sm:$0xff]
    %v4726 = vld [vmem:[%s6 + $0x210] sm:$0xff]
    %v4727 = vld [vmem:[%s6 + $0x218] sm:$0xff]
    %v4728 = vld [vmem:[%s6 + $0x220] sm:$0xff]
    %v4729 = vld [vmem:[%s6 + $0x228] sm:$0xff]
    %v4730 = vld [vmem:[%s6 + $0x230] sm:$0xff]
    %v4731 = vld [vmem:[%s6 + $0x238] sm:$0xff]
    %v4732 = vld [vmem:[%s6 + $0x240] sm:$0xff]
    %v4733 = vld [vmem:[%s6 + $0x248] sm:$0xff]
    %v4734 = vld [vmem:[%s6 + $0x250] sm:$0xff]
    %v4735 = vld [vmem:[%s6 + $0x258] sm:$0xff]
    %v4736 = vld [vmem:[%s6 + $0x260] sm:$0xff]
    %v4737 = vld [vmem:[%s6 + $0x268] sm:$0xff]
    %v4738 = vld [vmem:[%s6 + $0x270] sm:$0xff]
    %v4739 = vld [vmem:[%s6 + $0x278] sm:$0xff]
    %v4740 = vld [vmem:[%s6 + $0x280] sm:$0xff]
    %v4741 = vld [vmem:[%s6 + $0x288] sm:$0xff]
    %v4742 = vld [vmem:[%s6 + $0x290] sm:$0xff]
    %v4743 = vld [vmem:[%s6 + $0x298] sm:$0xff]
    %v4744 = vld [vmem:[%s6 + $0x2a0] sm:$0xff]
    %v4745 = vld [vmem:[%s6 + $0x2a8] sm:$0xff]
    %v4746 = vld [vmem:[%s6 + $0x2b0] sm:$0xff]
    %v4747 = vld [vmem:[%s6 + $0x2b8] sm:$0xff]
    %v4748 = vld [vmem:[%s6 + $0x2c0] sm:$0xff]
    %v4749 = vld [vmem:[%s6 + $0x2c8] sm:$0xff]
    %v4750 = vld [vmem:[%s6 + $0x2d0] sm:$0xff]
    %v4751 = vld [vmem:[%s6 + $0x2d8] sm:$0xff]
    %v4752 = vld [vmem:[%s6 + $0x2e0] sm:$0xff]
    %v4753 = vld [vmem:[%s6 + $0x2e8] sm:$0xff]
    %v4754 = vld [vmem:[%s6 + $0x2f0] sm:$0xff]
    %v4755 = vld [vmem:[%s6 + $0x2f8] sm:$0xff]
    %v4756 = vld [vmem:[%s6 + $0x300] sm:$0xff]
    %v4757 = vld [vmem:[%s6 + $0x308] sm:$0xff]
    %v4758 = vld [vmem:[%s6 + $0x310] sm:$0xff]
    %v4759 = vld [vmem:[%s6 + $0x318] sm:$0xff]
    %v4760 = vld [vmem:[%s6 + $0x320] sm:$0xff]
    %v4761 = vld [vmem:[%s6 + $0x328] sm:$0xff]
    %v4762 = vld [vmem:[%s6 + $0x330] sm:$0xff]
    %v4763 = vld [vmem:[%s6 + $0x338] sm:$0xff]
    %v4764 = vld [vmem:[%s6 + $0x340] sm:$0xff]
    %v4765 = vld [vmem:[%s6 + $0x348] sm:$0xff]
    %v4766 = vld [vmem:[%s6 + $0x350] sm:$0xff]
    %v4767 = vld [vmem:[%s6 + $0x358] sm:$0xff]
    %v4768 = vld [vmem:[%s6 + $0x360] sm:$0xff]
    %v4769 = vld [vmem:[%s6 + $0x368] sm:$0xff]
    %v4770 = vld [vmem:[%s6 + $0x370] sm:$0xff]
    %v4771 = vld [vmem:[%s6 + $0x378] sm:$0xff]
    %v4772 = vld [vmem:[%s6 + $0x380] sm:$0xff]
    %v4773 = vld [vmem:[%s6 + $0x388] sm:$0xff]
    %v4774 = vld [vmem:[%s6 + $0x390] sm:$0xff]
    %v4775 = vld [vmem:[%s6 + $0x398] sm:$0xff]
    %v4776 = vld [vmem:[%s6 + $0x3a0] sm:$0xff]
    %v4777 = vld [vmem:[%s6 + $0x3a8] sm:$0xff]
    %v4778 = vld [vmem:[%s6 + $0x3b0] sm:$0xff]
    %v4779 = vld [vmem:[%s6 + $0x3b8] sm:$0xff]
    %v4780 = vld [vmem:[%s6 + $0x3c0] sm:$0xff]
    %v4781 = vld [vmem:[%s6 + $0x3c8] sm:$0xff]
    %v4782 = vld [vmem:[%s6 + $0x3d0] sm:$0xff]
    %v4783 = vld [vmem:[%s6 + $0x3d8] sm:$0xff]
    %v4784 = vld [vmem:[%s6 + $0x3e0] sm:$0xff]
    %v4785 = vld [vmem:[%s6 + $0x3e8] sm:$0xff]
    %v4786 = vld [vmem:[%s6 + $0x3f0] sm:$0xff]
    %v4787 = vld [vmem:[%s6 + $0x3f8] sm:$0xff]
    %v4788 = vld [vmem:[%s6 + $0x400] sm:$0xff]
    %v4789 = vld [vmem:[%s6 + $0x408] sm:$0xff]
    %v4790 = vld [vmem:[%s6 + $0x410] sm:$0xff]
    %v4791 = vld [vmem:[%s6 + $0x418] sm:$0xff]
    %v4792 = vld [vmem:[%s6 + $0x420] sm:$0xff]
    %v4793 = vld [vmem:[%s6 + $0x428] sm:$0xff]
    %v4794 = vld [vmem:[%s6 + $0x430] sm:$0xff]
    %v4795 = vld [vmem:[%s6 + $0x438] sm:$0xff]
    %v4796 = vld [vmem:[%s6 + $0x440] sm:$0xff]
    %v4797 = vld [vmem:[%s6 + $0x448] sm:$0xff]
    %v4798 = vld [vmem:[%s6 + $0x450] sm:$0xff]
    %v4799 = vld [vmem:[%s6 + $0x458] sm:$0xff]
    %v4800 = vld [vmem:[%s6 + $0x460] sm:$0xff]
    %v4801 = vld [vmem:[%s6 + $0x468] sm:$0xff]
    %v4802 = vld [vmem:[%s6 + $0x470] sm:$0xff]
    %v4803 = vld [vmem:[%s6 + $0x478] sm:$0xff]
    %v4804 = vld [vmem:[%s6 + $0x480] sm:$0xff]
    %v4805 = vld [vmem:[%s6 + $0x488] sm:$0xff]
    %v4806 = vld [vmem:[%s6 + $0x490] sm:$0xff]
    %v4807 = vld [vmem:[%s6 + $0x498] sm:$0xff]
    %v4808 = vld [vmem:[%s6 + $0x4a0] sm:$0xff]
    %v4809 = vld [vmem:[%s6 + $0x4a8] sm:$0xff]
    %v4810 = vld [vmem:[%s6 + $0x4b0] sm:$0xff]
    %v4811 = vld [vmem:[%s6 + $0x4b8] sm:$0xff]
    %v4812 = vld [vmem:[%s6 + $0x4c0] sm:$0xff]
    %v4813 = vld [vmem:[%s6 + $0x4c8] sm:$0xff]
    %v4814 = vld [vmem:[%s6 + $0x4d0] sm:$0xff]
    %v4815 = vld [vmem:[%s6 + $0x4d8] sm:$0xff]
    %v4816 = vld [vmem:[%s6 + $0x4e0] sm:$0xff]
    %v4817 = vld [vmem:[%s6 + $0x4e8] sm:$0xff]
    %v4818 = vld [vmem:[%s6 + $0x4f0] sm:$0xff]
    %v4819 = vld [vmem:[%s6 + $0x4f8] sm:$0xff]
    %v4820 = vld [vmem:[%s6 + $0x500] sm:$0xff]
    %v4821 = vld [vmem:[%s6 + $0x508] sm:$0xff]
    %v4822 = vld [vmem:[%s6 + $0x510] sm:$0xff]
    %v4823 = vld [vmem:[%s6 + $0x518] sm:$0xff]
    %v4824 = vld [vmem:[%s6 + $0x520] sm:$0xff]
    %v4825 = vld [vmem:[%s6 + $0x528] sm:$0xff]
    %v4826 = vld [vmem:[%s6 + $0x530] sm:$0xff]
    %v4827 = vld [vmem:[%s6 + $0x538] sm:$0xff]
    %v4828 = vld [vmem:[%s6 + $0x540] sm:$0xff]
    %v4829 = vld [vmem:[%s6 + $0x548] sm:$0xff]
    %v4830 = vld [vmem:[%s6 + $0x550] sm:$0xff]
    %v4831 = vld [vmem:[%s6 + $0x558] sm:$0xff]
    %v4832 = vld [vmem:[%s6 + $0x560] sm:$0xff]
    %v4833 = vld [vmem:[%s6 + $0x568] sm:$0xff]
    %v4834 = vld [vmem:[%s6 + $0x570] sm:$0xff]
    %v4835 = vld [vmem:[%s6 + $0x578] sm:$0xff]
    %v4836 = vld [vmem:[%s6 + $0x580] sm:$0xff]
    %v4837 = vld [vmem:[%s6 + $0x588] sm:$0xff]
    %v4838 = vld [vmem:[%s6 + $0x590] sm:$0xff]
    %v4839 = vld [vmem:[%s6 + $0x598] sm:$0xff]
    %v4840 = vld [vmem:[%s6 + $0x5a0] sm:$0xff]
    %v4841 = vld [vmem:[%s6 + $0x5a8] sm:$0xff]
    %v4842 = vld [vmem:[%s6 + $0x5b0] sm:$0xff]
    %v4843 = vld [vmem:[%s6 + $0x5b8] sm:$0xff]
    %v4844 = vld [vmem:[%s6 + $0x5c0] sm:$0xff]
    %v4845 = vld [vmem:[%s6 + $0x5c8] sm:$0xff]
    %v4846 = vld [vmem:[%s6 + $0x5d0] sm:$0xff]
    %v4847 = vld [vmem:[%s6 + $0x5d8] sm:$0xff]
    %v4848 = vld [vmem:[%s6 + $0x5e0] sm:$0xff]
    %v4849 = vld [vmem:[%s6 + $0x5e8] sm:$0xff]
    %v4850 = vld [vmem:[%s6 + $0x5f0] sm:$0xff]
    %v4851 = vld [vmem:[%s6 + $0x5f8] sm:$0xff]
    %v4852 = vld [vmem:[%s6 + $0x600] sm:$0xff]
    %v4853 = vld [vmem:[%s6 + $0x608] sm:$0xff]
    %v4854 = vld [vmem:[%s6 + $0x610] sm:$0xff]
    %v4855 = vld [vmem:[%s6 + $0x618] sm:$0xff]
    %v4856 = vld [vmem:[%s6 + $0x620] sm:$0xff]
    %v4857 = vld [vmem:[%s6 + $0x628] sm:$0xff]
    %v4858 = vld [vmem:[%s6 + $0x630] sm:$0xff]
    %v4859 = vld [vmem:[%s6 + $0x638] sm:$0xff]
    %v4860 = vld [vmem:[%s6 + $0x640] sm:$0xff]
    %v4861 = vld [vmem:[%s6 + $0x648] sm:$0xff]
    %v4862 = vld [vmem:[%s6 + $0x650] sm:$0xff]
    %v4863 = vld [vmem:[%s6 + $0x658] sm:$0xff]
    %v4864 = vld [vmem:[%s6 + $0x660] sm:$0xff]
    %v4865 = vld [vmem:[%s6 + $0x668] sm:$0xff]
    %v4866 = vld [vmem:[%s6 + $0x670] sm:$0xff]
    %v4867 = vld [vmem:[%s6 + $0x678] sm:$0xff]
    %v4868 = vld [vmem:[%s6 + $0x680] sm:$0xff]
    %v4869 = vld [vmem:[%s6 + $0x688] sm:$0xff]
    %v4870 = vld [vmem:[%s6 + $0x690] sm:$0xff]
    %v4871 = vld [vmem:[%s6 + $0x698] sm:$0xff]
    %v4872 = vld [vmem:[%s6 + $0x6a0] sm:$0xff]
    %v4873 = vld [vmem:[%s6 + $0x6a8] sm:$0xff]
    %v4874 = vld [vmem:[%s6 + $0x6b0] sm:$0xff]
    %v4875 = vld [vmem:[%s6 + $0x6b8] sm:$0xff]
    %v4876 = vld [vmem:[%s6 + $0x6c0] sm:$0xff]
    %v4877 = vld [vmem:[%s6 + $0x6c8] sm:$0xff]
    %v4878 = vld [vmem:[%s6 + $0x6d0] sm:$0xff]
    %v4879 = vld [vmem:[%s6 + $0x6d8] sm:$0xff]
    %v4880 = vld [vmem:[%s6 + $0x6e0] sm:$0xff]
    %v4881 = vld [vmem:[%s6 + $0x6e8] sm:$0xff]
    %v4882 = vld [vmem:[%s6 + $0x6f0] sm:$0xff]
    %v4883 = vld [vmem:[%s6 + $0x6f8] sm:$0xff]
    %v4885 = vlaneseq
    %v4886 = vshrl.u32 %v4885, 7
    %v4887 = vsub.s32 0, %v4886
    %v4888 = vrot.slane %v4659, %v4887
    %v4946 = vrot.slane %v4617, 7
    %v4947 = vsel %vm3142, %v4946, %v4603
    %v4948 = vrot.slane %v4631, 6
    %v4949 = vsel %vm3144, %v4948, %v4947
    %v4950 = vrot.slane %v4645, 5
    %v4951 = vsel %vm3146, %v4950, %v4949
    %v4952 = vrot.slane %v4618, 7
    %v4953 = vsel %vm3142, %v4952, %v4604
    %v4954 = vrot.slane %v4632, 6
    %v4955 = vsel %vm3144, %v4954, %v4953
    %v4956 = vrot.slane %v4646, 5
    %v4957 = vsel %vm3146, %v4956, %v4955
    %v4958 = vrot.slane %v4619, 7
    %v4959 = vsel %vm3142, %v4958, %v4605
    %v4960 = vrot.slane %v4633, 6
    %v4961 = vsel %vm3144, %v4960, %v4959
    %v4962 = vrot.slane %v4647, 5
    %v4963 = vsel %vm3146, %v4962, %v4961
    %v4964 = vrot.slane %v4620, 7
    %v4965 = vsel %vm3142, %v4964, %v4606
    %v4966 = vrot.slane %v4634, 6
    %v4967 = vsel %vm3144, %v4966, %v4965
    %v4968 = vrot.slane %v4648, 5
    %v4969 = vsel %vm3146, %v4968, %v4967
    %v4970 = vrot.slane %v4621, 7
    %v4971 = vsel %vm3142, %v4970, %v4607
    %v4972 = vrot.slane %v4635, 6
    %v4973 = vsel %vm3144, %v4972, %v4971
    %v4974 = vrot.slane %v4649, 5
    %v4975 = vsel %vm3146, %v4974, %v4973
    %v4976 = vrot.slane %v4622, 7
    %v4977 = vsel %vm3142, %v4976, %v4608
    %v4978 = vrot.slane %v4636, 6
    %v4979 = vsel %vm3144, %v4978, %v4977
    %v4980 = vrot.slane %v4650, 5
    %v4981 = vsel %vm3146, %v4980, %v4979
    %v4982 = vrot.slane %v4623, 7
    %v4983 = vsel %vm3142, %v4982, %v4609
    %v4984 = vrot.slane %v4637, 6
    %v4985 = vsel %vm3144, %v4984, %v4983
    %v4986 = vrot.slane %v4651, 5
    %v4987 = vsel %vm3146, %v4986, %v4985
    %v4988 = vrot.slane %v4624, 7
    %v4989 = vsel %vm3142, %v4988, %v4610
    %v4990 = vrot.slane %v4638, 6
    %v4991 = vsel %vm3144, %v4990, %v4989
    %v4992 = vrot.slane %v4652, 5
    %v4993 = vsel %vm3146, %v4992, %v4991
    %v4994 = vrot.slane %v4625, 7
    %v4995 = vsel %vm3142, %v4994, %v4611
    %v4996 = vrot.slane %v4639, 6
    %v4997 = vsel %vm3144, %v4996, %v4995
    %v4998 = vrot.slane %v4653, 5
    %v4999 = vsel %vm3146, %v4998, %v4997
    %v5000 = vrot.slane %v4626, 7
    %v5001 = vsel %vm3142, %v5000, %v4612
    %v5002 = vrot.slane %v4640, 6
    %v5003 = vsel %vm3144, %v5002, %v5001
    %v5004 = vrot.slane %v4654, 5
    %v5005 = vsel %vm3146, %v5004, %v5003
    %v5006 = vrot.slane %v4627, 7
    %v5007 = vsel %vm3142, %v5006, %v4613
    %v5008 = vrot.slane %v4641, 6
    %v5009 = vsel %vm3144, %v5008, %v5007
    %v5010 = vrot.slane %v4655, 5
    %v5011 = vsel %vm3146, %v5010, %v5009
    %v5012 = vrot.slane %v4628, 7
    %v5013 = vsel %vm3142, %v5012, %v4614
    %v5014 = vrot.slane %v4642, 6
    %v5015 = vsel %vm3144, %v5014, %v5013
    %v5016 = vrot.slane %v4656, 5
    %v5017 = vsel %vm3146, %v5016, %v5015
    %v5018 = vrot.slane %v4629, 7
    %v5019 = vsel %vm3142, %v5018, %v4615
    %v5020 = vrot.slane %v4643, 6
    %v5021 = vsel %vm3144, %v5020, %v5019
    %v5022 = vrot.slane %v4657, 5
    %v5023 = vsel %vm3146, %v5022, %v5021
    %v5024 = vrot.slane %v4630, 7
    %v5025 = vsel %vm3142, %v5024, %v4616
    %v5026 = vrot.slane %v4644, 6
    %v5027 = vsel %vm3144, %v5026, %v5025
    %v5028 = vrot.slane %v4658, 5
    %v5029 = vsel %vm3146, %v5028, %v5027
    %5044 = vmatprep.subr.mxu0 0.0
    %5045 = vmatpush1.msra.mxu0 %v4660
    %5046 = vmatprep.subr.mxu0 0.0
    %5047 = vmatpush1.msra.mxu0 %v4661
    %5048 = vmatprep.subr.mxu0 0.0
    %5049 = vmatpush1.msra.mxu0 %v4662
    %5050 = vmatprep.subr.mxu0 0.0
    %5051 = vmatpush1.msra.mxu0 %v4663
    %5052 = vmatprep.subr.mxu0 0.0
    %5053 = vmatpush1.msra.mxu0 %v4664
    %5054 = vmatprep.subr.mxu0 0.0
    %5055 = vmatpush1.msra.mxu0 %v4665
    %5056 = vmatprep.subr.mxu0 0.0
    %5057 = vmatpush1.msra.mxu0 %v4666
    %5058 = vmatprep.subr.mxu0 0.0
    %5059 = vmatpush1.msra.mxu0 %v4667
    %5060 = vmatprep.subr.mxu0 0.0
    %5061 = vmatpush1.msra.mxu0 %v4668
    %5062 = vmatprep.subr.mxu0 0.0
    %5063 = vmatpush1.msra.mxu0 %v4669
    %5064 = vmatprep.subr.mxu0 0.0
    %5065 = vmatpush1.msra.mxu0 %v4670
    %5066 = vmatprep.subr.mxu0 0.0
    %5067 = vmatpush1.msra.mxu0 %v4671
    %5068 = vmatprep.subr.mxu0 0.0
    %5069 = vmatpush1.msra.mxu0 %v4672
    %5070 = vmatprep.subr.mxu0 0.0
    %5071 = vmatpush1.msra.mxu0 %v4673
    %5072 = vmatprep.subr.mxu0 0.0
    %5073 = vmatpush1.msra.mxu0 %v4674
    %5074 = vmatprep.subr.mxu0 0.0
    %5075 = vmatpush1.msra.mxu0 %v4675
    %5076 = vmatprep.subr.mxu0 0.0
    %5077 = vmatpush1.msra.mxu0 %v4676
    %5078 = vmatprep.subr.mxu0 0.0
    %5079 = vmatpush1.msra.mxu0 %v4677
    %5080 = vmatprep.subr.mxu0 0.0
    %5081 = vmatpush1.msra.mxu0 %v4678
    %5082 = vmatprep.subr.mxu0 0.0
    %5083 = vmatpush1.msra.mxu0 %v4679
    %5084 = vmatprep.subr.mxu0 0.0
    %5085 = vmatpush1.msra.mxu0 %v4680
    %5086 = vmatprep.subr.mxu0 0.0
    %5087 = vmatpush1.msra.mxu0 %v4681
    %5088 = vmatprep.subr.mxu0 0.0
    %5089 = vmatpush1.msra.mxu0 %v4682
    %5090 = vmatprep.subr.mxu0 0.0
    %5091 = vmatpush1.msra.mxu0 %v4683
    %5092 = vmatprep.subr.mxu0 0.0
    %5093 = vmatpush1.msra.mxu0 %v4684
    %5094 = vmatprep.subr.mxu0 0.0
    %5095 = vmatpush1.msra.mxu0 %v4685
    %5096 = vmatprep.subr.mxu0 0.0
    %5097 = vmatpush1.msra.mxu0 %v4686
    %5098 = vmatprep.subr.mxu0 0.0
    %5099 = vmatpush1.msra.mxu0 %v4687
    %5100 = vmatprep.subr.mxu0 0.0
    %5101 = vmatpush1.msra.mxu0 %v4688
    %5102 = vmatprep.subr.mxu0 0.0
    %5103 = vmatpush1.msra.mxu0 %v4689
    %5104 = vmatprep.subr.mxu0 0.0
    %5105 = vmatpush1.msra.mxu0 %v4690
    %5106 = vmatprep.subr.mxu0 0.0
    %5107 = vmatpush1.msra.mxu0 %v4691
    %5108 = vmatprep.mubr.f32.mxu0 %v4957
    %5109 = vmatmul.mubr.f32.gmra.mrb[0].mxu0 %v4951
    %v5110 = vpop.f32.mrb[0].mxu0
    %v5111 = vadd.f32 %v4888, %v5110
    %v5112 = vpop.f32.mrb[0].mxu0
    %5113 = vdwg.mxu0
    %5114 = vmatprep.subr.mxu0 0.0
    %5115 = vmatpush1.msra.mxu0 %v4692
    %5116 = vmatprep.subr.mxu0 0.0
    %5117 = vmatpush1.msra.mxu0 %v4693
    %5118 = vmatprep.subr.mxu0 0.0
    %5119 = vmatpush1.msra.mxu0 %v4694
    %5120 = vmatprep.subr.mxu0 0.0
    %5121 = vmatpush1.msra.mxu0 %v4695
    %5122 = vmatprep.subr.mxu0 0.0
    %5123 = vmatpush1.msra.mxu0 %v4696
    %5124 = vmatprep.subr.mxu0 0.0
    %5125 = vmatpush1.msra.mxu0 %v4697
    %5126 = vmatprep.subr.mxu0 0.0
    %5127 = vmatpush1.msra.mxu0 %v4698
    %5128 = vmatprep.subr.mxu0 0.0
    %5129 = vmatpush1.msra.mxu0 %v4699
    %5130 = vmatprep.subr.mxu0 0.0
    %5131 = vmatpush1.msra.mxu0 %v4700
    %5132 = vmatprep.subr.mxu0 0.0
    %5133 = vmatpush1.msra.mxu0 %v4701
    %5134 = vmatprep.subr.mxu0 0.0
    %5135 = vmatpush1.msra.mxu0 %v4702
    %5136 = vmatprep.subr.mxu0 0.0
    %5137 = vmatpush1.msra.mxu0 %v4703
    %5138 = vmatprep.subr.mxu0 0.0
    %5139 = vmatpush1.msra.mxu0 %v4704
    %5140 = vmatprep.subr.mxu0 0.0
    %5141 = vmatpush1.msra.mxu0 %v4705
    %5142 = vmatprep.subr.mxu0 0.0
    %5143 = vmatpush1.msra.mxu0 %v4706
    %5144 = vmatprep.subr.mxu0 0.0
    %5145 = vmatpush1.msra.mxu0 %v4707
    %5146 = vmatprep.subr.mxu0 0.0
    %5147 = vmatpush1.msra.mxu0 %v4708
    %5148 = vmatprep.subr.mxu0 0.0
    %5149 = vmatpush1.msra.mxu0 %v4709
    %5150 = vmatprep.subr.mxu0 0.0
    %5151 = vmatpush1.msra.mxu0 %v4710
    %5152 = vmatprep.subr.mxu0 0.0
    %5153 = vmatpush1.msra.mxu0 %v4711
    %5154 = vmatprep.subr.mxu0 0.0
    %5155 = vmatpush1.msra.mxu0 %v4712
    %5156 = vmatprep.subr.mxu0 0.0
    %5157 = vmatpush1.msra.mxu0 %v4713
    %5158 = vmatprep.subr.mxu0 0.0
    %5159 = vmatpush1.msra.mxu0 %v4714
    %5160 = vmatprep.subr.mxu0 0.0
    %5161 = vmatpush1.msra.mxu0 %v4715
    %5162 = vmatprep.subr.mxu0 0.0
    %5163 = vmatpush1.msra.mxu0 %v4716
    %5164 = vmatprep.subr.mxu0 0.0
    %5165 = vmatpush1.msra.mxu0 %v4717
    %5166 = vmatprep.subr.mxu0 0.0
    %5167 = vmatpush1.msra.mxu0 %v4718
    %5168 = vmatprep.subr.mxu0 0.0
    %5169 = vmatpush1.msra.mxu0 %v4719
    %5170 = vmatprep.subr.mxu0 0.0
    %5171 = vmatpush1.msra.mxu0 %v4720
    %5172 = vmatprep.subr.mxu0 0.0
    %5173 = vmatpush1.msra.mxu0 %v4721
    %5174 = vmatprep.subr.mxu0 0.0
    %5175 = vmatpush1.msra.mxu0 %v4722
    %5176 = vmatprep.subr.mxu0 0.0
    %5177 = vmatpush1.msra.mxu0 %v4723
    %5178 = vmatprep.mubr.f32.mxu0 %v4969
    %5179 = vmatmul.mubr.f32.gmra.mrb[0].mxu0 %v4963
    %v5180 = vpop.f32.mrb[0].mxu0
    %v5181 = vadd.f32 %v5111, %v5180
    %v5182 = vpop.f32.mrb[0].mxu0
    %5183 = vdwg.mxu0
    %5184 = vmatprep.subr.mxu0 0.0
    %5185 = vmatpush1.msra.mxu0 %v4724
    %5186 = vmatprep.subr.mxu0 0.0
    %5187 = vmatpush1.msra.mxu0 %v4725
    %5188 = vmatprep.subr.mxu0 0.0
    %5189 = vmatpush1.msra.mxu0 %v4726
    %5190 = vmatprep.subr.mxu0 0.0
    %5191 = vmatpush1.msra.mxu0 %v4727
    %5192 = vmatprep.subr.mxu0 0.0
    %5193 = vmatpush1.msra.mxu0 %v4728
    %5194 = vmatprep.subr.mxu0 0.0
    %5195 = vmatpush1.msra.mxu0 %v4729
    %5196 = vmatprep.subr.mxu0 0.0
    %5197 = vmatpush1.msra.mxu0 %v4730
    %5198 = vmatprep.subr.mxu0 0.0
    %5199 = vmatpush1.msra.mxu0 %v4731
    %5200 = vmatprep.subr.mxu0 0.0
    %5201 = vmatpush1.msra.mxu0 %v4732
    %5202 = vmatprep.subr.mxu0 0.0
    %5203 = vmatpush1.msra.mxu0 %v4733
    %5204 = vmatprep.subr.mxu0 0.0
    %5205 = vmatpush1.msra.mxu0 %v4734
    %5206 = vmatprep.subr.mxu0 0.0
    %5207 = vmatpush1.msra.mxu0 %v4735
    %5208 = vmatprep.subr.mxu0 0.0
    %5209 = vmatpush1.msra.mxu0 %v4736
    %5210 = vmatprep.subr.mxu0 0.0
    %5211 = vmatpush1.msra.mxu0 %v4737
    %5212 = vmatprep.subr.mxu0 0.0
    %5213 = vmatpush1.msra.mxu0 %v4738
    %5214 = vmatprep.subr.mxu0 0.0
    %5215 = vmatpush1.msra.mxu0 %v4739
    %5216 = vmatprep.subr.mxu0 0.0
    %5217 = vmatpush1.msra.mxu0 %v4740
    %5218 = vmatprep.subr.mxu0 0.0
    %5219 = vmatpush1.msra.mxu0 %v4741
    %5220 = vmatprep.subr.mxu0 0.0
    %5221 = vmatpush1.msra.mxu0 %v4742
    %5222 = vmatprep.subr.mxu0 0.0
    %5223 = vmatpush1.msra.mxu0 %v4743
    %5224 = vmatprep.subr.mxu0 0.0
    %5225 = vmatpush1.msra.mxu0 %v4744
    %5226 = vmatprep.subr.mxu0 0.0
    %5227 = vmatpush1.msra.mxu0 %v4745
    %5228 = vmatprep.subr.mxu0 0.0
    %5229 = vmatpush1.msra.mxu0 %v4746
    %5230 = vmatprep.subr.mxu0 0.0
    %5231 = vmatpush1.msra.mxu0 %v4747
    %5232 = vmatprep.subr.mxu0 0.0
    %5233 = vmatpush1.msra.mxu0 %v4748
    %5234 = vmatprep.subr.mxu0 0.0
    %5235 = vmatpush1.msra.mxu0 %v4749
    %5236 = vmatprep.subr.mxu0 0.0
    %5237 = vmatpush1.msra.mxu0 %v4750
    %5238 = vmatprep.subr.mxu0 0.0
    %5239 = vmatpush1.msra.mxu0 %v4751
    %5240 = vmatprep.subr.mxu0 0.0
    %5241 = vmatpush1.msra.mxu0 %v4752
    %5242 = vmatprep.subr.mxu0 0.0
    %5243 = vmatpush1.msra.mxu0 %v4753
    %5244 = vmatprep.subr.mxu0 0.0
    %5245 = vmatpush1.msra.mxu0 %v4754
    %5246 = vmatprep.subr.mxu0 0.0
    %5247 = vmatpush1.msra.mxu0 %v4755
    %5248 = vmatprep.mubr.f32.mxu0 %v4981
    %5249 = vmatmul.mubr.f32.gmra.mrb[0].mxu0 %v4975
    %v5250 = vpop.f32.mrb[0].mxu0
    %v5251 = vadd.f32 %v5181, %v5250
    %v5252 = vpop.f32.mrb[0].mxu0
    %5253 = vdwg.mxu0
    %5254 = vmatprep.subr.mxu0 0.0
    %5255 = vmatpush1.msra.mxu0 %v4756
    %5256 = vmatprep.subr.mxu0 0.0
    %5257 = vmatpush1.msra.mxu0 %v4757
    %5258 = vmatprep.subr.mxu0 0.0
    %5259 = vmatpush1.msra.mxu0 %v4758
    %5260 = vmatprep.subr.mxu0 0.0
    %5261 = vmatpush1.msra.mxu0 %v4759
    %5262 = vmatprep.subr.mxu0 0.0
    %5263 = vmatpush1.msra.mxu0 %v4760
    %5264 = vmatprep.subr.mxu0 0.0
    %5265 = vmatpush1.msra.mxu0 %v4761
    %5266 = vmatprep.subr.mxu0 0.0
    %5267 = vmatpush1.msra.mxu0 %v4762
    %5268 = vmatprep.subr.mxu0 0.0
    %5269 = vmatpush1.msra.mxu0 %v4763
    %5270 = vmatprep.subr.mxu0 0.0
    %5271 = vmatpush1.msra.mxu0 %v4764
    %5272 = vmatprep.subr.mxu0 0.0
    %5273 = vmatpush1.msra.mxu0 %v4765
    %5274 = vmatprep.subr.mxu0 0.0
    %5275 = vmatpush1.msra.mxu0 %v4766
    %5276 = vmatprep.subr.mxu0 0.0
    %5277 = vmatpush1.msra.mxu0 %v4767
    %5278 = vmatprep.subr.mxu0 0.0
    %5279 = vmatpush1.msra.mxu0 %v4768
    %5280 = vmatprep.subr.mxu0 0.0
    %5281 = vmatpush1.msra.mxu0 %v4769
    %5282 = vmatprep.subr.mxu0 0.0
    %5283 = vmatpush1.msra.mxu0 %v4770
    %5284 = vmatprep.subr.mxu0 0.0
    %5285 = vmatpush1.msra.mxu0 %v4771
    %5286 = vmatprep.subr.mxu0 0.0
    %5287 = vmatpush1.msra.mxu0 %v4772
    %5288 = vmatprep.subr.mxu0 0.0
    %5289 = vmatpush1.msra.mxu0 %v4773
    %5290 = vmatprep.subr.mxu0 0.0
    %5291 = vmatpush1.msra.mxu0 %v4774
    %5292 = vmatprep.subr.mxu0 0.0
    %5293 = vmatpush1.msra.mxu0 %v4775
    %5294 = vmatprep.subr.mxu0 0.0
    %5295 = vmatpush1.msra.mxu0 %v4776
    %5296 = vmatprep.subr.mxu0 0.0
    %5297 = vmatpush1.msra.mxu0 %v4777
    %5298 = vmatprep.subr.mxu0 0.0
    %5299 = vmatpush1.msra.mxu0 %v4778
    %5300 = vmatprep.subr.mxu0 0.0
    %5301 = vmatpush1.msra.mxu0 %v4779
    %5302 = vmatprep.subr.mxu0 0.0
    %5303 = vmatpush1.msra.mxu0 %v4780
    %5304 = vmatprep.subr.mxu0 0.0
    %5305 = vmatpush1.msra.mxu0 %v4781
    %5306 = vmatprep.subr.mxu0 0.0
    %5307 = vmatpush1.msra.mxu0 %v4782
    %5308 = vmatprep.subr.mxu0 0.0
    %5309 = vmatpush1.msra.mxu0 %v4783
    %5310 = vmatprep.subr.mxu0 0.0
    %5311 = vmatpush1.msra.mxu0 %v4784
    %5312 = vmatprep.subr.mxu0 0.0
    %5313 = vmatpush1.msra.mxu0 %v4785
    %5314 = vmatprep.subr.mxu0 0.0
    %5315 = vmatpush1.msra.mxu0 %v4786
    %5316 = vmatprep.subr.mxu0 0.0
    %5317 = vmatpush1.msra.mxu0 %v4787
    %5318 = vmatprep.mubr.f32.mxu0 %v4993
    %5319 = vmatmul.mubr.f32.gmra.mrb[0].mxu0 %v4987
    %v5320 = vpop.f32.mrb[0].mxu0
    %v5321 = vadd.f32 %v5251, %v5320
    %v5322 = vpop.f32.mrb[0].mxu0
    %5323 = vdwg.mxu0
    %5324 = vmatprep.subr.mxu0 0.0
    %5325 = vmatpush1.msra.mxu0 %v4788
    %5326 = vmatprep.subr.mxu0 0.0
    %5327 = vmatpush1.msra.mxu0 %v4789
    %5328 = vmatprep.subr.mxu0 0.0
    %5329 = vmatpush1.msra.mxu0 %v4790
    %5330 = vmatprep.subr.mxu0 0.0
    %5331 = vmatpush1.msra.mxu0 %v4791
    %5332 = vmatprep.subr.mxu0 0.0
    %5333 = vmatpush1.msra.mxu0 %v4792
    %5334 = vmatprep.subr.mxu0 0.0
    %5335 = vmatpush1.msra.mxu0 %v4793
    %5336 = vmatprep.subr.mxu0 0.0
    %5337 = vmatpush1.msra.mxu0 %v4794
    %5338 = vmatprep.subr.mxu0 0.0
    %5339 = vmatpush1.msra.mxu0 %v4795
    %5340 = vmatprep.subr.mxu0 0.0
    %5341 = vmatpush1.msra.mxu0 %v4796
    %5342 = vmatprep.subr.mxu0 0.0
    %5343 = vmatpush1.msra.mxu0 %v4797
    %5344 = vmatprep.subr.mxu0 0.0
    %5345 = vmatpush1.msra.mxu0 %v4798
    %5346 = vmatprep.subr.mxu0 0.0
    %5347 = vmatpush1.msra.mxu0 %v4799
    %5348 = vmatprep.subr.mxu0 0.0
    %5349 = vmatpush1.msra.mxu0 %v4800
    %5350 = vmatprep.subr.mxu0 0.0
    %5351 = vmatpush1.msra.mxu0 %v4801
    %5352 = vmatprep.subr.mxu0 0.0
    %5353 = vmatpush1.msra.mxu0 %v4802
    %5354 = vmatprep.subr.mxu0 0.0
    %5355 = vmatpush1.msra.mxu0 %v4803
    %5356 = vmatprep.subr.mxu0 0.0
    %5357 = vmatpush1.msra.mxu0 %v4804
    %5358 = vmatprep.subr.mxu0 0.0
    %5359 = vmatpush1.msra.mxu0 %v4805
    %5360 = vmatprep.subr.mxu0 0.0
    %5361 = vmatpush1.msra.mxu0 %v4806
    %5362 = vmatprep.subr.mxu0 0.0
    %5363 = vmatpush1.msra.mxu0 %v4807
    %5364 = vmatprep.subr.mxu0 0.0
    %5365 = vmatpush1.msra.mxu0 %v4808
    %5366 = vmatprep.subr.mxu0 0.0
    %5367 = vmatpush1.msra.mxu0 %v4809
    %5368 = vmatprep.subr.mxu0 0.0
    %5369 = vmatpush1.msra.mxu0 %v4810
    %5370 = vmatprep.subr.mxu0 0.0
    %5371 = vmatpush1.msra.mxu0 %v4811
    %5372 = vmatprep.subr.mxu0 0.0
    %5373 = vmatpush1.msra.mxu0 %v4812
    %5374 = vmatprep.subr.mxu0 0.0
    %5375 = vmatpush1.msra.mxu0 %v4813
    %5376 = vmatprep.subr.mxu0 0.0
    %5377 = vmatpush1.msra.mxu0 %v4814
    %5378 = vmatprep.subr.mxu0 0.0
    %5379 = vmatpush1.msra.mxu0 %v4815
    %5380 = vmatprep.subr.mxu0 0.0
    %5381 = vmatpush1.msra.mxu0 %v4816
    %5382 = vmatprep.subr.mxu0 0.0
    %5383 = vmatpush1.msra.mxu0 %v4817
    %5384 = vmatprep.subr.mxu0 0.0
    %5385 = vmatpush1.msra.mxu0 %v4818
    %5386 = vmatprep.subr.mxu0 0.0
    %5387 = vmatpush1.msra.mxu0 %v4819
    %5388 = vmatprep.mubr.f32.mxu0 %v5005
    %5389 = vmatmul.mubr.f32.gmra.mrb[0].mxu0 %v4999
    %v5390 = vpop.f32.mrb[0].mxu0
    %v5391 = vadd.f32 %v5321, %v5390
    %v5392 = vpop.f32.mrb[0].mxu0
    %5393 = vdwg.mxu0
    %5394 = vmatprep.subr.mxu0 0.0
    %5395 = vmatpush1.msra.mxu0 %v4820
    %5396 = vmatprep.subr.mxu0 0.0
    %5397 = vmatpush1.msra.mxu0 %v4821
    %5398 = vmatprep.subr.mxu0 0.0
    %5399 = vmatpush1.msra.mxu0 %v4822
    %5400 = vmatprep.subr.mxu0 0.0
    %5401 = vmatpush1.msra.mxu0 %v4823
    %5402 = vmatprep.subr.mxu0 0.0
    %5403 = vmatpush1.msra.mxu0 %v4824
    %5404 = vmatprep.subr.mxu0 0.0
    %5405 = vmatpush1.msra.mxu0 %v4825
    %5406 = vmatprep.subr.mxu0 0.0
    %5407 = vmatpush1.msra.mxu0 %v4826
    %5408 = vmatprep.subr.mxu0 0.0
    %5409 = vmatpush1.msra.mxu0 %v4827
    %5410 = vmatprep.subr.mxu0 0.0
    %5411 = vmatpush1.msra.mxu0 %v4828
    %5412 = vmatprep.subr.mxu0 0.0
    %5413 = vmatpush1.msra.mxu0 %v4829
    %5414 = vmatprep.subr.mxu0 0.0
    %5415 = vmatpush1.msra.mxu0 %v4830
    %5416 = vmatprep.subr.mxu0 0.0
    %5417 = vmatpush1.msra.mxu0 %v4831
    %5418 = vmatprep.subr.mxu0 0.0
    %5419 = vmatpush1.msra.mxu0 %v4832
    %5420 = vmatprep.subr.mxu0 0.0
    %5421 = vmatpush1.msra.mxu0 %v4833
    %5422 = vmatprep.subr.mxu0 0.0
    %5423 = vmatpush1.msra.mxu0 %v4834
    %5424 = vmatprep.subr.mxu0 0.0
    %5425 = vmatpush1.msra.mxu0 %v4835
    %5426 = vmatprep.subr.mxu0 0.0
    %5427 = vmatpush1.msra.mxu0 %v4836
    %5428 = vmatprep.subr.mxu0 0.0
    %5429 = vmatpush1.msra.mxu0 %v4837
    %5430 = vmatprep.subr.mxu0 0.0
    %5431 = vmatpush1.msra.mxu0 %v4838
    %5432 = vmatprep.subr.mxu0 0.0
    %5433 = vmatpush1.msra.mxu0 %v4839
    %5434 = vmatprep.subr.mxu0 0.0
    %5435 = vmatpush1.msra.mxu0 %v4840
    %5436 = vmatprep.subr.mxu0 0.0
    %5437 = vmatpush1.msra.mxu0 %v4841
    %5438 = vmatprep.subr.mxu0 0.0
    %5439 = vmatpush1.msra.mxu0 %v4842
    %5440 = vmatprep.subr.mxu0 0.0
    %5441 = vmatpush1.msra.mxu0 %v4843
    %5442 = vmatprep.subr.mxu0 0.0
    %5443 = vmatpush1.msra.mxu0 %v4844
    %5444 = vmatprep.subr.mxu0 0.0
    %5445 = vmatpush1.msra.mxu0 %v4845
    %5446 = vmatprep.subr.mxu0 0.0
    %5447 = vmatpush1.msra.mxu0 %v4846
    %5448 = vmatprep.subr.mxu0 0.0
    %5449 = vmatpush1.msra.mxu0 %v4847
    %5450 = vmatprep.subr.mxu0 0.0
    %5451 = vmatpush1.msra.mxu0 %v4848
    %5452 = vmatprep.subr.mxu0 0.0
    %5453 = vmatpush1.msra.mxu0 %v4849
    %5454 = vmatprep.subr.mxu0 0.0
    %5455 = vmatpush1.msra.mxu0 %v4850
    %5456 = vmatprep.subr.mxu0 0.0
    %5457 = vmatpush1.msra.mxu0 %v4851
    %5458 = vmatprep.mubr.f32.mxu0 %v5017
    %5459 = vmatmul.mubr.f32.gmra.mrb[0].mxu0 %v5011
    %v5460 = vpop.f32.mrb[0].mxu0
    %v5461 = vadd.f32 %v5391, %v5460
    %v5462 = vpop.f32.mrb[0].mxu0
    %5463 = vdwg.mxu0
    %5464 = vmatprep.subr.mxu0 0.0
    %5465 = vmatpush1.msra.mxu0 %v4852
    %5466 = vmatprep.subr.mxu0 0.0
    %5467 = vmatpush1.msra.mxu0 %v4853
    %5468 = vmatprep.subr.mxu0 0.0
    %5469 = vmatpush1.msra.mxu0 %v4854
    %5470 = vmatprep.subr.mxu0 0.0
    %5471 = vmatpush1.msra.mxu0 %v4855
    %5472 = vmatprep.subr.mxu0 0.0
    %5473 = vmatpush1.msra.mxu0 %v4856
    %5474 = vmatprep.subr.mxu0 0.0
    %5475 = vmatpush1.msra.mxu0 %v4857
    %5476 = vmatprep.subr.mxu0 0.0
    %5477 = vmatpush1.msra.mxu0 %v4858
    %5478 = vmatprep.subr.mxu0 0.0
    %5479 = vmatpush1.msra.mxu0 %v4859
    %5480 = vmatprep.subr.mxu0 0.0
    %5481 = vmatpush1.msra.mxu0 %v4860
    %5482 = vmatprep.subr.mxu0 0.0
    %5483 = vmatpush1.msra.mxu0 %v4861
    %5484 = vmatprep.subr.mxu0 0.0
    %5485 = vmatpush1.msra.mxu0 %v4862
    %5486 = vmatprep.subr.mxu0 0.0
    %5487 = vmatpush1.msra.mxu0 %v4863
    %5488 = vmatprep.subr.mxu0 0.0
    %5489 = vmatpush1.msra.mxu0 %v4864
    %5490 = vmatprep.subr.mxu0 0.0
    %5491 = vmatpush1.msra.mxu0 %v4865
    %5492 = vmatprep.subr.mxu0 0.0
    %5493 = vmatpush1.msra.mxu0 %v4866
    %5494 = vmatprep.subr.mxu0 0.0
    %5495 = vmatpush1.msra.mxu0 %v4867
    %5496 = vmatprep.subr.mxu0 0.0
    %5497 = vmatpush1.msra.mxu0 %v4868
    %5498 = vmatprep.subr.mxu0 0.0
    %5499 = vmatpush1.msra.mxu0 %v4869
    %5500 = vmatprep.subr.mxu0 0.0
    %5501 = vmatpush1.msra.mxu0 %v4870
    %5502 = vmatprep.subr.mxu0 0.0
    %5503 = vmatpush1.msra.mxu0 %v4871
    %5504 = vmatprep.subr.mxu0 0.0
    %5505 = vmatpush1.msra.mxu0 %v4872
    %5506 = vmatprep.subr.mxu0 0.0
    %5507 = vmatpush1.msra.mxu0 %v4873
    %5508 = vmatprep.subr.mxu0 0.0
    %5509 = vmatpush1.msra.mxu0 %v4874
    %5510 = vmatprep.subr.mxu0 0.0
    %5511 = vmatpush1.msra.mxu0 %v4875
    %5512 = vmatprep.subr.mxu0 0.0
    %5513 = vmatpush1.msra.mxu0 %v4876
    %5514 = vmatprep.subr.mxu0 0.0
    %5515 = vmatpush1.msra.mxu0 %v4877
    %5516 = vmatprep.subr.mxu0 0.0
    %5517 = vmatpush1.msra.mxu0 %v4878
    %5518 = vmatprep.subr.mxu0 0.0
    %5519 = vmatpush1.msra.mxu0 %v4879
    %5520 = vmatprep.subr.mxu0 0.0
    %5521 = vmatpush1.msra.mxu0 %v4880
    %5522 = vmatprep.subr.mxu0 0.0
    %5523 = vmatpush1.msra.mxu0 %v4881
    %5524 = vmatprep.subr.mxu0 0.0
    %5525 = vmatpush1.msra.mxu0 %v4882
    %5526 = vmatprep.subr.mxu0 0.0
    %5527 = vmatpush1.msra.mxu0 %v4883
    %5528 = vmatprep.mubr.f32.mxu0 %v5029
    %5529 = vmatmul.mubr.f32.gmra.mrb[0].mxu0 %v5023
    %v5530 = vpop.f32.mrb[0].mxu0
    %v5531 = vadd.f32 %v5461, %v5530
    %v5532 = vpop.f32.mrb[0].mxu0
    %5533 = vdwg.mxu0
    %v5534 = vld [vmem:[#allocation22] sm:$0x1]
    %v5535 = vld [vmem:[#allocation23] sm:$0x1]
    %v5536 = vld [vmem:[#allocation25] sm:$0x1]
    %v5537 = vld [vmem:[#allocation26] sm:$0x1]
    %v5539 = vlaneseq
    %v5540 = vshrl.u32 %v5539, 7
    %v5541 = vsub.s32 0, %v5540
    %v5542 = vrot.slane %v5536, %v5541
    %v5544 = vsub.f32 %v5531, %v5542
    %v5545 = vadd.f32 %v5537, 1e-05
    %v5546 = vrsqrt.pop %v5545
    %v5548 = vlaneseq
    %v5549 = vshrl.u32 %v5548, 7
    %v5550 = vsub.s32 0, %v5549
    %v5551 = vrot.slane %v5546, %v5550
    %v5553 = vmul.f32 %v5544, %v5551
    %v5555 = vlaneseq
    %v5556 = vshrl.u32 %v5555, 7
    %v5557 = vsub.s32 0, %v5556
    %v5558 = vrot.slane %v5534, %v5557
    %v5560 = vmul.f32 %v5553, %v5558
    %v5562 = vlaneseq
    %v5563 = vshrl.u32 %v5562, 7
    %v5564 = vsub.s32 0, %v5563
    %v5565 = vrot.slane %v5535, %v5564
    %v5567 = vadd.f32 %v5560, %v5565
    %v5568 = vmax.f32 %v5567, 0.0
    %v5569 = vld [vmem:[#allocation28] sm:$0xff]
    %v5570 = vld [vmem:[#allocation28 + $0x8] sm:$0xff]
    %v5571 = vld [vmem:[#allocation28 + $0x10] sm:$0xff]
    %v5572 = vld [vmem:[#allocation28 + $0x18] sm:$0xff]
    %v5573 = vld [vmem:[#allocation28 + $0x20] sm:$0xff]
    %v5574 = vld [vmem:[#allocation28 + $0x28] sm:$0xff]
    %v5575 = vld [vmem:[#allocation28 + $0x30] sm:$0xff]
    %v5576 = vld [vmem:[#allocation28 + $0x38] sm:$0xff]
    %v5577 = vld [vmem:[#allocation29] sm:$0x1]
    %v5579 = vlaneseq
    %v5580 = vshrl.u32 %v5579, 7
    %v5581 = vsub.s32 0, %v5580
    %v5582 = vrot.slane %v5577, %v5581
    %v5585 = vsel %vm596, %v5568, 0
    %5587 = vmatprep.subr.mxu0 0.0
    %5588 = vmatpush1.msra.mxu0 %v5569
    %5589 = vmatprep.subr.mxu0 0.0
    %5590 = vmatpush1.msra.mxu0 %v5570
    %5591 = vmatprep.subr.mxu0 0.0
    %5592 = vmatpush1.msra.mxu0 %v5571
    %5593 = vmatprep.subr.mxu0 0.0
    %5594 = vmatpush1.msra.mxu0 %v5572
    %5595 = vmatprep.subr.mxu0 0.0
    %5596 = vmatpush1.msra.mxu0 %v5573
    %5597 = vmatprep.subr.mxu0 0.0
    %5598 = vmatpush1.msra.mxu0 %v5574
    %5599 = vmatprep.subr.mxu0 0.0
    %5600 = vmatpush1.msra.mxu0 %v5575
    %5601 = vmatprep.subr.mxu0 0.0
    %5602 = vmatpush1.msra.mxu0 %v5576
    %5603 = vmatprep.subr.mxu0 0.0
    %5604 = vmatpush1.msra.mxu0 0.0
    %5605 = vmatprep.subr.mxu0 0.0
    %5606 = vmatpush1.msra.mxu0 0.0
    %5607 = vmatprep.subr.mxu0 0.0
    %5608 = vmatpush1.msra.mxu0 0.0
    %5609 = vmatprep.subr.mxu0 0.0
    %5610 = vmatpush1.msra.mxu0 0.0
    %5611 = vmatprep.subr.mxu0 0.0
    %5612 = vmatpush1.msra.mxu0 0.0
    %5613 = vmatprep.subr.mxu0 0.0
    %5614 = vmatpush1.msra.mxu0 0.0
    %5615 = vmatprep.subr.mxu0 0.0
    %5616 = vmatpush1.msra.mxu0 0.0
    %5617 = vmatprep.subr.mxu0 0.0
    %5618 = vmatpush1.msra.mxu0 0.0
    %5619 = vmatprep.subr.mxu0 0.0
    %5620 = vmatpush1.msra.mxu0 0.0
    %5621 = vmatprep.subr.mxu0 0.0
    %5622 = vmatpush1.msra.mxu0 0.0
    %5623 = vmatprep.subr.mxu0 0.0
    %5624 = vmatpush1.msra.mxu0 0.0
    %5625 = vmatprep.subr.mxu0 0.0
    %5626 = vmatpush1.msra.mxu0 0.0
    %5627 = vmatprep.subr.mxu0 0.0
    %5628 = vmatpush1.msra.mxu0 0.0
    %5629 = vmatprep.subr.mxu0 0.0
    %5630 = vmatpush1.msra.mxu0 0.0
    %5631 = vmatprep.subr.mxu0 0.0
    %5632 = vmatpush1.msra.mxu0 0.0
    %5633 = vmatprep.subr.mxu0 0.0
    %5634 = vmatpush1.msra.mxu0 0.0
    %5635 = vmatprep.subr.mxu0 0.0
    %5636 = vmatpush1.msra.mxu0 0.0
    %5637 = vmatprep.subr.mxu0 0.0
    %5638 = vmatpush1.msra.mxu0 0.0
    %5639 = vmatprep.subr.mxu0 0.0
    %5640 = vmatpush1.msra.mxu0 0.0
    %5641 = vmatprep.subr.mxu0 0.0
    %5642 = vmatpush1.msra.mxu0 0.0
    %5643 = vmatprep.subr.mxu0 0.0
    %5644 = vmatpush1.msra.mxu0 0.0
    %5645 = vmatprep.subr.mxu0 0.0
    %5646 = vmatpush1.msra.mxu0 0.0
    %5647 = vmatprep.subr.mxu0 0.0
    %5648 = vmatpush1.msra.mxu0 0.0
    %5649 = vmatprep.subr.mxu0 0.0
    %5650 = vmatpush1.msra.mxu0 0.0
    %5651 = vmatprep.mubr.f32.mxu0 0.0
    %5652 = vmatmul.mubr.f32.gmra.mrb[0].mxu0 %v5585
    %v5653 = vpop.f32.mrb[0].mxu0
    %v5654 = vadd.f32 %v5582, %v5653
    %v5655 = vpop.f32.mrb[0].mxu0
    %5656 = vdwg.mxu0
    %v5657 = vxor.u32 %v5654, 2147483648
    %v5658 = vmul.f32 %v5657, 1.442695
    %v5659 = vpow.pop %v5658
    %v5660 = vadd.f32 %v5659, 1.0
    %v5661 = vrcp.pop %v5660
    %v5662 = vmul.f32 1.0, %v5661
    %5663 = vst [vmem:[#allocation31] sm:$0xf] %v5662
    // Predicated region
    $region154: #{tpu_custom_call.1} parent=1 // pred_check
      _
    $region155: #{tpu_custom_call.1} parent=1 // pred_check_branch
      %5665 = sbr.rel (0) target = $region157
    $region156: #{tpu_custom_call.1} parent=1 // pred_region
      %s5667 = ssub.s32 64, 64
      %5668 = vsyncadd [#allocation4], %s5667
      %s5670 = sshll.u32 [#allocation31], 4
      %s5671 = int_to_ptr.vmem [resolvable:$true] %s5670
      %5673 = dma.vmem_to_hbm [thread:$0]  %s5671, 64, %s20, [#allocation4]
    $region157: #{tpu_custom_call.1} parent=1 // pred_fallthru
      _
    // Predicated region
    $region158: #{tpu_custom_call.1} parent=1 // pred_check
      _
    $region159: #{tpu_custom_call.1} parent=1 // pred_check_branch
      %5675 = sbr.rel (0) target = $region161
    $region160: #{tpu_custom_call.1} parent=1 // pred_region
      %5676 = dma.done [#allocation4], 64
    $region161: #{tpu_custom_call.1} parent=1 // pred_fallthru
      _
    %5677 = vsyncpa [#allocation3], 1
    %5678 = vsyncpa [#allocation6], 1
    %5679 = vsyncpa [#allocation9], 1
    %5680 = vsyncpa [#allocation12], 1
    %5681 = vsyncpa [#allocation15], 1
    %5682 = vsyncpa [#allocation18], 1
    %5683 = vsyncpa [#allocation21], 1
    %5684 = vsyncpa [#allocation24], 1
    %5685 = vsyncpa [#allocation27], 1
    %5686 = vsyncpa [#allocation30], 1
    %5687 = vsyncpa [#allocation4], 1

</llo_original>
